<compile_context>
chip_gen: v7x
topology: tpu7x:2x2x1
jax: 0.10.0
libtpu: 0.0.40
codegen_flags: <defaults>
</compile_context>

<pallas_src>
import functools

import jax
import jax.numpy as jnp
from jax import lax
from jax.experimental import pallas as pl
from jax.experimental.pallas import tpu as pltpu

EPS = 1e-5
_PADDINGS = (0, 1, 0, 1)  # as in the torch nn.Sequential


def _conv_stats_kernel(xa_ref, xb_ref, w_ref, y_ref, ssum_ref, ssq_ref):
    """Conv2d(k=2, s=1) for one output row + streaming BN statistics.

    xa_ref, xb_ref: (1, 1, Cin, Wp)   padded input rows h and h+1 (layout N,Hp,C,W)
    w_ref:          (2, 2, Cout, Cin) w_ref[dy, dx][co, ci] = torch_w[co, ci, dy, dx]
    y_ref:          (1, 1, Cout, Wo)  raw conv output row (pre-BN)
    ssum_ref/ssq_ref: (1, Cout, 1)    per-batch-element channel sum / sum-of-squares
    """
    h = pl.program_id(1)

    @pl.when(h == 0)
    def _init():
        ssum_ref[...] = jnp.zeros_like(ssum_ref)
        ssq_ref[...] = jnp.zeros_like(ssq_ref)

    wo = y_ref.shape[3]
    xa = xa_ref[0, 0]          # (Cin, Wp)  row h   (dy = 0)
    xb = xb_ref[0, 0]          # (Cin, Wp)  row h+1 (dy = 1)

    # (Cout, Cin) @ (Cin, Wo) per (dy, dx); dx handled by a static lane slice.
    y = (jnp.dot(w_ref[0, 0], xa[:, 0:wo], preferred_element_type=jnp.float32)
         + jnp.dot(w_ref[0, 1], xa[:, 1:wo + 1], preferred_element_type=jnp.float32)
         + jnp.dot(w_ref[1, 0], xb[:, 0:wo], preferred_element_type=jnp.float32)
         + jnp.dot(w_ref[1, 1], xb[:, 1:wo + 1], preferred_element_type=jnp.float32))

    y_ref[0, 0] = y
    ssum_ref[0] += jnp.sum(y, axis=1, keepdims=True)      # (Cout, 1)
    ssq_ref[0] += jnp.sum(y * y, axis=1, keepdims=True)   # (Cout, 1)


def _bn_relu_kernel(y_ref, scale_ref, shift_ref, o_ref):
    # y_ref/o_ref: (1, 1, Cout, Wo); scale/shift: (Cout, 1) precomputed per channel.
    y = y_ref[0, 0]
    o_ref[0, 0] = jnp.maximum(y * scale_ref[...] + shift_ref[...], 0.0)


def _conv_bn_relu_layer(x_nhcw, w, gamma, beta, padding):
    """One Conv2d(k=2,s=1,p=padding)+BN(train)+ReLU stage on (N, H, C, W) activations."""
    N = x_nhcw.shape[0]
    Cin = x_nhcw.shape[2]
    Cout = w.shape[0]

    if padding:
        x_nhcw = jnp.pad(
            x_nhcw, ((0, 0), (padding, padding), (0, 0), (padding, padding)))
    Hp, Wp = x_nhcw.shape[1], x_nhcw.shape[3]
    Ho, Wo = Hp - 1, Wp - 1  # kernel_size=2, stride=1

    # torch (Cout, Cin, kh, kw) -> (kh, kw, Cout, Cin)
    w4 = jnp.transpose(w, (2, 3, 0, 1))

    # Pass 1: conv rows + per-(batch, channel) sum / sumsq.  Stats blocks are
    # resident across the h axis (arbitrary); the batch axis stays parallel.
    y, ssum, ssq = pl.pallas_call(
        _conv_stats_kernel,
        out_shape=(
            jax.ShapeDtypeStruct((N, Ho, Cout, Wo), jnp.float32),
            jax.ShapeDtypeStruct((N, Cout, 1), jnp.float32),
            jax.ShapeDtypeStruct((N, Cout, 1), jnp.float32),
        ),
        grid=(N, Ho),
        in_specs=[
            pl.BlockSpec((1, 1, Cin, Wp), lambda n, h: (n, h, 0, 0)),
            pl.BlockSpec((1, 1, Cin, Wp), lambda n, h: (n, h + 1, 0, 0)),
            pl.BlockSpec((2, 2, Cout, Cin), lambda n, h: (0, 0, 0, 0)),
        ],
        out_specs=(
            pl.BlockSpec((1, 1, Cout, Wo), lambda n, h: (n, h, 0, 0)),
            pl.BlockSpec((1, Cout, 1), lambda n, h: (n, 0, 0)),
            pl.BlockSpec((1, Cout, 1), lambda n, h: (n, 0, 0)),
        ),
        compiler_params=pltpu.CompilerParams(
            dimension_semantics=("parallel", "arbitrary")),
    )(x_nhcw, x_nhcw, w4)

    # Tiny per-channel math (Cout elements) in plain JAX: biased variance,
    # precomputed scale/shift so pass 2 is one mul + one add per element.
    m = float(N * Ho * Wo)
    mean = jnp.sum(ssum[:, :, 0], axis=0) / m
    var = jnp.sum(ssq[:, :, 0], axis=0) / m - mean * mean
    var = jnp.maximum(var, 0.0)
    inv_std = lax.rsqrt(var + EPS)
    scale = (gamma * inv_std).reshape(Cout, 1)
    shift = (beta - mean * gamma * inv_std).reshape(Cout, 1)

    # Pass 2: normalize + ReLU, embarrassingly parallel over (N, Ho).
    out = pl.pallas_call(
        _bn_relu_kernel,
        out_shape=jax.ShapeDtypeStruct((N, Ho, Cout, Wo), jnp.float32),
        grid=(N, Ho),
        in_specs=[
            pl.BlockSpec((1, 1, Cout, Wo), lambda n, h: (n, h, 0, 0)),
            pl.BlockSpec((Cout, 1), lambda n, h: (0, 0)),
            pl.BlockSpec((Cout, 1), lambda n, h: (0, 0)),
        ],
        out_specs=pl.BlockSpec((1, 1, Cout, Wo), lambda n, h: (n, h, 0, 0)),
        compiler_params=pltpu.CompilerParams(
            dimension_semantics=("parallel", "parallel")),
    )(y, scale, shift)
    return out


def conv_block_2_forward(x_nchw, params):
    """Pallas implementation of conv_block_2.forward.  Input/output NCHW."""
    x = jnp.transpose(x_nchw, (0, 2, 1, 3))  # NCHW -> (N, H, C, W)
    for (w, b, g, bt), p in zip(params, _PADDINGS):
        # `b` (conv bias) is intentionally unused in the kernel path: training-mode
        # BatchNorm subtracts the per-channel mean, cancelling the bias exactly.
        del b
        x = _conv_bn_relu_layer(x, w, g, bt, p)
    return jnp.transpose(x, (0, 2, 1, 3))    # (N, H, C, W) -> NCHW


def init_params(key, ch_in, ch_out):
    """Deterministic init matching the torch module's parameter shapes."""
    params = []
    cin = ch_in
    for _ in range(4):
        key, kw, kb = jax.random.split(key, 3)
        fan_in = cin * 2 * 2
        bound = 1.0 / (fan_in ** 0.5)
        w = jax.random.uniform(kw, (ch_out, cin, 2, 2), jnp.float32, -bound, bound)
        b = jax.random.uniform(kb, (ch_out,), jnp.float32, -bound, bound)
        gamma = jnp.ones((ch_out,), jnp.float32)
        beta = jnp.zeros((ch_out,), jnp.float32)
        params.append((w, b, gamma, beta))
        cin = ch_out
    return params


def reference_forward(x_nchw, params):
    """Pure-JAX reference (lax conv + bias + training-mode BN + ReLU)."""
    x = x_nchw
    for (w, b, g, bt), p in zip(params, _PADDINGS):
        y = lax.conv_general_dilated(
            x, w, window_strides=(1, 1), padding=[(p, p), (p, p)],
            dimension_numbers=("NCHW", "OIHW", "NCHW"))
        y = y + b.reshape(1, -1, 1, 1)
        mean = jnp.mean(y, axis=(0, 2, 3), keepdims=True)
        var = jnp.mean((y - mean) ** 2, axis=(0, 2, 3), keepdims=True)
        y = (y - mean) * lax.rsqrt(var + EPS) * g.reshape(1, -1, 1, 1) \
            + bt.reshape(1, -1, 1, 1)
        x = jnp.maximum(y, 0.0)
    return x


if __name__ == "__main__":
    key = jax.random.PRNGKey(0)
    k_x, k_p = jax.random.split(key)

    N, CH_IN, CH_OUT, H, W = 2, 4, 8, 16, 16
    x = jax.random.normal(k_x, (N, CH_IN, H, W), jnp.float32)
    params = init_params(k_p, CH_IN, CH_OUT)

    fwd = jax.jit(functools.partial(conv_block_2_forward, params=params))
    out = jax.block_until_ready(fwd(x))

    assert out.shape == (N, CH_OUT, H, W), out.shape

    ref = jax.block_until_ready(reference_forward(x, params))
    max_diff = float(jnp.max(jnp.abs(out - ref)))
    assert max_diff < 5e-3, f"mismatch vs reference: {max_diff}"

    print("KERNEL_OK")
</pallas_src>

<mosaic_0001>
module attributes {stable_mosaic.version = 11 : i64} {
  func.func @_conv_stats_kernel(%arg0: i32, %arg1: i32, %arg2: memref<1x1x4x16xf32, #tpu.memory_space<vmem>>, %arg3: memref<1x1x4x16xf32, #tpu.memory_space<vmem>>, %arg4: memref<2x2x8x4xf32, #tpu.memory_space<vmem>>, %arg5: memref<1x1x8x15xf32, #tpu.memory_space<vmem>>, %arg6: memref<1x8x1xf32, #tpu.memory_space<vmem>>, %arg7: memref<1x8x1xf32, #tpu.memory_space<vmem>>) attributes {dimension_semantics = [#tpu.dimension_semantics<parallel>, #tpu.dimension_semantics<arbitrary>], iteration_bounds = array<i64: 2, 15>, scalar_prefetch = 0 : i64, scratch_operands = 0 : i64, tpu.core_type = #tpu.core_type<tc>, window_params = [{transform_indices = @transform_0, window_bounds = array<i64: 1, 1, 4, 16>}, {transform_indices = @transform_1, window_bounds = array<i64: 1, 1, 4, 16>}, {pipeline_mode = #tpu.pipeline_mode<synchronous>, transform_indices = @transform_2, window_bounds = array<i64: 2, 2, 8, 4>}, {transform_indices = @transform_3, window_bounds = array<i64: 1, 1, 8, 15>}, {transform_indices = @transform_4, window_bounds = array<i64: 1, 8, 1>}, {transform_indices = @transform_5, window_bounds = array<i64: 1, 8, 1>}]} {
    %c0_i32 = arith.constant 0 : i32
    %0 = arith.cmpi eq, %arg1, %c0_i32 : i32
    %1 = arith.extui %0 : i1 to i32
    %c0_i32_0 = arith.constant 0 : i32
    %2 = arith.cmpi ne, %1, %c0_i32_0 : i32
    scf.if %2 {
      %cst_44 = arith.constant 0.000000e+00 : f32
      %46 = vector.broadcast %cst_44 : f32 to vector<1x8x1xf32>
      %c0_45 = arith.constant 0 : index
      %c0_46 = arith.constant 0 : index
      %c0_47 = arith.constant 0 : index
      %47 = vector.load %arg6[%c0_45, %c0_46, %c0_47] : memref<1x8x1xf32, #tpu.memory_space<vmem>>, vector<1x8x1xf32>
      tpu.vector_store %arg6[%c0_45, %c0_46, %c0_47], %46 {strides = array<i32>} : memref<1x8x1xf32, #tpu.memory_space<vmem>>, vector<1x8x1xf32>,
      %cst_48 = arith.constant 0.000000e+00 : f32
      %48 = vector.broadcast %cst_48 : f32 to vector<1x8x1xf32>
      %c0_49 = arith.constant 0 : index
      %c0_50 = arith.constant 0 : index
      %c0_51 = arith.constant 0 : index
      %49 = vector.load %arg7[%c0_49, %c0_50, %c0_51] : memref<1x8x1xf32, #tpu.memory_space<vmem>>, vector<1x8x1xf32>
      tpu.vector_store %arg7[%c0_49, %c0_50, %c0_51], %48 {strides = array<i32>} : memref<1x8x1xf32, #tpu.memory_space<vmem>>, vector<1x8x1xf32>,
    } else {
    }
    %c0 = arith.constant 0 : index
    %c0_1 = arith.constant 0 : index
    %c0_2 = arith.constant 0 : index
    %c0_3 = arith.constant 0 : index
    %3 = vector.load %arg2[%c0, %c0_1, %c0_2, %c0_3] : memref<1x1x4x16xf32, #tpu.memory_space<vmem>>, vector<1x1x4x16xf32>
    %4 = vector.shape_cast %3 : vector<1x1x4x16xf32> to vector<4x16xf32>
    %c0_4 = arith.constant 0 : index
    %c0_5 = arith.constant 0 : index
    %c0_6 = arith.constant 0 : index
    %c0_7 = arith.constant 0 : index
    %5 = vector.load %arg3[%c0_4, %c0_5, %c0_6, %c0_7] : memref<1x1x4x16xf32, #tpu.memory_space<vmem>>, vector<1x1x4x16xf32>
    %6 = vector.shape_cast %5 : vector<1x1x4x16xf32> to vector<4x16xf32>
    %c0_8 = arith.constant 0 : index
    %c0_9 = arith.constant 0 : index
    %c0_10 = arith.constant 0 : index
    %c0_11 = arith.constant 0 : index
    %7 = vector.load %arg4[%c0_8, %c0_9, %c0_10, %c0_11] : memref<2x2x8x4xf32, #tpu.memory_space<vmem>>, vector<1x1x8x4xf32>
    %8 = vector.shape_cast %7 : vector<1x1x8x4xf32> to vector<8x4xf32>
    %9 = vector.extract_strided_slice %4 {offsets = [0, 0], sizes = [4, 15], strides = [1, 1]} : vector<4x16xf32> to vector<4x15xf32>
    %cst = arith.constant dense<0.000000e+00> : vector<8x15xf32>
    %10 = tpu.matmul %8, %9, %cst {dimension_numbers = #tpu.dot_dimension_numbers<[1], [0], [0], [1], [0, 0, 1, 1], [], []>} : vector<8x4xf32>, vector<4x15xf32>, vector<8x15xf32> -> vector<8x15xf32>
    %c0_12 = arith.constant 0 : index
    %c1 = arith.constant 1 : index
    %c0_13 = arith.constant 0 : index
    %c0_14 = arith.constant 0 : index
    %11 = vector.load %arg4[%c0_12, %c1, %c0_13, %c0_14] : memref<2x2x8x4xf32, #tpu.memory_space<vmem>>, vector<1x1x8x4xf32>
    %12 = vector.shape_cast %11 : vector<1x1x8x4xf32> to vector<8x4xf32>
    %13 = vector.extract_strided_slice %4 {offsets = [0, 1], sizes = [4, 15], strides = [1, 1]} : vector<4x16xf32> to vector<4x15xf32>
    %cst_15 = arith.constant dense<0.000000e+00> : vector<8x15xf32>
    %14 = tpu.matmul %12, %13, %cst_15 {dimension_numbers = #tpu.dot_dimension_numbers<[1], [0], [0], [1], [0, 0, 1, 1], [], []>} : vector<8x4xf32>, vector<4x15xf32>, vector<8x15xf32> -> vector<8x15xf32>
    %15 = arith.addf %10, %14 : vector<8x15xf32>
    %c1_16 = arith.constant 1 : index
    %c0_17 = arith.constant 0 : index
    %c0_18 = arith.constant 0 : index
    %c0_19 = arith.constant 0 : index
    %16 = vector.load %arg4[%c1_16, %c0_17, %c0_18, %c0_19] : memref<2x2x8x4xf32, #tpu.memory_space<vmem>>, vector<1x1x8x4xf32>
    %17 = vector.shape_cast %16 : vector<1x1x8x4xf32> to vector<8x4xf32>
    %18 = vector.extract_strided_slice %6 {offsets = [0, 0], sizes = [4, 15], strides = [1, 1]} : vector<4x16xf32> to vector<4x15xf32>
    %cst_20 = arith.constant dense<0.000000e+00> : vector<8x15xf32>
    %19 = tpu.matmul %17, %18, %cst_20 {dimension_numbers = #tpu.dot_dimension_numbers<[1], [0], [0], [1], [0, 0, 1, 1], [], []>} : vector<8x4xf32>, vector<4x15xf32>, vector<8x15xf32> -> vector<8x15xf32>
    %20 = arith.addf %15, %19 : vector<8x15xf32>
    %c1_21 = arith.constant 1 : index
    %c1_22 = arith.constant 1 : index
    %c0_23 = arith.constant 0 : index
    %c0_24 = arith.constant 0 : index
    %21 = vector.load %arg4[%c1_21, %c1_22, %c0_23, %c0_24] : memref<2x2x8x4xf32, #tpu.memory_space<vmem>>, vector<1x1x8x4xf32>
    %22 = vector.shape_cast %21 : vector<1x1x8x4xf32> to vector<8x4xf32>
    %23 = vector.extract_strided_slice %6 {offsets = [0, 1], sizes = [4, 15], strides = [1, 1]} : vector<4x16xf32> to vector<4x15xf32>
    %cst_25 = arith.constant dense<0.000000e+00> : vector<8x15xf32>
    %24 = tpu.matmul %22, %23, %cst_25 {dimension_numbers = #tpu.dot_dimension_numbers<[1], [0], [0], [1], [0, 0, 1, 1], [], []>} : vector<8x4xf32>, vector<4x15xf32>, vector<8x15xf32> -> vector<8x15xf32>
    %25 = arith.addf %20, %24 : vector<8x15xf32>
    %c0_26 = arith.constant 0 : index
    %c0_27 = arith.constant 0 : index
    %c0_28 = arith.constant 0 : index
    %c0_29 = arith.constant 0 : index
    %26 = vector.load %arg5[%c0_26, %c0_27, %c0_28, %c0_29] : memref<1x1x8x15xf32, #tpu.memory_space<vmem>>, vector<1x1x8x15xf32>
    %27 = vector.shape_cast %26 : vector<1x1x8x15xf32> to vector<8x15xf32>
    %28 = vector.shape_cast %25 : vector<8x15xf32> to vector<1x1x8x15xf32>
    tpu.vector_store %arg5[%c0_26, %c0_27, %c0_28, %c0_29], %28 {strides = array<i32>} : memref<1x1x8x15xf32, #tpu.memory_space<vmem>>, vector<1x1x8x15xf32>,
    %c0_30 = arith.constant 0 : index
    %c0_31 = arith.constant 0 : index
    %c0_32 = arith.constant 0 : index
    %29 = vector.load %arg6[%c0_30, %c0_31, %c0_32] : memref<1x8x1xf32, #tpu.memory_space<vmem>>, vector<1x8x1xf32>
    %30 = vector.shape_cast %29 : vector<1x8x1xf32> to vector<8x1xf32>
    %cst_33 = arith.constant dense<0.000000e+00> : vector<8xf32>
    %31 = vector.multi_reduction <add>, %25, %cst_33 [1] : vector<8x15xf32> to vector<8xf32>
    %32 = vector.shape_cast %31 : vector<8xf32> to vector<8x1xf32>
    %33 = arith.addf %30, %32 : vector<8x1xf32>
    %c0_34 = arith.constant 0 : index
    %c0_35 = arith.constant 0 : index
    %c0_36 = arith.constant 0 : index
    %34 = vector.load %arg6[%c0_34, %c0_35, %c0_36] : memref<1x8x1xf32, #tpu.memory_space<vmem>>, vector<1x8x1xf32>
    %35 = vector.shape_cast %34 : vector<1x8x1xf32> to vector<8x1xf32>
    %36 = vector.shape_cast %33 : vector<8x1xf32> to vector<1x8x1xf32>
    tpu.vector_store %arg6[%c0_34, %c0_35, %c0_36], %36 {strides = array<i32>} : memref<1x8x1xf32, #tpu.memory_space<vmem>>, vector<1x8x1xf32>,
    %c0_37 = arith.constant 0 : index
    %c0_38 = arith.constant 0 : index
    %c0_39 = arith.constant 0 : index
    %37 = vector.load %arg7[%c0_37, %c0_38, %c0_39] : memref<1x8x1xf32, #tpu.memory_space<vmem>>, vector<1x8x1xf32>
    %38 = vector.shape_cast %37 : vector<1x8x1xf32> to vector<8x1xf32>
    %39 = arith.mulf %25, %25 : vector<8x15xf32>
    %cst_40 = arith.constant dense<0.000000e+00> : vector<8xf32>
    %40 = vector.multi_reduction <add>, %39, %cst_40 [1] : vector<8x15xf32> to vector<8xf32>
    %41 = vector.shape_cast %40 : vector<8xf32> to vector<8x1xf32>
    %42 = arith.addf %38, %41 : vector<8x1xf32>
    %c0_41 = arith.constant 0 : index
    %c0_42 = arith.constant 0 : index
    %c0_43 = arith.constant 0 : index
    %43 = vector.load %arg7[%c0_41, %c0_42, %c0_43] : memref<1x8x1xf32, #tpu.memory_space<vmem>>, vector<1x8x1xf32>
    %44 = vector.shape_cast %43 : vector<1x8x1xf32> to vector<8x1xf32>
    %45 = vector.shape_cast %42 : vector<8x1xf32> to vector<1x8x1xf32>
    tpu.vector_store %arg7[%c0_41, %c0_42, %c0_43], %45 {strides = array<i32>} : memref<1x8x1xf32, #tpu.memory_space<vmem>>, vector<1x8x1xf32>,
    return
  }
  func.func @transform_0(%arg0: i32, %arg1: i32) -> (i32, i32, i32, i32) {
    %c0_i32 = arith.constant 0 : i32
    %c0_i32_0 = arith.constant 0 : i32
    %c0_i32_1 = arith.constant 0 : i32
    return %arg0, %arg1, %c0_i32, %c0_i32_0 : i32, i32, i32, i32
  }
  func.func @transform_1(%arg0: i32, %arg1: i32) -> (i32, i32, i32, i32) {
    %c1_i32 = arith.constant 1 : i32
    %0 = arith.addi %arg1, %c1_i32 : i32
    %c0_i32 = arith.constant 0 : i32
    %c0_i32_0 = arith.constant 0 : i32
    %c0_i32_1 = arith.constant 0 : i32
    return %arg0, %0, %c0_i32, %c0_i32_0 : i32, i32, i32, i32
  }
  func.func @transform_2(%arg0: i32, %arg1: i32) -> (i32, i32, i32, i32) {
    %c0_i32 = arith.constant 0 : i32
    %c0_i32_0 = arith.constant 0 : i32
    %c0_i32_1 = arith.constant 0 : i32
    %c0_i32_2 = arith.constant 0 : i32
    %c0_i32_3 = arith.constant 0 : i32
    return %c0_i32, %c0_i32_0, %c0_i32_1, %c0_i32_2 : i32, i32, i32, i32
  }
  func.func @transform_3(%arg0: i32, %arg1: i32) -> (i32, i32, i32, i32) {
    %c0_i32 = arith.constant 0 : i32
    %c0_i32_0 = arith.constant 0 : i32
    %c0_i32_1 = arith.constant 0 : i32
    return %arg0, %arg1, %c0_i32, %c0_i32_0 : i32, i32, i32, i32
  }
  func.func @transform_4(%arg0: i32, %arg1: i32) -> (i32, i32, i32) {
    %c0_i32 = arith.constant 0 : i32
    %c0_i32_0 = arith.constant 0 : i32
    %c0_i32_1 = arith.constant 0 : i32
    return %arg0, %c0_i32, %c0_i32_0 : i32, i32, i32
  }
  func.func @transform_5(%arg0: i32, %arg1: i32) -> (i32, i32, i32) {
    %c0_i32 = arith.constant 0 : i32
    %c0_i32_0 = arith.constant 0 : i32
    %c0_i32_1 = arith.constant 0 : i32
    return %arg0, %c0_i32, %c0_i32_0 : i32, i32, i32
  }
}

module attributes {stable_mosaic.version = 11 : i64} {
  func.func @_bn_relu_kernel(%arg0: i32, %arg1: i32, %arg2: memref<1x1x8x15xf32, #tpu.memory_space<vmem>>, %arg3: memref<8x1xf32, #tpu.memory_space<vmem>>, %arg4: memref<8x1xf32, #tpu.memory_space<vmem>>, %arg5: memref<1x1x8x15xf32, #tpu.memory_space<vmem>>) attributes {dimension_semantics = [#tpu.dimension_semantics<parallel>, #tpu.dimension_semantics<parallel>], iteration_bounds = array<i64: 2, 15>, scalar_prefetch = 0 : i64, scratch_operands = 0 : i64, tpu.core_type = #tpu.core_type<tc>, window_params = [{transform_indices = @transform_0, window_bounds = array<i64: 1, 1, 8, 15>}, {pipeline_mode = #tpu.pipeline_mode<synchronous>, transform_indices = @transform_1, window_bounds = array<i64: 8, 1>}, {pipeline_mode = #tpu.pipeline_mode<synchronous>, transform_indices = @transform_2, window_bounds = array<i64: 8, 1>}, {transform_indices = @transform_3, window_bounds = array<i64: 1, 1, 8, 15>}]} {
    %c0 = arith.constant 0 : index
    %c0_0 = arith.constant 0 : index
    %c0_1 = arith.constant 0 : index
    %c0_2 = arith.constant 0 : index
    %0 = vector.load %arg2[%c0, %c0_0, %c0_1, %c0_2] : memref<1x1x8x15xf32, #tpu.memory_space<vmem>>, vector<1x1x8x15xf32>
    %1 = vector.shape_cast %0 : vector<1x1x8x15xf32> to vector<8x15xf32>
    %c0_3 = arith.constant 0 : index
    %c0_4 = arith.constant 0 : index
    %2 = vector.load %arg3[%c0_3, %c0_4] : memref<8x1xf32, #tpu.memory_space<vmem>>, vector<8x1xf32>
    %3 = vector.broadcast %2 : vector<8x1xf32> to vector<8x15xf32>
    %4 = arith.mulf %1, %3 : vector<8x15xf32>
    %c0_5 = arith.constant 0 : index
    %c0_6 = arith.constant 0 : index
    %5 = vector.load %arg4[%c0_5, %c0_6] : memref<8x1xf32, #tpu.memory_space<vmem>>, vector<8x1xf32>
    %6 = vector.broadcast %5 : vector<8x1xf32> to vector<8x15xf32>
    %7 = arith.addf %4, %6 : vector<8x15xf32>
    %cst = arith.constant 0.000000e+00 : f32
    %8 = vector.broadcast %cst : f32 to vector<8x15xf32>
    %9 = arith.maximumf %7, %8 : vector<8x15xf32>
    %c0_7 = arith.constant 0 : index
    %c0_8 = arith.constant 0 : index
    %c0_9 = arith.constant 0 : index
    %c0_10 = arith.constant 0 : index
    %10 = vector.load %arg5[%c0_7, %c0_8, %c0_9, %c0_10] : memref<1x1x8x15xf32, #tpu.memory_space<vmem>>, vector<1x1x8x15xf32>
    %11 = vector.shape_cast %10 : vector<1x1x8x15xf32> to vector<8x15xf32>
    %12 = vector.shape_cast %9 : vector<8x15xf32> to vector<1x1x8x15xf32>
    tpu.vector_store %arg5[%c0_7, %c0_8, %c0_9, %c0_10], %12 {strides = array<i32>} : memref<1x1x8x15xf32, #tpu.memory_space<vmem>>, vector<1x1x8x15xf32>,
    return
  }
  func.func @transform_0(%arg0: i32, %arg1: i32) -> (i32, i32, i32, i32) {
    %c0_i32 = arith.constant 0 : i32
    %c0_i32_0 = arith.constant 0 : i32
    %c0_i32_1 = arith.constant 0 : i32
    return %arg0, %arg1, %c0_i32, %c0_i32_0 : i32, i32, i32, i32
  }
  func.func @transform_1(%arg0: i32, %arg1: i32) -> (i32, i32) {
    %c0_i32 = arith.constant 0 : i32
    %c0_i32_0 = arith.constant 0 : i32
    %c0_i32_1 = arith.constant 0 : i32
    return %c0_i32, %c0_i32_0 : i32, i32
  }
  func.func @transform_2(%arg0: i32, %arg1: i32) -> (i32, i32) {
    %c0_i32 = arith.constant 0 : i32
    %c0_i32_0 = arith.constant 0 : i32
    %c0_i32_1 = arith.constant 0 : i32
    return %c0_i32, %c0_i32_0 : i32, i32
  }
  func.func @transform_3(%arg0: i32, %arg1: i32) -> (i32, i32, i32, i32) {
    %c0_i32 = arith.constant 0 : i32
    %c0_i32_0 = arith.constant 0 : i32
    %c0_i32_1 = arith.constant 0 : i32
    return %arg0, %arg1, %c0_i32, %c0_i32_0 : i32, i32, i32, i32
  }
}

module attributes {stable_mosaic.version = 11 : i64} {
  func.func @_conv_stats_kernel(%arg0: i32, %arg1: i32, %arg2: memref<1x1x8x17xf32, #tpu.memory_space<vmem>>, %arg3: memref<1x1x8x17xf32, #tpu.memory_space<vmem>>, %arg4: memref<2x2x8x8xf32, #tpu.memory_space<vmem>>, %arg5: memref<1x1x8x16xf32, #tpu.memory_space<vmem>>, %arg6: memref<1x8x1xf32, #tpu.memory_space<vmem>>, %arg7: memref<1x8x1xf32, #tpu.memory_space<vmem>>) attributes {dimension_semantics = [#tpu.dimension_semantics<parallel>, #tpu.dimension_semantics<arbitrary>], iteration_bounds = array<i64: 2, 16>, scalar_prefetch = 0 : i64, scratch_operands = 0 : i64, tpu.core_type = #tpu.core_type<tc>, window_params = [{transform_indices = @transform_0, window_bounds = array<i64: 1, 1, 8, 17>}, {transform_indices = @transform_1, window_bounds = array<i64: 1, 1, 8, 17>}, {pipeline_mode = #tpu.pipeline_mode<synchronous>, transform_indices = @transform_2, window_bounds = array<i64: 2, 2, 8, 8>}, {transform_indices = @transform_3, window_bounds = array<i64: 1, 1, 8, 16>}, {transform_indices = @transform_4, window_bounds = array<i64: 1, 8, 1>}, {transform_indices = @transform_5, window_bounds = array<i64: 1, 8, 1>}]} {
    %c0_i32 = arith.constant 0 : i32
    %0 = arith.cmpi eq, %arg1, %c0_i32 : i32
    %1 = arith.extui %0 : i1 to i32
    %c0_i32_0 = arith.constant 0 : i32
    %2 = arith.cmpi ne, %1, %c0_i32_0 : i32
    scf.if %2 {
      %cst_44 = arith.constant 0.000000e+00 : f32
      %46 = vector.broadcast %cst_44 : f32 to vector<1x8x1xf32>
      %c0_45 = arith.constant 0 : index
      %c0_46 = arith.constant 0 : index
      %c0_47 = arith.constant 0 : index
      %47 = vector.load %arg6[%c0_45, %c0_46, %c0_47] : memref<1x8x1xf32, #tpu.memory_space<vmem>>, vector<1x8x1xf32>
      tpu.vector_store %arg6[%c0_45, %c0_46, %c0_47], %46 {strides = array<i32>} : memref<1x8x1xf32, #tpu.memory_space<vmem>>, vector<1x8x1xf32>,
      %cst_48 = arith.constant 0.000000e+00 : f32
      %48 = vector.broadcast %cst_48 : f32 to vector<1x8x1xf32>
      %c0_49 = arith.constant 0 : index
      %c0_50 = arith.constant 0 : index
      %c0_51 = arith.constant 0 : index
      %49 = vector.load %arg7[%c0_49, %c0_50, %c0_51] : memref<1x8x1xf32, #tpu.memory_space<vmem>>, vector<1x8x1xf32>
      tpu.vector_store %arg7[%c0_49, %c0_50, %c0_51], %48 {strides = array<i32>} : memref<1x8x1xf32, #tpu.memory_space<vmem>>, vector<1x8x1xf32>,
    } else {
    }
    %c0 = arith.constant 0 : index
    %c0_1 = arith.constant 0 : index
    %c0_2 = arith.constant 0 : index
    %c0_3 = arith.constant 0 : index
    %3 = vector.load %arg2[%c0, %c0_1, %c0_2, %c0_3] : memref<1x1x8x17xf32, #tpu.memory_space<vmem>>, vector<1x1x8x17xf32>
    %4 = vector.shape_cast %3 : vector<1x1x8x17xf32> to vector<8x17xf32>
    %c0_4 = arith.constant 0 : index
    %c0_5 = arith.constant 0 : index
    %c0_6 = arith.constant 0 : index
    %c0_7 = arith.constant 0 : index
    %5 = vector.load %arg3[%c0_4, %c0_5, %c0_6, %c0_7] : memref<1x1x8x17xf32, #tpu.memory_space<vmem>>, vector<1x1x8x17xf32>
    %6 = vector.shape_cast %5 : vector<1x1x8x17xf32> to vector<8x17xf32>
    %c0_8 = arith.constant 0 : index
    %c0_9 = arith.constant 0 : index
    %c0_10 = arith.constant 0 : index
    %c0_11 = arith.constant 0 : index
    %7 = vector.load %arg4[%c0_8, %c0_9, %c0_10, %c0_11] : memref<2x2x8x8xf32, #tpu.memory_space<vmem>>, vector<1x1x8x8xf32>
    %8 = vector.shape_cast %7 : vector<1x1x8x8xf32> to vector<8x8xf32>
    %9 = vector.extract_strided_slice %4 {offsets = [0, 0], sizes = [8, 16], strides = [1, 1]} : vector<8x17xf32> to vector<8x16xf32>
    %cst = arith.constant dense<0.000000e+00> : vector<8x16xf32>
    %10 = tpu.matmul %8, %9, %cst {dimension_numbers = #tpu.dot_dimension_numbers<[1], [0], [0], [1], [0, 0, 1, 1], [], []>} : vector<8x8xf32>, vector<8x16xf32>, vector<8x16xf32> -> vector<8x16xf32>
    %c0_12 = arith.constant 0 : index
    %c1 = arith.constant 1 : index
    %c0_13 = arith.constant 0 : index
    %c0_14 = arith.constant 0 : index
    %11 = vector.load %arg4[%c0_12, %c1, %c0_13, %c0_14] : memref<2x2x8x8xf32, #tpu.memory_space<vmem>>, vector<1x1x8x8xf32>
    %12 = vector.shape_cast %11 : vector<1x1x8x8xf32> to vector<8x8xf32>
    %13 = vector.extract_strided_slice %4 {offsets = [0, 1], sizes = [8, 16], strides = [1, 1]} : vector<8x17xf32> to vector<8x16xf32>
    %cst_15 = arith.constant dense<0.000000e+00> : vector<8x16xf32>
    %14 = tpu.matmul %12, %13, %cst_15 {dimension_numbers = #tpu.dot_dimension_numbers<[1], [0], [0], [1], [0, 0, 1, 1], [], []>} : vector<8x8xf32>, vector<8x16xf32>, vector<8x16xf32> -> vector<8x16xf32>
    %15 = arith.addf %10, %14 : vector<8x16xf32>
    %c1_16 = arith.constant 1 : index
    %c0_17 = arith.constant 0 : index
    %c0_18 = arith.constant 0 : index
    %c0_19 = arith.constant 0 : index
    %16 = vector.load %arg4[%c1_16, %c0_17, %c0_18, %c0_19] : memref<2x2x8x8xf32, #tpu.memory_space<vmem>>, vector<1x1x8x8xf32>
    %17 = vector.shape_cast %16 : vector<1x1x8x8xf32> to vector<8x8xf32>
    %18 = vector.extract_strided_slice %6 {offsets = [0, 0], sizes = [8, 16], strides = [1, 1]} : vector<8x17xf32> to vector<8x16xf32>
    %cst_20 = arith.constant dense<0.000000e+00> : vector<8x16xf32>
    %19 = tpu.matmul %17, %18, %cst_20 {dimension_numbers = #tpu.dot_dimension_numbers<[1], [0], [0], [1], [0, 0, 1, 1], [], []>} : vector<8x8xf32>, vector<8x16xf32>, vector<8x16xf32> -> vector<8x16xf32>
    %20 = arith.addf %15, %19 : vector<8x16xf32>
    %c1_21 = arith.constant 1 : index
    %c1_22 = arith.constant 1 : index
    %c0_23 = arith.constant 0 : index
    %c0_24 = arith.constant 0 : index
    %21 = vector.load %arg4[%c1_21, %c1_22, %c0_23, %c0_24] : memref<2x2x8x8xf32, #tpu.memory_space<vmem>>, vector<1x1x8x8xf32>
    %22 = vector.shape_cast %21 : vector<1x1x8x8xf32> to vector<8x8xf32>
    %23 = vector.extract_strided_slice %6 {offsets = [0, 1], sizes = [8, 16], strides = [1, 1]} : vector<8x17xf32> to vector<8x16xf32>
    %cst_25 = arith.constant dense<0.000000e+00> : vector<8x16xf32>
    %24 = tpu.matmul %22, %23, %cst_25 {dimension_numbers = #tpu.dot_dimension_numbers<[1], [0], [0], [1], [0, 0, 1, 1], [], []>} : vector<8x8xf32>, vector<8x16xf32>, vector<8x16xf32> -> vector<8x16xf32>
    %25 = arith.addf %20, %24 : vector<8x16xf32>
    %c0_26 = arith.constant 0 : index
    %c0_27 = arith.constant 0 : index
    %c0_28 = arith.constant 0 : index
    %c0_29 = arith.constant 0 : index
    %26 = vector.load %arg5[%c0_26, %c0_27, %c0_28, %c0_29] : memref<1x1x8x16xf32, #tpu.memory_space<vmem>>, vector<1x1x8x16xf32>
    %27 = vector.shape_cast %26 : vector<1x1x8x16xf32> to vector<8x16xf32>
    %28 = vector.shape_cast %25 : vector<8x16xf32> to vector<1x1x8x16xf32>
    tpu.vector_store %arg5[%c0_26, %c0_27, %c0_28, %c0_29], %28 {strides = array<i32>} : memref<1x1x8x16xf32, #tpu.memory_space<vmem>>, vector<1x1x8x16xf32>,
    %c0_30 = arith.constant 0 : index
    %c0_31 = arith.constant 0 : index
    %c0_32 = arith.constant 0 : index
    %29 = vector.load %arg6[%c0_30, %c0_31, %c0_32] : memref<1x8x1xf32, #tpu.memory_space<vmem>>, vector<1x8x1xf32>
    %30 = vector.shape_cast %29 : vector<1x8x1xf32> to vector<8x1xf32>
    %cst_33 = arith.constant dense<0.000000e+00> : vector<8xf32>
    %31 = vector.multi_reduction <add>, %25, %cst_33 [1] : vector<8x16xf32> to vector<8xf32>
    %32 = vector.shape_cast %31 : vector<8xf32> to vector<8x1xf32>
    %33 = arith.addf %30, %32 : vector<8x1xf32>
    %c0_34 = arith.constant 0 : index
    %c0_35 = arith.constant 0 : index
    %c0_36 = arith.constant 0 : index
    %34 = vector.load %arg6[%c0_34, %c0_35, %c0_36] : memref<1x8x1xf32, #tpu.memory_space<vmem>>, vector<1x8x1xf32>
    %35 = vector.shape_cast %34 : vector<1x8x1xf32> to vector<8x1xf32>
    %36 = vector.shape_cast %33 : vector<8x1xf32> to vector<1x8x1xf32>
    tpu.vector_store %arg6[%c0_34, %c0_35, %c0_36], %36 {strides = array<i32>} : memref<1x8x1xf32, #tpu.memory_space<vmem>>, vector<1x8x1xf32>,
    %c0_37 = arith.constant 0 : index
    %c0_38 = arith.constant 0 : index
    %c0_39 = arith.constant 0 : index
    %37 = vector.load %arg7[%c0_37, %c0_38, %c0_39] : memref<1x8x1xf32, #tpu.memory_space<vmem>>, vector<1x8x1xf32>
    %38 = vector.shape_cast %37 : vector<1x8x1xf32> to vector<8x1xf32>
    %39 = arith.mulf %25, %25 : vector<8x16xf32>
    %cst_40 = arith.constant dense<0.000000e+00> : vector<8xf32>
    %40 = vector.multi_reduction <add>, %39, %cst_40 [1] : vector<8x16xf32> to vector<8xf32>
    %41 = vector.shape_cast %40 : vector<8xf32> to vector<8x1xf32>
    %42 = arith.addf %38, %41 : vector<8x1xf32>
    %c0_41 = arith.constant 0 : index
    %c0_42 = arith.constant 0 : index
    %c0_43 = arith.constant 0 : index
    %43 = vector.load %arg7[%c0_41, %c0_42, %c0_43] : memref<1x8x1xf32, #tpu.memory_space<vmem>>, vector<1x8x1xf32>
    %44 = vector.shape_cast %43 : vector<1x8x1xf32> to vector<8x1xf32>
    %45 = vector.shape_cast %42 : vector<8x1xf32> to vector<1x8x1xf32>
    tpu.vector_store %arg7[%c0_41, %c0_42, %c0_43], %45 {strides = array<i32>} : memref<1x8x1xf32, #tpu.memory_space<vmem>>, vector<1x8x1xf32>,
    return
  }
  func.func @transform_0(%arg0: i32, %arg1: i32) -> (i32, i32, i32, i32) {
    %c0_i32 = arith.constant 0 : i32
    %c0_i32_0 = arith.constant 0 : i32
    %c0_i32_1 = arith.constant 0 : i32
    return %arg0, %arg1, %c0_i32, %c0_i32_0 : i32, i32, i32, i32
  }
  func.func @transform_1(%arg0: i32, %arg1: i32) -> (i32, i32, i32, i32) {
    %c1_i32 = arith.constant 1 : i32
    %0 = arith.addi %arg1, %c1_i32 : i32
    %c0_i32 = arith.constant 0 : i32
    %c0_i32_0 = arith.constant 0 : i32
    %c0_i32_1 = arith.constant 0 : i32
    return %arg0, %0, %c0_i32, %c0_i32_0 : i32, i32, i32, i32
  }
  func.func @transform_2(%arg0: i32, %arg1: i32) -> (i32, i32, i32, i32) {
    %c0_i32 = arith.constant 0 : i32
    %c0_i32_0 = arith.constant 0 : i32
    %c0_i32_1 = arith.constant 0 : i32
    %c0_i32_2 = arith.constant 0 : i32
    %c0_i32_3 = arith.constant 0 : i32
    return %c0_i32, %c0_i32_0, %c0_i32_1, %c0_i32_2 : i32, i32, i32, i32
  }
  func.func @transform_3(%arg0: i32, %arg1: i32) -> (i32, i32, i32, i32) {
    %c0_i32 = arith.constant 0 : i32
    %c0_i32_0 = arith.constant 0 : i32
    %c0_i32_1 = arith.constant 0 : i32
    return %arg0, %arg1, %c0_i32, %c0_i32_0 : i32, i32, i32, i32
  }
  func.func @transform_4(%arg0: i32, %arg1: i32) -> (i32, i32, i32) {
    %c0_i32 = arith.constant 0 : i32
    %c0_i32_0 = arith.constant 0 : i32
    %c0_i32_1 = arith.constant 0 : i32
    return %arg0, %c0_i32, %c0_i32_0 : i32, i32, i32
  }
  func.func @transform_5(%arg0: i32, %arg1: i32) -> (i32, i32, i32) {
    %c0_i32 = arith.constant 0 : i32
    %c0_i32_0 = arith.constant 0 : i32
    %c0_i32_1 = arith.constant 0 : i32
    return %arg0, %c0_i32, %c0_i32_0 : i32, i32, i32
  }
}

module attributes {stable_mosaic.version = 11 : i64} {
  func.func @_bn_relu_kernel(%arg0: i32, %arg1: i32, %arg2: memref<1x1x8x16xf32, #tpu.memory_space<vmem>>, %arg3: memref<8x1xf32, #tpu.memory_space<vmem>>, %arg4: memref<8x1xf32, #tpu.memory_space<vmem>>, %arg5: memref<1x1x8x16xf32, #tpu.memory_space<vmem>>) attributes {dimension_semantics = [#tpu.dimension_semantics<parallel>, #tpu.dimension_semantics<parallel>], iteration_bounds = array<i64: 2, 16>, scalar_prefetch = 0 : i64, scratch_operands = 0 : i64, tpu.core_type = #tpu.core_type<tc>, window_params = [{transform_indices = @transform_0, window_bounds = array<i64: 1, 1, 8, 16>}, {pipeline_mode = #tpu.pipeline_mode<synchronous>, transform_indices = @transform_1, window_bounds = array<i64: 8, 1>}, {pipeline_mode = #tpu.pipeline_mode<synchronous>, transform_indices = @transform_2, window_bounds = array<i64: 8, 1>}, {transform_indices = @transform_3, window_bounds = array<i64: 1, 1, 8, 16>}]} {
    %c0 = arith.constant 0 : index
    %c0_0 = arith.constant 0 : index
    %c0_1 = arith.constant 0 : index
    %c0_2 = arith.constant 0 : index
    %0 = vector.load %arg2[%c0, %c0_0, %c0_1, %c0_2] : memref<1x1x8x16xf32, #tpu.memory_space<vmem>>, vector<1x1x8x16xf32>
    %1 = vector.shape_cast %0 : vector<1x1x8x16xf32> to vector<8x16xf32>
    %c0_3 = arith.constant 0 : index
    %c0_4 = arith.constant 0 : index
    %2 = vector.load %arg3[%c0_3, %c0_4] : memref<8x1xf32, #tpu.memory_space<vmem>>, vector<8x1xf32>
    %3 = vector.broadcast %2 : vector<8x1xf32> to vector<8x16xf32>
    %4 = arith.mulf %1, %3 : vector<8x16xf32>
    %c0_5 = arith.constant 0 : index
    %c0_6 = arith.constant 0 : index
    %5 = vector.load %arg4[%c0_5, %c0_6] : memref<8x1xf32, #tpu.memory_space<vmem>>, vector<8x1xf32>
    %6 = vector.broadcast %5 : vector<8x1xf32> to vector<8x16xf32>
    %7 = arith.addf %4, %6 : vector<8x16xf32>
    %cst = arith.constant 0.000000e+00 : f32
    %8 = vector.broadcast %cst : f32 to vector<8x16xf32>
    %9 = arith.maximumf %7, %8 : vector<8x16xf32>
    %c0_7 = arith.constant 0 : index
    %c0_8 = arith.constant 0 : index
    %c0_9 = arith.constant 0 : index
    %c0_10 = arith.constant 0 : index
    %10 = vector.load %arg5[%c0_7, %c0_8, %c0_9, %c0_10] : memref<1x1x8x16xf32, #tpu.memory_space<vmem>>, vector<1x1x8x16xf32>
    %11 = vector.shape_cast %10 : vector<1x1x8x16xf32> to vector<8x16xf32>
    %12 = vector.shape_cast %9 : vector<8x16xf32> to vector<1x1x8x16xf32>
    tpu.vector_store %arg5[%c0_7, %c0_8, %c0_9, %c0_10], %12 {strides = array<i32>} : memref<1x1x8x16xf32, #tpu.memory_space<vmem>>, vector<1x1x8x16xf32>,
    return
  }
  func.func @transform_0(%arg0: i32, %arg1: i32) -> (i32, i32, i32, i32) {
    %c0_i32 = arith.constant 0 : i32
    %c0_i32_0 = arith.constant 0 : i32
    %c0_i32_1 = arith.constant 0 : i32
    return %arg0, %arg1, %c0_i32, %c0_i32_0 : i32, i32, i32, i32
  }
  func.func @transform_1(%arg0: i32, %arg1: i32) -> (i32, i32) {
    %c0_i32 = arith.constant 0 : i32
    %c0_i32_0 = arith.constant 0 : i32
    %c0_i32_1 = arith.constant 0 : i32
    return %c0_i32, %c0_i32_0 : i32, i32
  }
  func.func @transform_2(%arg0: i32, %arg1: i32) -> (i32, i32) {
    %c0_i32 = arith.constant 0 : i32
    %c0_i32_0 = arith.constant 0 : i32
    %c0_i32_1 = arith.constant 0 : i32
    return %c0_i32, %c0_i32_0 : i32, i32
  }
  func.func @transform_3(%arg0: i32, %arg1: i32) -> (i32, i32, i32, i32) {
    %c0_i32 = arith.constant 0 : i32
    %c0_i32_0 = arith.constant 0 : i32
    %c0_i32_1 = arith.constant 0 : i32
    return %arg0, %arg1, %c0_i32, %c0_i32_0 : i32, i32, i32, i32
  }
}

module attributes {stable_mosaic.version = 11 : i64} {
  func.func @_conv_stats_kernel(%arg0: i32, %arg1: i32, %arg2: memref<1x1x8x16xf32, #tpu.memory_space<vmem>>, %arg3: memref<1x1x8x16xf32, #tpu.memory_space<vmem>>, %arg4: memref<2x2x8x8xf32, #tpu.memory_space<vmem>>, %arg5: memref<1x1x8x15xf32, #tpu.memory_space<vmem>>, %arg6: memref<1x8x1xf32, #tpu.memory_space<vmem>>, %arg7: memref<1x8x1xf32, #tpu.memory_space<vmem>>) attributes {dimension_semantics = [#tpu.dimension_semantics<parallel>, #tpu.dimension_semantics<arbitrary>], iteration_bounds = array<i64: 2, 15>, scalar_prefetch = 0 : i64, scratch_operands = 0 : i64, tpu.core_type = #tpu.core_type<tc>, window_params = [{transform_indices = @transform_0, window_bounds = array<i64: 1, 1, 8, 16>}, {transform_indices = @transform_1, window_bounds = array<i64: 1, 1, 8, 16>}, {pipeline_mode = #tpu.pipeline_mode<synchronous>, transform_indices = @transform_2, window_bounds = array<i64: 2, 2, 8, 8>}, {transform_indices = @transform_3, window_bounds = array<i64: 1, 1, 8, 15>}, {transform_indices = @transform_4, window_bounds = array<i64: 1, 8, 1>}, {transform_indices = @transform_5, window_bounds = array<i64: 1, 8, 1>}]} {
    %c0_i32 = arith.constant 0 : i32
    %0 = arith.cmpi eq, %arg1, %c0_i32 : i32
    %1 = arith.extui %0 : i1 to i32
    %c0_i32_0 = arith.constant 0 : i32
    %2 = arith.cmpi ne, %1, %c0_i32_0 : i32
    scf.if %2 {
      %cst_44 = arith.constant 0.000000e+00 : f32
      %46 = vector.broadcast %cst_44 : f32 to vector<1x8x1xf32>
      %c0_45 = arith.constant 0 : index
      %c0_46 = arith.constant 0 : index
      %c0_47 = arith.constant 0 : index
      %47 = vector.load %arg6[%c0_45, %c0_46, %c0_47] : memref<1x8x1xf32, #tpu.memory_space<vmem>>, vector<1x8x1xf32>
      tpu.vector_store %arg6[%c0_45, %c0_46, %c0_47], %46 {strides = array<i32>} : memref<1x8x1xf32, #tpu.memory_space<vmem>>, vector<1x8x1xf32>,
      %cst_48 = arith.constant 0.000000e+00 : f32
      %48 = vector.broadcast %cst_48 : f32 to vector<1x8x1xf32>
      %c0_49 = arith.constant 0 : index
      %c0_50 = arith.constant 0 : index
      %c0_51 = arith.constant 0 : index
      %49 = vector.load %arg7[%c0_49, %c0_50, %c0_51] : memref<1x8x1xf32, #tpu.memory_space<vmem>>, vector<1x8x1xf32>
      tpu.vector_store %arg7[%c0_49, %c0_50, %c0_51], %48 {strides = array<i32>} : memref<1x8x1xf32, #tpu.memory_space<vmem>>, vector<1x8x1xf32>,
    } else {
    }
    %c0 = arith.constant 0 : index
    %c0_1 = arith.constant 0 : index
    %c0_2 = arith.constant 0 : index
    %c0_3 = arith.constant 0 : index
    %3 = vector.load %arg2[%c0, %c0_1, %c0_2, %c0_3] : memref<1x1x8x16xf32, #tpu.memory_space<vmem>>, vector<1x1x8x16xf32>
    %4 = vector.shape_cast %3 : vector<1x1x8x16xf32> to vector<8x16xf32>
    %c0_4 = arith.constant 0 : index
    %c0_5 = arith.constant 0 : index
    %c0_6 = arith.constant 0 : index
    %c0_7 = arith.constant 0 : index
    %5 = vector.load %arg3[%c0_4, %c0_5, %c0_6, %c0_7] : memref<1x1x8x16xf32, #tpu.memory_space<vmem>>, vector<1x1x8x16xf32>
    %6 = vector.shape_cast %5 : vector<1x1x8x16xf32> to vector<8x16xf32>
    %c0_8 = arith.constant 0 : index
    %c0_9 = arith.constant 0 : index
    %c0_10 = arith.constant 0 : index
    %c0_11 = arith.constant 0 : index
    %7 = vector.load %arg4[%c0_8, %c0_9, %c0_10, %c0_11] : memref<2x2x8x8xf32, #tpu.memory_space<vmem>>, vector<1x1x8x8xf32>
    %8 = vector.shape_cast %7 : vector<1x1x8x8xf32> to vector<8x8xf32>
    %9 = vector.extract_strided_slice %4 {offsets = [0, 0], sizes = [8, 15], strides = [1, 1]} : vector<8x16xf32> to vector<8x15xf32>
    %cst = arith.constant dense<0.000000e+00> : vector<8x15xf32>
    %10 = tpu.matmul %8, %9, %cst {dimension_numbers = #tpu.dot_dimension_numbers<[1], [0], [0], [1], [0, 0, 1, 1], [], []>} : vector<8x8xf32>, vector<8x15xf32>, vector<8x15xf32> -> vector<8x15xf32>
    %c0_12 = arith.constant 0 : index
    %c1 = arith.constant 1 : index
    %c0_13 = arith.constant 0 : index
    %c0_14 = arith.constant 0 : index
    %11 = vector.load %arg4[%c0_12, %c1, %c0_13, %c0_14] : memref<2x2x8x8xf32, #tpu.memory_space<vmem>>, vector<1x1x8x8xf32>
    %12 = vector.shape_cast %11 : vector<1x1x8x8xf32> to vector<8x8xf32>
    %13 = vector.extract_strided_slice %4 {offsets = [0, 1], sizes = [8, 15], strides = [1, 1]} : vector<8x16xf32> to vector<8x15xf32>
    %cst_15 = arith.constant dense<0.000000e+00> : vector<8x15xf32>
    %14 = tpu.matmul %12, %13, %cst_15 {dimension_numbers = #tpu.dot_dimension_numbers<[1], [0], [0], [1], [0, 0, 1, 1], [], []>} : vector<8x8xf32>, vector<8x15xf32>, vector<8x15xf32> -> vector<8x15xf32>
    %15 = arith.addf %10, %14 : vector<8x15xf32>
    %c1_16 = arith.constant 1 : index
    %c0_17 = arith.constant 0 : index
    %c0_18 = arith.constant 0 : index
    %c0_19 = arith.constant 0 : index
    %16 = vector.load %arg4[%c1_16, %c0_17, %c0_18, %c0_19] : memref<2x2x8x8xf32, #tpu.memory_space<vmem>>, vector<1x1x8x8xf32>
    %17 = vector.shape_cast %16 : vector<1x1x8x8xf32> to vector<8x8xf32>
    %18 = vector.extract_strided_slice %6 {offsets = [0, 0], sizes = [8, 15], strides = [1, 1]} : vector<8x16xf32> to vector<8x15xf32>
    %cst_20 = arith.constant dense<0.000000e+00> : vector<8x15xf32>
    %19 = tpu.matmul %17, %18, %cst_20 {dimension_numbers = #tpu.dot_dimension_numbers<[1], [0], [0], [1], [0, 0, 1, 1], [], []>} : vector<8x8xf32>, vector<8x15xf32>, vector<8x15xf32> -> vector<8x15xf32>
    %20 = arith.addf %15, %19 : vector<8x15xf32>
    %c1_21 = arith.constant 1 : index
    %c1_22 = arith.constant 1 : index
    %c0_23 = arith.constant 0 : index
    %c0_24 = arith.constant 0 : index
    %21 = vector.load %arg4[%c1_21, %c1_22, %c0_23, %c0_24] : memref<2x2x8x8xf32, #tpu.memory_space<vmem>>, vector<1x1x8x8xf32>
    %22 = vector.shape_cast %21 : vector<1x1x8x8xf32> to vector<8x8xf32>
    %23 = vector.extract_strided_slice %6 {offsets = [0, 1], sizes = [8, 15], strides = [1, 1]} : vector<8x16xf32> to vector<8x15xf32>
    %cst_25 = arith.constant dense<0.000000e+00> : vector<8x15xf32>
    %24 = tpu.matmul %22, %23, %cst_25 {dimension_numbers = #tpu.dot_dimension_numbers<[1], [0], [0], [1], [0, 0, 1, 1], [], []>} : vector<8x8xf32>, vector<8x15xf32>, vector<8x15xf32> -> vector<8x15xf32>
    %25 = arith.addf %20, %24 : vector<8x15xf32>
    %c0_26 = arith.constant 0 : index
    %c0_27 = arith.constant 0 : index
    %c0_28 = arith.constant 0 : index
    %c0_29 = arith.constant 0 : index
    %26 = vector.load %arg5[%c0_26, %c0_27, %c0_28, %c0_29] : memref<1x1x8x15xf32, #tpu.memory_space<vmem>>, vector<1x1x8x15xf32>
    %27 = vector.shape_cast %26 : vector<1x1x8x15xf32> to vector<8x15xf32>
    %28 = vector.shape_cast %25 : vector<8x15xf32> to vector<1x1x8x15xf32>
    tpu.vector_store %arg5[%c0_26, %c0_27, %c0_28, %c0_29], %28 {strides = array<i32>} : memref<1x1x8x15xf32, #tpu.memory_space<vmem>>, vector<1x1x8x15xf32>,
    %c0_30 = arith.constant 0 : index
    %c0_31 = arith.constant 0 : index
    %c0_32 = arith.constant 0 : index
    %29 = vector.load %arg6[%c0_30, %c0_31, %c0_32] : memref<1x8x1xf32, #tpu.memory_space<vmem>>, vector<1x8x1xf32>
    %30 = vector.shape_cast %29 : vector<1x8x1xf32> to vector<8x1xf32>
    %cst_33 = arith.constant dense<0.000000e+00> : vector<8xf32>
    %31 = vector.multi_reduction <add>, %25, %cst_33 [1] : vector<8x15xf32> to vector<8xf32>
    %32 = vector.shape_cast %31 : vector<8xf32> to vector<8x1xf32>
    %33 = arith.addf %30, %32 : vector<8x1xf32>
    %c0_34 = arith.constant 0 : index
    %c0_35 = arith.constant 0 : index
    %c0_36 = arith.constant 0 : index
    %34 = vector.load %arg6[%c0_34, %c0_35, %c0_36] : memref<1x8x1xf32, #tpu.memory_space<vmem>>, vector<1x8x1xf32>
    %35 = vector.shape_cast %34 : vector<1x8x1xf32> to vector<8x1xf32>
    %36 = vector.shape_cast %33 : vector<8x1xf32> to vector<1x8x1xf32>
    tpu.vector_store %arg6[%c0_34, %c0_35, %c0_36], %36 {strides = array<i32>} : memref<1x8x1xf32, #tpu.memory_space<vmem>>, vector<1x8x1xf32>,
    %c0_37 = arith.constant 0 : index
    %c0_38 = arith.constant 0 : index
    %c0_39 = arith.constant 0 : index
    %37 = vector.load %arg7[%c0_37, %c0_38, %c0_39] : memref<1x8x1xf32, #tpu.memory_space<vmem>>, vector<1x8x1xf32>
    %38 = vector.shape_cast %37 : vector<1x8x1xf32> to vector<8x1xf32>
    %39 = arith.mulf %25, %25 : vector<8x15xf32>
    %cst_40 = arith.constant dense<0.000000e+00> : vector<8xf32>
    %40 = vector.multi_reduction <add>, %39, %cst_40 [1] : vector<8x15xf32> to vector<8xf32>
    %41 = vector.shape_cast %40 : vector<8xf32> to vector<8x1xf32>
    %42 = arith.addf %38, %41 : vector<8x1xf32>
    %c0_41 = arith.constant 0 : index
    %c0_42 = arith.constant 0 : index
    %c0_43 = arith.constant 0 : index
    %43 = vector.load %arg7[%c0_41, %c0_42, %c0_43] : memref<1x8x1xf32, #tpu.memory_space<vmem>>, vector<1x8x1xf32>
    %44 = vector.shape_cast %43 : vector<1x8x1xf32> to vector<8x1xf32>
    %45 = vector.shape_cast %42 : vector<8x1xf32> to vector<1x8x1xf32>
    tpu.vector_store %arg7[%c0_41, %c0_42, %c0_43], %45 {strides = array<i32>} : memref<1x8x1xf32, #tpu.memory_space<vmem>>, vector<1x8x1xf32>,
    return
  }
  func.func @transform_0(%arg0: i32, %arg1: i32) -> (i32, i32, i32, i32) {
    %c0_i32 = arith.constant 0 : i32
    %c0_i32_0 = arith.constant 0 : i32
    %c0_i32_1 = arith.constant 0 : i32
    return %arg0, %arg1, %c0_i32, %c0_i32_0 : i32, i32, i32, i32
  }
  func.func @transform_1(%arg0: i32, %arg1: i32) -> (i32, i32, i32, i32) {
    %c1_i32 = arith.constant 1 : i32
    %0 = arith.addi %arg1, %c1_i32 : i32
    %c0_i32 = arith.constant 0 : i32
    %c0_i32_0 = arith.constant 0 : i32
    %c0_i32_1 = arith.constant 0 : i32
    return %arg0, %0, %c0_i32, %c0_i32_0 : i32, i32, i32, i32
  }
  func.func @transform_2(%arg0: i32, %arg1: i32) -> (i32, i32, i32, i32) {
    %c0_i32 = arith.constant 0 : i32
    %c0_i32_0 = arith.constant 0 : i32
    %c0_i32_1 = arith.constant 0 : i32
    %c0_i32_2 = arith.constant 0 : i32
    %c0_i32_3 = arith.constant 0 : i32
    return %c0_i32, %c0_i32_0, %c0_i32_1, %c0_i32_2 : i32, i32, i32, i32
  }
  func.func @transform_3(%arg0: i32, %arg1: i32) -> (i32, i32, i32, i32) {
    %c0_i32 = arith.constant 0 : i32
    %c0_i32_0 = arith.constant 0 : i32
    %c0_i32_1 = arith.constant 0 : i32
    return %arg0, %arg1, %c0_i32, %c0_i32_0 : i32, i32, i32, i32
  }
  func.func @transform_4(%arg0: i32, %arg1: i32) -> (i32, i32, i32) {
    %c0_i32 = arith.constant 0 : i32
    %c0_i32_0 = arith.constant 0 : i32
    %c0_i32_1 = arith.constant 0 : i32
    return %arg0, %c0_i32, %c0_i32_0 : i32, i32, i32
  }
  func.func @transform_5(%arg0: i32, %arg1: i32) -> (i32, i32, i32) {
    %c0_i32 = arith.constant 0 : i32
    %c0_i32_0 = arith.constant 0 : i32
    %c0_i32_1 = arith.constant 0 : i32
    return %arg0, %c0_i32, %c0_i32_0 : i32, i32, i32
  }
}

</mosaic_0001>

<llo_original>
// kernel: conv_block_2_forward.9
$region0: #{conv_block_2_forward.9}
  #allocation0 [shape = 'u32[]', space=smem, size = 0x4, offset = 0x4, fixed_abs, tag = 'smem constant byte address 0x4 - core index']
  #allocation1 [shape = 'u32[144,128]{1,0:T(1,128)}', space=vmem, size = 0x12000, scoped, tag = 'internal scratch']
  %s0 = inlined_call_operand.vmem [shape: f32[2,15,8,15], index: 0, kind: input, shape index: {}]
  %s1 = inlined_call_operand.vmem [shape: f32[8,1], index: 1, kind: input, shape index: {}]
  %s2 = inlined_call_operand.vmem [shape: f32[8,1], index: 2, kind: input, shape index: {}]
  %s3 = inlined_call_operand.vmem [shape: f32[2,15,8,15], index: 3, kind: output, shape index: {}]
  %s4 = sld [smem:[#allocation0]]
  $region45: #{conv_block_2_forward.9} parent=0
    _
  %s6 = ssub.s32 1, %s4
  %s7 = scalar_select 0, %s6, %s4
  loop: start=0, step=1, limit=32
  $region2: #{conv_block_2_forward.9} parent=0 // loop_pre_header
    _
  $region3: #{conv_block_2_forward.9} parent=0 // loop_header
    %s9 = sphi 0, %s13
    %p10 = scmp.ge.s32.totalorder %s9, 32
    %s16 = sphi 0, %s28
    %s17 = sphi 0, %s24
    %s18 = sphi 0, %s16
    %s19 = sphi 0, %s17
    %s20 = sphi 0, %s18
    %s21 = sphi 0, %s19
    %s33 = sphi 0, %s35
    %s36 = sphi 0, %s33
    %s37 = sphi 0, %s36
    %s53 = sphi 0, %s37
    %s57 = sphi 0, %s57
    %s59 = sphi 0, %s57
    %s60 = sphi 0, %s59
    %s74 = sphi 0, %s60
    %s78 = sphi 0, %s78
    %s80 = sphi 0, %s78
    %s81 = sphi 0, %s80
    %s95 = sphi 0, %s81
    %s103 = sphi 0, %s105
    %s106 = sphi 0, %s103
    %s107 = sphi 0, %s106
    %s123 = sphi 0, %s107
  $region4: #{conv_block_2_forward.9} parent=0 // loop_header_branch
    %12 = sbr.rel (%p10) target = $region8
  $region5: #{conv_block_2_forward.9} parent=0 // loop_body
    %s14 = ssub.s32 %s9, 1
    %s15 = ssub.s32 %s9, 2
    %s22 = sadd.s32 1, %s17
    %p23 = scmp.ge.s32.totalorder %s22, 15
    %s24 = scalar_select %p23, 0, %s22
    %s25 = sadd.s32 1, %s16
    %s26 = scalar_select %p23, %s25, %s16
    %p27 = scmp.ge.s32.totalorder %s26, 2
    %s28 = scalar_select %p27, 0, %s26
    %s29 = ssub.s32 %s16, %s28
    %s30 = ssub.s32 %s17, %s24
    %s31 = sor.u32 %s29, %s30
    %p32 = scmp.eq.s32.totalorder %s31, 0
    %s34 = sadd.s32 %s33, 1
    %s35 = scalar_select %p32, %s33, %s34
    %p38 = pneg %p32
    %p39 = scmp.eq.s32.totalorder %s9, 29
    %p40 = por %p38, %p39
    %p41 = scmp.ne.s32.totalorder %s33, %s36
    %p42 = scmp.eq.s32.totalorder %s9, 0
    %p43 = por %p41, %p42
    %p44 = scmp.ne.s32.totalorder %s33, %s36
    %p45 = scmp.eq.s32.totalorder %s14, 29
    %p46 = por %p44, %p45
    %p47 = scmp.ne.s32.totalorder %s36, %s37
    %p48 = scmp.eq.s32.totalorder %s14, 0
    %p49 = por %p47, %p48
    %p50 = scmp.ne.s32.totalorder %s36, %s37
    %p51 = scmp.eq.s32.totalorder %s15, 29
    %p52 = por %p50, %p51
    %p54 = scmp.ne.s32.totalorder %s37, %s53
    %p55 = scmp.eq.s32.totalorder %s15, 0
    %p56 = por %p54, %p55
    %s58 = sadd.s32 %s57, 1
    %p61 = scmp.eq.s32.totalorder %s9, 29
    %p62 = scmp.ne.s32.totalorder %s57, %s59
    %p63 = scmp.eq.s32.totalorder %s9, 0
    %p64 = por %p62, %p63
    %p65 = scmp.ne.s32.totalorder %s57, %s59
    %p66 = scmp.eq.s32.totalorder %s14, 29
    %p67 = por %p65, %p66
    %p68 = scmp.ne.s32.totalorder %s59, %s60
    %p69 = scmp.eq.s32.totalorder %s14, 0
    %p70 = por %p68, %p69
    %p71 = scmp.ne.s32.totalorder %s59, %s60
    %p72 = scmp.eq.s32.totalorder %s15, 29
    %p73 = por %p71, %p72
    %p75 = scmp.ne.s32.totalorder %s60, %s74
    %p76 = scmp.eq.s32.totalorder %s15, 0
    %p77 = por %p75, %p76
    %s79 = sadd.s32 %s78, 1
    %p82 = scmp.eq.s32.totalorder %s9, 29
    %p83 = scmp.ne.s32.totalorder %s78, %s80
    %p84 = scmp.eq.s32.totalorder %s9, 0
    %p85 = por %p83, %p84
    %p86 = scmp.ne.s32.totalorder %s78, %s80
    %p87 = scmp.eq.s32.totalorder %s14, 29
    %p88 = por %p86, %p87
    %p89 = scmp.ne.s32.totalorder %s80, %s81
    %p90 = scmp.eq.s32.totalorder %s14, 0
    %p91 = por %p89, %p90
    %p92 = scmp.ne.s32.totalorder %s80, %s81
    %p93 = scmp.eq.s32.totalorder %s15, 29
    %p94 = por %p92, %p93
    %p96 = scmp.ne.s32.totalorder %s81, %s95
    %p97 = scmp.eq.s32.totalorder %s15, 0
    %p98 = por %p96, %p97
    %s99 = ssub.s32 %s16, %s28
    %s100 = ssub.s32 %s17, %s24
    %s101 = sor.u32 %s99, %s100
    %p102 = scmp.eq.s32.totalorder %s101, 0
    %s104 = sadd.s32 %s103, 1
    %s105 = scalar_select %p102, %s103, %s104
    %p108 = pneg %p102
    %p109 = scmp.eq.s32.totalorder %s9, 29
    %p110 = por %p108, %p109
    %p111 = scmp.ne.s32.totalorder %s103, %s106
    %p112 = scmp.eq.s32.totalorder %s9, 0
    %p113 = por %p111, %p112
    %p114 = scmp.ne.s32.totalorder %s103, %s106
    %p115 = scmp.eq.s32.totalorder %s14, 29
    %p116 = por %p114, %p115
    %p117 = scmp.ne.s32.totalorder %s106, %s107
    %p118 = scmp.eq.s32.totalorder %s14, 0
    %p119 = por %p117, %p118
    %p120 = scmp.ne.s32.totalorder %s106, %s107
    %p121 = scmp.eq.s32.totalorder %s15, 29
    %p122 = por %p120, %p121
    %p124 = scmp.ne.s32.totalorder %s107, %s123
    %p125 = scmp.eq.s32.totalorder %s15, 0
    %p126 = por %p124, %p125
    %p127 = scmp.le.s32.totalorder 1, %s9
    %p128 = scmp.lt.s32.totalorder %s9, 31
    %p129 = pnand %p127, %p128
    %p130 = pneg %p129
    // Predicated region
    $region9: #{conv_block_2_forward.9} parent=5 // pred_check
      _
    $region10: #{conv_block_2_forward.9} parent=5 // pred_check_branch
      %132 = sbr.rel (%p129) target = $region12
    $region11: #{conv_block_2_forward.9} parent=5 // pred_region
      %s133 = ssub.s32 %s9, 1
      // Predicated region
      $region13: #{conv_block_2_forward.9} parent=11 // pred_check
        %p134 = pneg %p70
      $region14: #{conv_block_2_forward.9} parent=11 // pred_check_branch
        %136 = sbr.rel (%p134) target = $region16
      $region15: #{conv_block_2_forward.9} parent=11 // pred_region
        _
      $region16: #{conv_block_2_forward.9} parent=11 // pred_fallthru
        _
      // Predicated region
      $region17: #{conv_block_2_forward.9} parent=11 // pred_check
        %p137 = pneg %p91
      $region18: #{conv_block_2_forward.9} parent=11 // pred_check_branch
        %139 = sbr.rel (%p137) target = $region20
      $region19: #{conv_block_2_forward.9} parent=11 // pred_region
        _
      $region20: #{conv_block_2_forward.9} parent=11 // pred_fallthru
        _
    $region12: #{conv_block_2_forward.9} parent=5 // pred_fallthru
      _
    %p140 = scmp.lt.s32.totalorder %s9, 30
    // Predicated region
    $region21: #{conv_block_2_forward.9} parent=5 // pred_check
      %p141 = pneg %p140
    $region22: #{conv_block_2_forward.9} parent=5 // pred_check_branch
      %143 = sbr.rel (%p141) target = $region24
    $region23: #{conv_block_2_forward.9} parent=5 // pred_region
      // Predicated region
      $region25: #{conv_block_2_forward.9} parent=23 // pred_check
        %p144 = pneg %p43
      $region26: #{conv_block_2_forward.9} parent=23 // pred_check_branch
        %146 = sbr.rel (%p144) target = $region28
      $region27: #{conv_block_2_forward.9} parent=23 // pred_region
        %p147 = scmp.lt.s32.totalorder %s16, 1
        %s148 = scalar_select %p147, %s16, 1
        %p149 = scmp.lt.s32.totalorder %s17, 14
        %s150 = scalar_select %p149, %s17, 14
        %s151 = smul.addr %s148, 15
        %s152 = sadd.s32 %s150, %s151
        %s153 = smul.addr %s152, 8
        %s154 = scalar_lea.vmem %s0, %s153
      $region28: #{conv_block_2_forward.9} parent=23 // pred_fallthru
        _
    $region24: #{conv_block_2_forward.9} parent=5 // pred_fallthru
      _
    %p155 = scmp.le.s32.totalorder 1, %s9
    %p156 = scmp.lt.s32.totalorder %s9, 31
    %p157 = pnand %p155, %p156
    %p158 = pneg %p157
    // Predicated region
    $region29: #{conv_block_2_forward.9} parent=5 // pred_check
      _
    $region30: #{conv_block_2_forward.9} parent=5 // pred_check_branch
      %160 = sbr.rel (%p157) target = $region32
    $region31: #{conv_block_2_forward.9} parent=5 // pred_region
      %s161 = ssub.s32 %s9, 1
      %p162 = scmp.lt.s32.totalorder %s18, 1
      %s163 = scalar_select %p162, %s18, 1
      %p164 = scmp.lt.s32.totalorder %s19, 14
      %s165 = scalar_select %p164, %s19, 14
      %s166 = smul.addr %s163, 15
      %s167 = sadd.s32 %s165, %s166
      %s168 = smul.addr %s167, 8
      %s169 = scalar_lea.vmem %s0, %s168
      %p170 = pneg %p49
      %p171 = pneg %p46
      %p172 = pneg %p70
      %p173 = pneg %p67
      %p174 = pneg %p91
      %p175 = pneg %p88
      %p176 = pneg %p119
      %p177 = pneg %p116
      %p178 = scmp.lt.s32.totalorder %s18, 1
      %s179 = scalar_select %p178, %s18, 1
      %p180 = scmp.lt.s32.totalorder %s19, 14
      %s181 = scalar_select %p180, %s19, 14
      %s182 = smul.addr %s179, 15
      %s183 = sadd.s32 %s181, %s182
      %s184 = smul.addr %s183, 8
      %s185 = scalar_lea.vmem %s3, %s184
      %p186 = scmp.lt.s32.totalorder %s18, 1
      %s187 = scalar_select %p186, %s18, 1
      %p188 = scmp.lt.s32.totalorder %s19, 14
      %s189 = scalar_select %p188, %s19, 14
      %s190 = smul.addr %s187, 15
      %s191 = sadd.s32 %s189, %s190
      %s192 = smul.addr %s191, 8
      %s193 = scalar_lea.vmem %s0, %s192
      %p194 = scmp.lt.s32.totalorder %s18, 1
      %s195 = scalar_select %p194, %s18, 1
      %p196 = scmp.lt.s32.totalorder %s19, 14
      %s197 = scalar_select %p196, %s19, 14
      %s198 = smul.addr %s195, 15
      %s199 = sadd.s32 %s197, %s198
      %s200 = smul.addr %s199, 8
      %s201 = scalar_lea.vmem %s3, %s200
      %v202 = vld [vmem:[%s193] sm:$0xff]
      %v203 = vld [vmem:[%s1] sm:$0xff]
      %205 = vset.pattern.permute.xlu0 0
      %206 = vperm.xlu0 %205, %v203
      %v207 = vpop.permute.xlu0 %206
      %v209 = vmul.f32 %v202, %v207
      %v210 = vld [vmem:[%s2] sm:$0xff]
      %212 = vset.pattern.permute.xlu0 0
      %213 = vperm.xlu0 %212, %v210
      %v214 = vpop.permute.xlu0 %213
      %v216 = vadd.f32 %v209, %v214
      %v217 = vmax.f32 %v216, 0.0
      %vm218 = vcmask 121856
      %219 = vst.msk [vmem:[%s201] sm:$0xff] %vm218, %v217
      %p220 = scmp.lt.s32.totalorder %s18, 1
      %s221 = scalar_select %p220, %s18, 1
      %p222 = scmp.lt.s32.totalorder %s19, 14
      %s223 = scalar_select %p222, %s19, 14
      %s224 = smul.addr %s221, 15
      %s225 = sadd.s32 %s223, %s224
      %s226 = smul.addr %s225, 8
      %s227 = scalar_lea.vmem %s3, %s226
      // Predicated region
      $region33: #{conv_block_2_forward.9} parent=31 // pred_check
        %p228 = pneg %p116
      $region34: #{conv_block_2_forward.9} parent=31 // pred_check_branch
        %230 = sbr.rel (%p228) target = $region36
      $region35: #{conv_block_2_forward.9} parent=31 // pred_region
        _
      $region36: #{conv_block_2_forward.9} parent=31 // pred_fallthru
        _
    $region32: #{conv_block_2_forward.9} parent=5 // pred_fallthru
      _
    %p231 = scmp.le.s32.totalorder 2, %s9
    // Predicated region
    $region37: #{conv_block_2_forward.9} parent=5 // pred_check
      %p232 = pneg %p231
    $region38: #{conv_block_2_forward.9} parent=5 // pred_check_branch
      %234 = sbr.rel (%p232) target = $region40
    $region39: #{conv_block_2_forward.9} parent=5 // pred_region
      %s235 = ssub.s32 %s9, 2
      // Predicated region
      $region41: #{conv_block_2_forward.9} parent=39 // pred_check
        %p236 = pneg %p122
      $region42: #{conv_block_2_forward.9} parent=39 // pred_check_branch
        %238 = sbr.rel (%p236) target = $region44
      $region43: #{conv_block_2_forward.9} parent=39 // pred_region
        %p239 = scmp.lt.s32.totalorder %s20, 1
        %s240 = scalar_select %p239, %s20, 1
        %p241 = scmp.lt.s32.totalorder %s21, 14
        %s242 = scalar_select %p241, %s21, 14
        %s243 = smul.addr %s240, 15
        %s244 = sadd.s32 %s242, %s243
        %s245 = smul.addr %s244, 8
        %s246 = scalar_lea.vmem %s3, %s245
      $region44: #{conv_block_2_forward.9} parent=39 // pred_fallthru
        _
    $region40: #{conv_block_2_forward.9} parent=5 // pred_fallthru
      _
  $region6: #{conv_block_2_forward.9} parent=0 // loop_footer
    %s13 = sadd.s32 1, %s9
  $region7: #{conv_block_2_forward.9} parent=0 // loop_footer_branch
    %8 = sbr.rel target = $region3
  $region8: #{conv_block_2_forward.9} parent=0 // loop_exit
    _

// kernel: conv_block_2_forward.8
$region0: #{conv_block_2_forward.8}
  #allocation0 [shape = 'u32[]', space=smem, size = 0x4, offset = 0x4, fixed_abs, tag = 'smem constant byte address 0x4 - core index']
  #allocation1 [shape = 'u32[144,128]{1,0:T(1,128)}', space=vmem, size = 0x12000, scoped, tag = 'internal scratch']
  %s0 = inlined_call_operand.vmem [shape: f32[2,16,4,16], index: 0, kind: input, shape index: {}, may-alias: {0,1}]
  %s1 = inlined_call_operand.vmem [shape: f32[2,16,4,16], index: 1, kind: input, shape index: {}, may-alias: {0,1}]
  %s2 = inlined_call_operand.vmem [shape: f32[2,2,8,4], index: 2, kind: input, shape index: {}]
  %s3 = inlined_call_operand.vmem [shape: f32[2,15,8,15], index: 3, kind: output, shape index: {0}]
  %s4 = inlined_call_operand.vmem [shape: f32[2,8,1], index: 4, kind: output, shape index: {1}]
  %s5 = inlined_call_operand.vmem [shape: f32[2,8,1], index: 5, kind: output, shape index: {2}]
  %6 = xla_tuple %s3, %s4, %s5
  %s7 = sld [smem:[#allocation0]]
  $region65: #{conv_block_2_forward.8} parent=0
    _
  %s9 = ssub.s32 1, %s7
  %s10 = scalar_select 0, %s9, %s7
  loop: start=0, step=1, limit=32
  $region2: #{conv_block_2_forward.8} parent=0 // loop_pre_header
    _
  $region3: #{conv_block_2_forward.8} parent=0 // loop_header
    %s12 = sphi 0, %s16
    %p13 = scmp.ge.s32.totalorder %s12, 32
    %s19 = sphi 0, %s31
    %s20 = sphi 0, %s27
    %s21 = sphi 0, %s19
    %s22 = sphi 0, %s20
    %s23 = sphi 0, %s21
    %s24 = sphi 0, %s22
    %s36 = sphi 0, %s38
    %s39 = sphi 0, %s36
    %s40 = sphi 0, %s39
    %s56 = sphi 0, %s40
    %s66 = sphi 0, %s68
    %s69 = sphi 0, %s66
    %s70 = sphi 0, %s69
    %s86 = sphi 0, %s70
    %s90 = sphi 0, %s90
    %s92 = sphi 0, %s90
    %s93 = sphi 0, %s92
    %s107 = sphi 0, %s93
    %s115 = sphi 0, %s117
    %s118 = sphi 0, %s115
    %s119 = sphi 0, %s118
    %s135 = sphi 0, %s119
    %s141 = sphi 0, %s143
    %s144 = sphi 0, %s141
    %s145 = sphi 0, %s144
    %s161 = sphi 0, %s145
    %s167 = sphi 0, %s169
    %s170 = sphi 0, %s167
    %s171 = sphi 0, %s170
    %s187 = sphi 0, %s171
  $region4: #{conv_block_2_forward.8} parent=0 // loop_header_branch
    %15 = sbr.rel (%p13) target = $region8
  $region5: #{conv_block_2_forward.8} parent=0 // loop_body
    %s17 = ssub.s32 %s12, 1
    %s18 = ssub.s32 %s12, 2
    %s25 = sadd.s32 1, %s20
    %p26 = scmp.ge.s32.totalorder %s25, 15
    %s27 = scalar_select %p26, 0, %s25
    %s28 = sadd.s32 1, %s19
    %s29 = scalar_select %p26, %s28, %s19
    %p30 = scmp.ge.s32.totalorder %s29, 2
    %s31 = scalar_select %p30, 0, %s29
    %s32 = ssub.s32 %s19, %s31
    %s33 = ssub.s32 %s20, %s27
    %s34 = sor.u32 %s32, %s33
    %p35 = scmp.eq.s32.totalorder %s34, 0
    %s37 = sadd.s32 %s36, 1
    %s38 = scalar_select %p35, %s36, %s37
    %p41 = pneg %p35
    %p42 = scmp.eq.s32.totalorder %s12, 29
    %p43 = por %p41, %p42
    %p44 = scmp.ne.s32.totalorder %s36, %s39
    %p45 = scmp.eq.s32.totalorder %s12, 0
    %p46 = por %p44, %p45
    %p47 = scmp.ne.s32.totalorder %s36, %s39
    %p48 = scmp.eq.s32.totalorder %s17, 29
    %p49 = por %p47, %p48
    %p50 = scmp.ne.s32.totalorder %s39, %s40
    %p51 = scmp.eq.s32.totalorder %s17, 0
    %p52 = por %p50, %p51
    %p53 = scmp.ne.s32.totalorder %s39, %s40
    %p54 = scmp.eq.s32.totalorder %s18, 29
    %p55 = por %p53, %p54
    %p57 = scmp.ne.s32.totalorder %s40, %s56
    %p58 = scmp.eq.s32.totalorder %s18, 0
    %p59 = por %p57, %p58
    %s60 = sadd.s32 %s20, 1
    %s61 = sadd.s32 %s27, 1
    %s62 = ssub.s32 %s19, %s31
    %s63 = ssub.s32 %s60, %s61
    %s64 = sor.u32 %s62, %s63
    %p65 = scmp.eq.s32.totalorder %s64, 0
    %s67 = sadd.s32 %s66, 1
    %s68 = scalar_select %p65, %s66, %s67
    %p71 = pneg %p65
    %p72 = scmp.eq.s32.totalorder %s12, 29
    %p73 = por %p71, %p72
    %p74 = scmp.ne.s32.totalorder %s66, %s69
    %p75 = scmp.eq.s32.totalorder %s12, 0
    %p76 = por %p74, %p75
    %p77 = scmp.ne.s32.totalorder %s66, %s69
    %p78 = scmp.eq.s32.totalorder %s17, 29
    %p79 = por %p77, %p78
    %p80 = scmp.ne.s32.totalorder %s69, %s70
    %p81 = scmp.eq.s32.totalorder %s17, 0
    %p82 = por %p80, %p81
    %p83 = scmp.ne.s32.totalorder %s69, %s70
    %p84 = scmp.eq.s32.totalorder %s18, 29
    %p85 = por %p83, %p84
    %p87 = scmp.ne.s32.totalorder %s70, %s86
    %p88 = scmp.eq.s32.totalorder %s18, 0
    %p89 = por %p87, %p88
    %s91 = sadd.s32 %s90, 1
    %p94 = scmp.eq.s32.totalorder %s12, 29
    %p95 = scmp.ne.s32.totalorder %s90, %s92
    %p96 = scmp.eq.s32.totalorder %s12, 0
    %p97 = por %p95, %p96
    %p98 = scmp.ne.s32.totalorder %s90, %s92
    %p99 = scmp.eq.s32.totalorder %s17, 29
    %p100 = por %p98, %p99
    %p101 = scmp.ne.s32.totalorder %s92, %s93
    %p102 = scmp.eq.s32.totalorder %s17, 0
    %p103 = por %p101, %p102
    %p104 = scmp.ne.s32.totalorder %s92, %s93
    %p105 = scmp.eq.s32.totalorder %s18, 29
    %p106 = por %p104, %p105
    %p108 = scmp.ne.s32.totalorder %s93, %s107
    %p109 = scmp.eq.s32.totalorder %s18, 0
    %p110 = por %p108, %p109
    %s111 = ssub.s32 %s19, %s31
    %s112 = ssub.s32 %s20, %s27
    %s113 = sor.u32 %s111, %s112
    %p114 = scmp.eq.s32.totalorder %s113, 0
    %s116 = sadd.s32 %s115, 1
    %s117 = scalar_select %p114, %s115, %s116
    %p120 = pneg %p114
    %p121 = scmp.eq.s32.totalorder %s12, 29
    %p122 = por %p120, %p121
    %p123 = scmp.ne.s32.totalorder %s115, %s118
    %p124 = scmp.eq.s32.totalorder %s12, 0
    %p125 = por %p123, %p124
    %p126 = scmp.ne.s32.totalorder %s115, %s118
    %p127 = scmp.eq.s32.totalorder %s17, 29
    %p128 = por %p126, %p127
    %p129 = scmp.ne.s32.totalorder %s118, %s119
    %p130 = scmp.eq.s32.totalorder %s17, 0
    %p131 = por %p129, %p130
    %p132 = scmp.ne.s32.totalorder %s118, %s119
    %p133 = scmp.eq.s32.totalorder %s18, 29
    %p134 = por %p132, %p133
    %p136 = scmp.ne.s32.totalorder %s119, %s135
    %p137 = scmp.eq.s32.totalorder %s18, 0
    %p138 = por %p136, %p137
    %s139 = ssub.s32 %s19, %s31
    %p140 = scmp.eq.s32.totalorder %s139, 0
    %s142 = sadd.s32 %s141, 1
    %s143 = scalar_select %p140, %s141, %s142
    %p146 = pneg %p140
    %p147 = scmp.eq.s32.totalorder %s12, 29
    %p148 = por %p146, %p147
    %p149 = scmp.ne.s32.totalorder %s141, %s144
    %p150 = scmp.eq.s32.totalorder %s12, 0
    %p151 = por %p149, %p150
    %p152 = scmp.ne.s32.totalorder %s141, %s144
    %p153 = scmp.eq.s32.totalorder %s17, 29
    %p154 = por %p152, %p153
    %p155 = scmp.ne.s32.totalorder %s144, %s145
    %p156 = scmp.eq.s32.totalorder %s17, 0
    %p157 = por %p155, %p156
    %p158 = scmp.ne.s32.totalorder %s144, %s145
    %p159 = scmp.eq.s32.totalorder %s18, 29
    %p160 = por %p158, %p159
    %p162 = scmp.ne.s32.totalorder %s145, %s161
    %p163 = scmp.eq.s32.totalorder %s18, 0
    %p164 = por %p162, %p163
    %s165 = ssub.s32 %s19, %s31
    %p166 = scmp.eq.s32.totalorder %s165, 0
    %s168 = sadd.s32 %s167, 1
    %s169 = scalar_select %p166, %s167, %s168
    %p172 = pneg %p166
    %p173 = scmp.eq.s32.totalorder %s12, 29
    %p174 = por %p172, %p173
    %p175 = scmp.ne.s32.totalorder %s167, %s170
    %p176 = scmp.eq.s32.totalorder %s12, 0
    %p177 = por %p175, %p176
    %p178 = scmp.ne.s32.totalorder %s167, %s170
    %p179 = scmp.eq.s32.totalorder %s17, 29
    %p180 = por %p178, %p179
    %p181 = scmp.ne.s32.totalorder %s170, %s171
    %p182 = scmp.eq.s32.totalorder %s17, 0
    %p183 = por %p181, %p182
    %p184 = scmp.ne.s32.totalorder %s170, %s171
    %p185 = scmp.eq.s32.totalorder %s18, 29
    %p186 = por %p184, %p185
    %p188 = scmp.ne.s32.totalorder %s171, %s187
    %p189 = scmp.eq.s32.totalorder %s18, 0
    %p190 = por %p188, %p189
    %p191 = scmp.le.s32.totalorder 1, %s12
    %p192 = scmp.lt.s32.totalorder %s12, 31
    %p193 = pnand %p191, %p192
    %p194 = pneg %p193
    // Predicated region
    $region9: #{conv_block_2_forward.8} parent=5 // pred_check
      _
    $region10: #{conv_block_2_forward.8} parent=5 // pred_check_branch
      %196 = sbr.rel (%p193) target = $region12
    $region11: #{conv_block_2_forward.8} parent=5 // pred_region
      %s197 = ssub.s32 %s12, 1
      // Predicated region
      $region13: #{conv_block_2_forward.8} parent=11 // pred_check
        %p198 = pneg %p103
      $region14: #{conv_block_2_forward.8} parent=11 // pred_check_branch
        %200 = sbr.rel (%p198) target = $region16
      $region15: #{conv_block_2_forward.8} parent=11 // pred_region
        _
      $region16: #{conv_block_2_forward.8} parent=11 // pred_fallthru
        _
    $region12: #{conv_block_2_forward.8} parent=5 // pred_fallthru
      _
    %p201 = scmp.lt.s32.totalorder %s12, 30
    // Predicated region
    $region17: #{conv_block_2_forward.8} parent=5 // pred_check
      %p202 = pneg %p201
    $region18: #{conv_block_2_forward.8} parent=5 // pred_check_branch
      %204 = sbr.rel (%p202) target = $region20
    $region19: #{conv_block_2_forward.8} parent=5 // pred_region
      // Predicated region
      $region21: #{conv_block_2_forward.8} parent=19 // pred_check
        %p205 = pneg %p46
      $region22: #{conv_block_2_forward.8} parent=19 // pred_check_branch
        %207 = sbr.rel (%p205) target = $region24
      $region23: #{conv_block_2_forward.8} parent=19 // pred_region
        %p208 = scmp.lt.s32.totalorder %s19, 1
        %s209 = scalar_select %p208, %s19, 1
        %p210 = scmp.lt.s32.totalorder %s20, 15
        %s211 = scalar_select %p210, %s20, 15
        %s212 = smul.addr %s209, 16
        %s213 = sadd.s32 %s211, %s212
        %s214 = smul.addr %s213, 4
        %s215 = scalar_lea.vmem %s0, %s214
      $region24: #{conv_block_2_forward.8} parent=19 // pred_fallthru
        _
      // Predicated region
      $region25: #{conv_block_2_forward.8} parent=19 // pred_check
        %p216 = pneg %p76
      $region26: #{conv_block_2_forward.8} parent=19 // pred_check_branch
        %218 = sbr.rel (%p216) target = $region28
      $region27: #{conv_block_2_forward.8} parent=19 // pred_region
        %s219 = sadd.s32 %s20, 1
        %p220 = scmp.lt.s32.totalorder %s19, 1
        %s221 = scalar_select %p220, %s19, 1
        %p222 = scmp.lt.s32.totalorder %s219, 15
        %s223 = scalar_select %p222, %s219, 15
        %s224 = smul.addr %s221, 16
        %s225 = sadd.s32 %s223, %s224
        %s226 = smul.addr %s225, 4
        %s227 = scalar_lea.vmem %s1, %s226
        %s228 = sadd.s32 %s20, 1
      $region28: #{conv_block_2_forward.8} parent=19 // pred_fallthru
        _
    $region20: #{conv_block_2_forward.8} parent=5 // pred_fallthru
      _
    %p229 = scmp.le.s32.totalorder 1, %s12
    %p230 = scmp.lt.s32.totalorder %s12, 31
    %p231 = pnand %p229, %p230
    %p232 = pneg %p231
    // Predicated region
    $region29: #{conv_block_2_forward.8} parent=5 // pred_check
      _
    $region30: #{conv_block_2_forward.8} parent=5 // pred_check_branch
      %234 = sbr.rel (%p231) target = $region32
    $region31: #{conv_block_2_forward.8} parent=5 // pred_region
      %s235 = ssub.s32 %s12, 1
      %p236 = scmp.lt.s32.totalorder %s21, 1
      %s237 = scalar_select %p236, %s21, 1
      %p238 = scmp.lt.s32.totalorder %s22, 15
      %s239 = scalar_select %p238, %s22, 15
      %s240 = smul.addr %s237, 16
      %s241 = sadd.s32 %s239, %s240
      %s242 = smul.addr %s241, 4
      %s243 = scalar_lea.vmem %s0, %s242
      %p244 = pneg %p52
      %p245 = pneg %p49
      %s246 = sadd.s32 %s22, 1
      %p247 = scmp.lt.s32.totalorder %s21, 1
      %s248 = scalar_select %p247, %s21, 1
      %p249 = scmp.lt.s32.totalorder %s246, 15
      %s250 = scalar_select %p249, %s246, 15
      %s251 = smul.addr %s248, 16
      %s252 = sadd.s32 %s250, %s251
      %s253 = smul.addr %s252, 4
      %s254 = scalar_lea.vmem %s1, %s253
      %p255 = pneg %p82
      %p256 = pneg %p79
      %p257 = pneg %p103
      %p258 = pneg %p100
      %p259 = pneg %p131
      %p260 = pneg %p128
      %p261 = scmp.lt.s32.totalorder %s21, 1
      %s262 = scalar_select %p261, %s21, 1
      %p263 = scmp.lt.s32.totalorder %s22, 14
      %s264 = scalar_select %p263, %s22, 14
      %s265 = smul.addr %s262, 15
      %s266 = sadd.s32 %s264, %s265
      %s267 = smul.addr %s266, 8
      %s268 = scalar_lea.vmem %s3, %s267
      %p269 = pneg %p157
      %p270 = pneg %p154
      %p271 = scmp.lt.s32.totalorder %s21, 1
      %s272 = scalar_select %p271, %s21, 1
      %s273 = smul.addr %s272, 8
      %s274 = scalar_lea.vmem %s4, %s273
      %p275 = pneg %p183
      %p276 = pneg %p180
      %p277 = scmp.lt.s32.totalorder %s21, 1
      %s278 = scalar_select %p277, %s21, 1
      %s279 = smul.addr %s278, 8
      %s280 = scalar_lea.vmem %s5, %s279
      %p281 = scmp.lt.s32.totalorder %s21, 1
      %s282 = scalar_select %p281, %s21, 1
      %p283 = scmp.lt.s32.totalorder %s22, 15
      %s284 = scalar_select %p283, %s22, 15
      %s285 = smul.addr %s282, 16
      %s286 = sadd.s32 %s284, %s285
      %s287 = smul.addr %s286, 4
      %s288 = scalar_lea.vmem %s0, %s287
      %s289 = sadd.s32 %s22, 1
      %p290 = scmp.lt.s32.totalorder %s21, 1
      %s291 = scalar_select %p290, %s21, 1
      %p292 = scmp.lt.s32.totalorder %s289, 15
      %s293 = scalar_select %p292, %s289, 15
      %s294 = smul.addr %s291, 16
      %s295 = sadd.s32 %s293, %s294
      %s296 = smul.addr %s295, 4
      %s297 = scalar_lea.vmem %s1, %s296
      %s298 = sadd.s32 %s22, 1
      %p299 = scmp.lt.s32.totalorder %s21, 1
      %s300 = scalar_select %p299, %s21, 1
      %p301 = scmp.lt.s32.totalorder %s22, 14
      %s302 = scalar_select %p301, %s22, 14
      %s303 = smul.addr %s300, 15
      %s304 = sadd.s32 %s302, %s303
      %s305 = smul.addr %s304, 8
      %s306 = scalar_lea.vmem %s3, %s305
      %p307 = scmp.lt.s32.totalorder %s21, 1
      %s308 = scalar_select %p307, %s21, 1
      %s309 = smul.addr %s308, 8
      %s310 = scalar_lea.vmem %s4, %s309
      %p311 = scmp.lt.s32.totalorder %s21, 1
      %s312 = scalar_select %p311, %s21, 1
      %s313 = smul.addr %s312, 8
      %s314 = scalar_lea.vmem %s5, %s313
      %p315 = scmp.eq.s32.totalorder %s22, 0
      // Predicated region
      $region33: #{conv_block_2_forward.8} parent=31 // pred_check
        %p316 = pneg %p315
      $region34: #{conv_block_2_forward.8} parent=31 // pred_check_branch
        %318 = sbr.rel (%p316) target = $region36
      $region35: #{conv_block_2_forward.8} parent=31 // pred_region
        %vm319 = vcmask 7168
        %320 = vst.msk [vmem:[%s310] sm:$0xff] %vm319, 0.0
        %321 = vst.msk [vmem:[%s314] sm:$0xff] %vm319, 0.0
      $region36: #{conv_block_2_forward.8} parent=31 // pred_fallthru
        _
      %v322 = vld [vmem:[%s288] sm:$0xf]
      %v323 = vld [vmem:[%s297] sm:$0xf]
      %v324 = vld [vmem:[%s2] sm:$0xff]
      %s325 = scalar_lea.vmem %s2, 8
      %v326 = vld [vmem:[%s325] sm:$0xff]
      %328 = vrot.lane.b32.xlu0 %v322, 127
      %v329 = vpop.permute.xlu0 %328
      %vm330 = vcmask 31744
      %v332 = vsel %vm330, %v326, 0
      %vm334 = vcmask 1043456
      %v335 = vsel %vm334, %v329, 0
      %337 = vmatprep.subr.mxu0 0.0
      %338 = vmatpush1.msra.mxu0 %v335
      %339 = vmatprep.subr.mxu0 0.0
      %340 = vmatpush1.msra.mxu0 0.0
      %341 = vmatprep.subr.mxu0 0.0
      %342 = vmatpush1.msra.mxu0 0.0
      %343 = vmatprep.subr.mxu0 0.0
      %344 = vmatpush1.msra.mxu0 0.0
      %345 = vmatprep.subr.mxu0 0.0
      %346 = vmatpush1.msra.mxu0 0.0
      %347 = vmatprep.subr.mxu0 0.0
      %348 = vmatpush1.msra.mxu0 0.0
      %349 = vmatprep.subr.mxu0 0.0
      %350 = vmatpush1.msra.mxu0 0.0
      %351 = vmatprep.subr.mxu0 0.0
      %352 = vmatpush1.msra.mxu0 0.0
      %353 = vmatprep.subr.mxu0 0.0
      %354 = vmatpush1.msra.mxu0 0.0
      %355 = vmatprep.subr.mxu0 0.0
      %356 = vmatpush1.msra.mxu0 0.0
      %357 = vmatprep.subr.mxu0 0.0
      %358 = vmatpush1.msra.mxu0 0.0
      %359 = vmatprep.subr.mxu0 0.0
      %360 = vmatpush1.msra.mxu0 0.0
      %361 = vmatprep.subr.mxu0 0.0
      %362 = vmatpush1.msra.mxu0 0.0
      %363 = vmatprep.subr.mxu0 0.0
      %364 = vmatpush1.msra.mxu0 0.0
      %365 = vmatprep.subr.mxu0 0.0
      %366 = vmatpush1.msra.mxu0 0.0
      %367 = vmatprep.subr.mxu0 0.0
      %368 = vmatpush1.msra.mxu0 0.0
      %369 = vmatprep.subr.mxu0 0.0
      %370 = vmatpush1.msra.mxu0 0.0
      %371 = vmatprep.subr.mxu0 0.0
      %372 = vmatpush1.msra.mxu0 0.0
      %373 = vmatprep.subr.mxu0 0.0
      %374 = vmatpush1.msra.mxu0 0.0
      %375 = vmatprep.subr.mxu0 0.0
      %376 = vmatpush1.msra.mxu0 0.0
      %377 = vmatprep.subr.mxu0 0.0
      %378 = vmatpush1.msra.mxu0 0.0
      %379 = vmatprep.subr.mxu0 0.0
      %380 = vmatpush1.msra.mxu0 0.0
      %381 = vmatprep.subr.mxu0 0.0
      %382 = vmatpush1.msra.mxu0 0.0
      %383 = vmatprep.subr.mxu0 0.0
      %384 = vmatpush1.msra.mxu0 0.0
      %385 = vmatprep.subr.mxu0 0.0
      %386 = vmatpush1.msra.mxu0 0.0
      %387 = vmatprep.subr.mxu0 0.0
      %388 = vmatpush1.msra.mxu0 0.0
      %389 = vmatprep.subr.mxu0 0.0
      %390 = vmatpush1.msra.mxu0 0.0
      %391 = vmatprep.subr.mxu0 0.0
      %392 = vmatpush1.msra.mxu0 0.0
      %393 = vmatprep.subr.mxu0 0.0
      %394 = vmatpush1.msra.mxu0 0.0
      %395 = vmatprep.subr.mxu0 0.0
      %396 = vmatpush1.msra.mxu0 0.0
      %397 = vmatprep.subr.mxu0 0.0
      %398 = vmatpush1.msra.mxu0 0.0
      %399 = vmatprep.subr.mxu0 0.0
      %400 = vmatpush1.msra.mxu0 0.0
      %401 = vmatprep.mubr.f32.mxu0 0.0
      %402 = vmatmul.mubr.f32.gmra.mrb[0].mxu0 %v332
      %v403 = vpop.f32.mrb[0].mxu0
      %v404 = vadd.f32 0.0, %v403
      %v405 = vpop.f32.mrb[0].mxu0
      %406 = vdwg.mxu0
      %v408 = vsel %vm330, %v324, 0
      %v410 = vsel %vm334, %v322, 0
      %412 = vmatprep.subr.mxu0 0.0
      %413 = vmatpush1.msra.mxu0 %v410
      %414 = vmatprep.subr.mxu0 0.0
      %415 = vmatpush1.msra.mxu0 0.0
      %416 = vmatprep.subr.mxu0 0.0
      %417 = vmatpush1.msra.mxu0 0.0
      %418 = vmatprep.subr.mxu0 0.0
      %419 = vmatpush1.msra.mxu0 0.0
      %420 = vmatprep.subr.mxu0 0.0
      %421 = vmatpush1.msra.mxu0 0.0
      %422 = vmatprep.subr.mxu0 0.0
      %423 = vmatpush1.msra.mxu0 0.0
      %424 = vmatprep.subr.mxu0 0.0
      %425 = vmatpush1.msra.mxu0 0.0
      %426 = vmatprep.subr.mxu0 0.0
      %427 = vmatpush1.msra.mxu0 0.0
      %428 = vmatprep.subr.mxu0 0.0
      %429 = vmatpush1.msra.mxu0 0.0
      %430 = vmatprep.subr.mxu0 0.0
      %431 = vmatpush1.msra.mxu0 0.0
      %432 = vmatprep.subr.mxu0 0.0
      %433 = vmatpush1.msra.mxu0 0.0
      %434 = vmatprep.subr.mxu0 0.0
      %435 = vmatpush1.msra.mxu0 0.0
      %436 = vmatprep.subr.mxu0 0.0
      %437 = vmatpush1.msra.mxu0 0.0
      %438 = vmatprep.subr.mxu0 0.0
      %439 = vmatpush1.msra.mxu0 0.0
      %440 = vmatprep.subr.mxu0 0.0
      %441 = vmatpush1.msra.mxu0 0.0
      %442 = vmatprep.subr.mxu0 0.0
      %443 = vmatpush1.msra.mxu0 0.0
      %444 = vmatprep.subr.mxu0 0.0
      %445 = vmatpush1.msra.mxu0 0.0
      %446 = vmatprep.subr.mxu0 0.0
      %447 = vmatpush1.msra.mxu0 0.0
      %448 = vmatprep.subr.mxu0 0.0
      %449 = vmatpush1.msra.mxu0 0.0
      %450 = vmatprep.subr.mxu0 0.0
      %451 = vmatpush1.msra.mxu0 0.0
      %452 = vmatprep.subr.mxu0 0.0
      %453 = vmatpush1.msra.mxu0 0.0
      %454 = vmatprep.subr.mxu0 0.0
      %455 = vmatpush1.msra.mxu0 0.0
      %456 = vmatprep.subr.mxu0 0.0
      %457 = vmatpush1.msra.mxu0 0.0
      %458 = vmatprep.subr.mxu0 0.0
      %459 = vmatpush1.msra.mxu0 0.0
      %460 = vmatprep.subr.mxu0 0.0
      %461 = vmatpush1.msra.mxu0 0.0
      %462 = vmatprep.subr.mxu0 0.0
      %463 = vmatpush1.msra.mxu0 0.0
      %464 = vmatprep.subr.mxu0 0.0
      %465 = vmatpush1.msra.mxu0 0.0
      %466 = vmatprep.subr.mxu0 0.0
      %467 = vmatpush1.msra.mxu0 0.0
      %468 = vmatprep.subr.mxu0 0.0
      %469 = vmatpush1.msra.mxu0 0.0
      %470 = vmatprep.subr.mxu0 0.0
      %471 = vmatpush1.msra.mxu0 0.0
      %472 = vmatprep.subr.mxu0 0.0
      %473 = vmatpush1.msra.mxu0 0.0
      %474 = vmatprep.subr.mxu0 0.0
      %475 = vmatpush1.msra.mxu0 0.0
      %476 = vmatprep.mubr.f32.mxu0 0.0
      %477 = vmatmul.mubr.f32.gmra.mrb[0].mxu0 %v408
      %v478 = vpop.f32.mrb[0].mxu0
      %v479 = vadd.f32 %v404, %v478
      %v480 = vpop.f32.mrb[0].mxu0
      %481 = vdwg.mxu0
      %s482 = scalar_lea.vmem %s2, 16
      %v483 = vld [vmem:[%s482] sm:$0xff]
      %v485 = vsel %vm330, %v483, 0
      %v488 = vsel %vm334, %v323, 0
      %490 = vmatprep.subr.mxu0 0.0
      %491 = vmatpush1.msra.mxu0 %v488
      %492 = vmatprep.subr.mxu0 0.0
      %493 = vmatpush1.msra.mxu0 0.0
      %494 = vmatprep.subr.mxu0 0.0
      %495 = vmatpush1.msra.mxu0 0.0
      %496 = vmatprep.subr.mxu0 0.0
      %497 = vmatpush1.msra.mxu0 0.0
      %498 = vmatprep.subr.mxu0 0.0
      %499 = vmatpush1.msra.mxu0 0.0
      %500 = vmatprep.subr.mxu0 0.0
      %501 = vmatpush1.msra.mxu0 0.0
      %502 = vmatprep.subr.mxu0 0.0
      %503 = vmatpush1.msra.mxu0 0.0
      %504 = vmatprep.subr.mxu0 0.0
      %505 = vmatpush1.msra.mxu0 0.0
      %506 = vmatprep.subr.mxu0 0.0
      %507 = vmatpush1.msra.mxu0 0.0
      %508 = vmatprep.subr.mxu0 0.0
      %509 = vmatpush1.msra.mxu0 0.0
      %510 = vmatprep.subr.mxu0 0.0
      %511 = vmatpush1.msra.mxu0 0.0
      %512 = vmatprep.subr.mxu0 0.0
      %513 = vmatpush1.msra.mxu0 0.0
      %514 = vmatprep.subr.mxu0 0.0
      %515 = vmatpush1.msra.mxu0 0.0
      %516 = vmatprep.subr.mxu0 0.0
      %517 = vmatpush1.msra.mxu0 0.0
      %518 = vmatprep.subr.mxu0 0.0
      %519 = vmatpush1.msra.mxu0 0.0
      %520 = vmatprep.subr.mxu0 0.0
      %521 = vmatpush1.msra.mxu0 0.0
      %522 = vmatprep.subr.mxu0 0.0
      %523 = vmatpush1.msra.mxu0 0.0
      %524 = vmatprep.subr.mxu0 0.0
      %525 = vmatpush1.msra.mxu0 0.0
      %526 = vmatprep.subr.mxu0 0.0
      %527 = vmatpush1.msra.mxu0 0.0
      %528 = vmatprep.subr.mxu0 0.0
      %529 = vmatpush1.msra.mxu0 0.0
      %530 = vmatprep.subr.mxu0 0.0
      %531 = vmatpush1.msra.mxu0 0.0
      %532 = vmatprep.subr.mxu0 0.0
      %533 = vmatpush1.msra.mxu0 0.0
      %534 = vmatprep.subr.mxu0 0.0
      %535 = vmatpush1.msra.mxu0 0.0
      %536 = vmatprep.subr.mxu0 0.0
      %537 = vmatpush1.msra.mxu0 0.0
      %538 = vmatprep.subr.mxu0 0.0
      %539 = vmatpush1.msra.mxu0 0.0
      %540 = vmatprep.subr.mxu0 0.0
      %541 = vmatpush1.msra.mxu0 0.0
      %542 = vmatprep.subr.mxu0 0.0
      %543 = vmatpush1.msra.mxu0 0.0
      %544 = vmatprep.subr.mxu0 0.0
      %545 = vmatpush1.msra.mxu0 0.0
      %546 = vmatprep.subr.mxu0 0.0
      %547 = vmatpush1.msra.mxu0 0.0
      %548 = vmatprep.subr.mxu0 0.0
      %549 = vmatpush1.msra.mxu0 0.0
      %550 = vmatprep.subr.mxu0 0.0
      %551 = vmatpush1.msra.mxu0 0.0
      %552 = vmatprep.subr.mxu0 0.0
      %553 = vmatpush1.msra.mxu0 0.0
      %554 = vmatprep.mubr.f32.mxu0 0.0
      %555 = vmatmul.mubr.f32.gmra.mrb[0].mxu0 %v485
      %v556 = vpop.f32.mrb[0].mxu0
      %v557 = vadd.f32 0.0, %v556
      %v558 = vpop.f32.mrb[0].mxu0
      %559 = vdwg.mxu0
      %v560 = vadd.f32 %v479, %v557
      %s561 = scalar_lea.vmem %s2, 24
      %v562 = vld [vmem:[%s561] sm:$0xff]
      %563 = vrot.lane.b32.xlu0 %v323, 127
      %v564 = vpop.permute.xlu0 %563
      %v566 = vsel %vm330, %v562, 0
      %v568 = vsel %vm334, %v564, 0
      %570 = vmatprep.subr.mxu0 0.0
      %571 = vmatpush1.msra.mxu0 %v568
      %572 = vmatprep.subr.mxu0 0.0
      %573 = vmatpush1.msra.mxu0 0.0
      %574 = vmatprep.subr.mxu0 0.0
      %575 = vmatpush1.msra.mxu0 0.0
      %576 = vmatprep.subr.mxu0 0.0
      %577 = vmatpush1.msra.mxu0 0.0
      %578 = vmatprep.subr.mxu0 0.0
      %579 = vmatpush1.msra.mxu0 0.0
      %580 = vmatprep.subr.mxu0 0.0
      %581 = vmatpush1.msra.mxu0 0.0
      %582 = vmatprep.subr.mxu0 0.0
      %583 = vmatpush1.msra.mxu0 0.0
      %584 = vmatprep.subr.mxu0 0.0
      %585 = vmatpush1.msra.mxu0 0.0
      %586 = vmatprep.subr.mxu0 0.0
      %587 = vmatpush1.msra.mxu0 0.0
      %588 = vmatprep.subr.mxu0 0.0
      %589 = vmatpush1.msra.mxu0 0.0
      %590 = vmatprep.subr.mxu0 0.0
      %591 = vmatpush1.msra.mxu0 0.0
      %592 = vmatprep.subr.mxu0 0.0
      %593 = vmatpush1.msra.mxu0 0.0
      %594 = vmatprep.subr.mxu0 0.0
      %595 = vmatpush1.msra.mxu0 0.0
      %596 = vmatprep.subr.mxu0 0.0
      %597 = vmatpush1.msra.mxu0 0.0
      %598 = vmatprep.subr.mxu0 0.0
      %599 = vmatpush1.msra.mxu0 0.0
      %600 = vmatprep.subr.mxu0 0.0
      %601 = vmatpush1.msra.mxu0 0.0
      %602 = vmatprep.subr.mxu0 0.0
      %603 = vmatpush1.msra.mxu0 0.0
      %604 = vmatprep.subr.mxu0 0.0
      %605 = vmatpush1.msra.mxu0 0.0
      %606 = vmatprep.subr.mxu0 0.0
      %607 = vmatpush1.msra.mxu0 0.0
      %608 = vmatprep.subr.mxu0 0.0
      %609 = vmatpush1.msra.mxu0 0.0
      %610 = vmatprep.subr.mxu0 0.0
      %611 = vmatpush1.msra.mxu0 0.0
      %612 = vmatprep.subr.mxu0 0.0
      %613 = vmatpush1.msra.mxu0 0.0
      %614 = vmatprep.subr.mxu0 0.0
      %615 = vmatpush1.msra.mxu0 0.0
      %616 = vmatprep.subr.mxu0 0.0
      %617 = vmatpush1.msra.mxu0 0.0
      %618 = vmatprep.subr.mxu0 0.0
      %619 = vmatpush1.msra.mxu0 0.0
      %620 = vmatprep.subr.mxu0 0.0
      %621 = vmatpush1.msra.mxu0 0.0
      %622 = vmatprep.subr.mxu0 0.0
      %623 = vmatpush1.msra.mxu0 0.0
      %624 = vmatprep.subr.mxu0 0.0
      %625 = vmatpush1.msra.mxu0 0.0
      %626 = vmatprep.subr.mxu0 0.0
      %627 = vmatpush1.msra.mxu0 0.0
      %628 = vmatprep.subr.mxu0 0.0
      %629 = vmatpush1.msra.mxu0 0.0
      %630 = vmatprep.subr.mxu0 0.0
      %631 = vmatpush1.msra.mxu0 0.0
      %632 = vmatprep.subr.mxu0 0.0
      %633 = vmatpush1.msra.mxu0 0.0
      %634 = vmatprep.mubr.f32.mxu0 0.0
      %635 = vmatmul.mubr.f32.gmra.mrb[0].mxu0 %v566
      %v636 = vpop.f32.mrb[0].mxu0
      %v637 = vadd.f32 0.0, %v636
      %v638 = vpop.f32.mrb[0].mxu0
      %639 = vdwg.mxu0
      %v640 = vadd.f32 %v560, %v637
      %vm641 = vcmask 121856
      %642 = vst.msk [vmem:[%s306] sm:$0xff] %vm641, %v640
      %v643 = vld [vmem:[%s310] sm:$0xff]
      %v644 = vsel %vm641, %v640, 0.0
      %645 = vadd.xlane.f32.xlu0 %v644
      %v646 = vpop.xlane.xlu0 %645
      %v647 = vadd.f32 %v643, %v646
      %vm648 = vcmask 7168
      %649 = vst.msk [vmem:[%s310] sm:$0xff] %vm648, %v647
      %v650 = vld [vmem:[%s314] sm:$0xff]
      %v651 = vmul.f32 %v640, %v640
      %v652 = vsel %vm641, %v651, 0.0
      %653 = vadd.xlane.f32.xlu0 %v652
      %v654 = vpop.xlane.xlu0 %653
      %v655 = vadd.f32 %v650, %v654
      %656 = vst.msk [vmem:[%s314] sm:$0xff] %vm648, %v655
      %p657 = scmp.lt.s32.totalorder %s21, 1
      %s658 = scalar_select %p657, %s21, 1
      %p659 = scmp.lt.s32.totalorder %s22, 14
      %s660 = scalar_select %p659, %s22, 14
      %s661 = smul.addr %s658, 15
      %s662 = sadd.s32 %s660, %s661
      %s663 = smul.addr %s662, 8
      %s664 = scalar_lea.vmem %s3, %s663
      %p665 = scmp.lt.s32.totalorder %s21, 1
      %s666 = scalar_select %p665, %s21, 1
      %s667 = smul.addr %s666, 8
      %s668 = scalar_lea.vmem %s4, %s667
      %p669 = scmp.lt.s32.totalorder %s21, 1
      %s670 = scalar_select %p669, %s21, 1
      %s671 = smul.addr %s670, 8
      %s672 = scalar_lea.vmem %s5, %s671
      // Predicated region
      $region37: #{conv_block_2_forward.8} parent=31 // pred_check
        %p673 = pneg %p128
      $region38: #{conv_block_2_forward.8} parent=31 // pred_check_branch
        %675 = sbr.rel (%p673) target = $region40
      $region39: #{conv_block_2_forward.8} parent=31 // pred_region
        _
      $region40: #{conv_block_2_forward.8} parent=31 // pred_fallthru
        _
      // Predicated region
      $region41: #{conv_block_2_forward.8} parent=31 // pred_check
        %p676 = pneg %p154
      $region42: #{conv_block_2_forward.8} parent=31 // pred_check_branch
        %678 = sbr.rel (%p676) target = $region44
      $region43: #{conv_block_2_forward.8} parent=31 // pred_region
        _
      $region44: #{conv_block_2_forward.8} parent=31 // pred_fallthru
        _
      // Predicated region
      $region45: #{conv_block_2_forward.8} parent=31 // pred_check
        %p679 = pneg %p180
      $region46: #{conv_block_2_forward.8} parent=31 // pred_check_branch
        %681 = sbr.rel (%p679) target = $region48
      $region47: #{conv_block_2_forward.8} parent=31 // pred_region
        _
      $region48: #{conv_block_2_forward.8} parent=31 // pred_fallthru
        _
    $region32: #{conv_block_2_forward.8} parent=5 // pred_fallthru
      _
    %p682 = scmp.le.s32.totalorder 2, %s12
    // Predicated region
    $region49: #{conv_block_2_forward.8} parent=5 // pred_check
      %p683 = pneg %p682
    $region50: #{conv_block_2_forward.8} parent=5 // pred_check_branch
      %685 = sbr.rel (%p683) target = $region52
    $region51: #{conv_block_2_forward.8} parent=5 // pred_region
      %s686 = ssub.s32 %s12, 2
      // Predicated region
      $region53: #{conv_block_2_forward.8} parent=51 // pred_check
        %p687 = pneg %p134
      $region54: #{conv_block_2_forward.8} parent=51 // pred_check_branch
        %689 = sbr.rel (%p687) target = $region56
      $region55: #{conv_block_2_forward.8} parent=51 // pred_region
        %p690 = scmp.lt.s32.totalorder %s23, 1
        %s691 = scalar_select %p690, %s23, 1
        %p692 = scmp.lt.s32.totalorder %s24, 14
        %s693 = scalar_select %p692, %s24, 14
        %s694 = smul.addr %s691, 15
        %s695 = sadd.s32 %s693, %s694
        %s696 = smul.addr %s695, 8
        %s697 = scalar_lea.vmem %s3, %s696
      $region56: #{conv_block_2_forward.8} parent=51 // pred_fallthru
        _
      // Predicated region
      $region57: #{conv_block_2_forward.8} parent=51 // pred_check
        %p698 = pneg %p160
      $region58: #{conv_block_2_forward.8} parent=51 // pred_check_branch
        %700 = sbr.rel (%p698) target = $region60
      $region59: #{conv_block_2_forward.8} parent=51 // pred_region
        %p701 = scmp.lt.s32.totalorder %s23, 1
        %s702 = scalar_select %p701, %s23, 1
        %s703 = smul.addr %s702, 8
        %s704 = scalar_lea.vmem %s4, %s703
      $region60: #{conv_block_2_forward.8} parent=51 // pred_fallthru
        _
      // Predicated region
      $region61: #{conv_block_2_forward.8} parent=51 // pred_check
        %p705 = pneg %p186
      $region62: #{conv_block_2_forward.8} parent=51 // pred_check_branch
        %707 = sbr.rel (%p705) target = $region64
      $region63: #{conv_block_2_forward.8} parent=51 // pred_region
        %p708 = scmp.lt.s32.totalorder %s23, 1
        %s709 = scalar_select %p708, %s23, 1
        %s710 = smul.addr %s709, 8
        %s711 = scalar_lea.vmem %s5, %s710
      $region64: #{conv_block_2_forward.8} parent=51 // pred_fallthru
        _
    $region52: #{conv_block_2_forward.8} parent=5 // pred_fallthru
      _
  $region6: #{conv_block_2_forward.8} parent=0 // loop_footer
    %s16 = sadd.s32 1, %s12
  $region7: #{conv_block_2_forward.8} parent=0 // loop_footer_branch
    %11 = sbr.rel target = $region3
  $region8: #{conv_block_2_forward.8} parent=0 // loop_exit
    _

// kernel: conv_block_2_forward.11
$region0: #{conv_block_2_forward.11}
  #allocation0 [shape = 'u32[]', space=smem, size = 0x4, offset = 0x4, fixed_abs, tag = 'smem constant byte address 0x4 - core index']
  #allocation1 [shape = 'u32[144,128]{1,0:T(1,128)}', space=vmem, size = 0x12000, scoped, tag = 'internal scratch']
  %s0 = inlined_call_operand.vmem [shape: f32[2,16,8,16], index: 0, kind: input, shape index: {}]
  %s1 = inlined_call_operand.vmem [shape: f32[8,1], index: 1, kind: input, shape index: {}]
  %s2 = inlined_call_operand.vmem [shape: f32[8,1], index: 2, kind: input, shape index: {}]
  %s3 = inlined_call_operand.vmem [shape: f32[2,16,8,16], index: 3, kind: output, shape index: {}]
  %s4 = sld [smem:[#allocation0]]
  $region45: #{conv_block_2_forward.11} parent=0
    _
  %s6 = ssub.s32 1, %s4
  %s7 = scalar_select 0, %s6, %s4
  loop: start=0, step=1, limit=34
  $region2: #{conv_block_2_forward.11} parent=0 // loop_pre_header
    _
  $region3: #{conv_block_2_forward.11} parent=0 // loop_header
    %s9 = sphi 0, %s13
    %p10 = scmp.ge.s32.totalorder %s9, 34
    %s16 = sphi 0, %s28
    %s17 = sphi 0, %s24
    %s18 = sphi 0, %s16
    %s19 = sphi 0, %s17
    %s20 = sphi 0, %s18
    %s21 = sphi 0, %s19
    %s33 = sphi 0, %s35
    %s36 = sphi 0, %s33
    %s37 = sphi 0, %s36
    %s53 = sphi 0, %s37
    %s57 = sphi 0, %s57
    %s59 = sphi 0, %s57
    %s60 = sphi 0, %s59
    %s74 = sphi 0, %s60
    %s78 = sphi 0, %s78
    %s80 = sphi 0, %s78
    %s81 = sphi 0, %s80
    %s95 = sphi 0, %s81
    %s103 = sphi 0, %s105
    %s106 = sphi 0, %s103
    %s107 = sphi 0, %s106
    %s123 = sphi 0, %s107
  $region4: #{conv_block_2_forward.11} parent=0 // loop_header_branch
    %12 = sbr.rel (%p10) target = $region8
  $region5: #{conv_block_2_forward.11} parent=0 // loop_body
    %s14 = ssub.s32 %s9, 1
    %s15 = ssub.s32 %s9, 2
    %s22 = sadd.s32 1, %s17
    %p23 = scmp.ge.s32.totalorder %s22, 16
    %s24 = scalar_select %p23, 0, %s22
    %s25 = sadd.s32 1, %s16
    %s26 = scalar_select %p23, %s25, %s16
    %p27 = scmp.ge.s32.totalorder %s26, 2
    %s28 = scalar_select %p27, 0, %s26
    %s29 = ssub.s32 %s16, %s28
    %s30 = ssub.s32 %s17, %s24
    %s31 = sor.u32 %s29, %s30
    %p32 = scmp.eq.s32.totalorder %s31, 0
    %s34 = sadd.s32 %s33, 1
    %s35 = scalar_select %p32, %s33, %s34
    %p38 = pneg %p32
    %p39 = scmp.eq.s32.totalorder %s9, 31
    %p40 = por %p38, %p39
    %p41 = scmp.ne.s32.totalorder %s33, %s36
    %p42 = scmp.eq.s32.totalorder %s9, 0
    %p43 = por %p41, %p42
    %p44 = scmp.ne.s32.totalorder %s33, %s36
    %p45 = scmp.eq.s32.totalorder %s14, 31
    %p46 = por %p44, %p45
    %p47 = scmp.ne.s32.totalorder %s36, %s37
    %p48 = scmp.eq.s32.totalorder %s14, 0
    %p49 = por %p47, %p48
    %p50 = scmp.ne.s32.totalorder %s36, %s37
    %p51 = scmp.eq.s32.totalorder %s15, 31
    %p52 = por %p50, %p51
    %p54 = scmp.ne.s32.totalorder %s37, %s53
    %p55 = scmp.eq.s32.totalorder %s15, 0
    %p56 = por %p54, %p55
    %s58 = sadd.s32 %s57, 1
    %p61 = scmp.eq.s32.totalorder %s9, 31
    %p62 = scmp.ne.s32.totalorder %s57, %s59
    %p63 = scmp.eq.s32.totalorder %s9, 0
    %p64 = por %p62, %p63
    %p65 = scmp.ne.s32.totalorder %s57, %s59
    %p66 = scmp.eq.s32.totalorder %s14, 31
    %p67 = por %p65, %p66
    %p68 = scmp.ne.s32.totalorder %s59, %s60
    %p69 = scmp.eq.s32.totalorder %s14, 0
    %p70 = por %p68, %p69
    %p71 = scmp.ne.s32.totalorder %s59, %s60
    %p72 = scmp.eq.s32.totalorder %s15, 31
    %p73 = por %p71, %p72
    %p75 = scmp.ne.s32.totalorder %s60, %s74
    %p76 = scmp.eq.s32.totalorder %s15, 0
    %p77 = por %p75, %p76
    %s79 = sadd.s32 %s78, 1
    %p82 = scmp.eq.s32.totalorder %s9, 31
    %p83 = scmp.ne.s32.totalorder %s78, %s80
    %p84 = scmp.eq.s32.totalorder %s9, 0
    %p85 = por %p83, %p84
    %p86 = scmp.ne.s32.totalorder %s78, %s80
    %p87 = scmp.eq.s32.totalorder %s14, 31
    %p88 = por %p86, %p87
    %p89 = scmp.ne.s32.totalorder %s80, %s81
    %p90 = scmp.eq.s32.totalorder %s14, 0
    %p91 = por %p89, %p90
    %p92 = scmp.ne.s32.totalorder %s80, %s81
    %p93 = scmp.eq.s32.totalorder %s15, 31
    %p94 = por %p92, %p93
    %p96 = scmp.ne.s32.totalorder %s81, %s95
    %p97 = scmp.eq.s32.totalorder %s15, 0
    %p98 = por %p96, %p97
    %s99 = ssub.s32 %s16, %s28
    %s100 = ssub.s32 %s17, %s24
    %s101 = sor.u32 %s99, %s100
    %p102 = scmp.eq.s32.totalorder %s101, 0
    %s104 = sadd.s32 %s103, 1
    %s105 = scalar_select %p102, %s103, %s104
    %p108 = pneg %p102
    %p109 = scmp.eq.s32.totalorder %s9, 31
    %p110 = por %p108, %p109
    %p111 = scmp.ne.s32.totalorder %s103, %s106
    %p112 = scmp.eq.s32.totalorder %s9, 0
    %p113 = por %p111, %p112
    %p114 = scmp.ne.s32.totalorder %s103, %s106
    %p115 = scmp.eq.s32.totalorder %s14, 31
    %p116 = por %p114, %p115
    %p117 = scmp.ne.s32.totalorder %s106, %s107
    %p118 = scmp.eq.s32.totalorder %s14, 0
    %p119 = por %p117, %p118
    %p120 = scmp.ne.s32.totalorder %s106, %s107
    %p121 = scmp.eq.s32.totalorder %s15, 31
    %p122 = por %p120, %p121
    %p124 = scmp.ne.s32.totalorder %s107, %s123
    %p125 = scmp.eq.s32.totalorder %s15, 0
    %p126 = por %p124, %p125
    %p127 = scmp.le.s32.totalorder 1, %s9
    %p128 = scmp.lt.s32.totalorder %s9, 33
    %p129 = pnand %p127, %p128
    %p130 = pneg %p129
    // Predicated region
    $region9: #{conv_block_2_forward.11} parent=5 // pred_check
      _
    $region10: #{conv_block_2_forward.11} parent=5 // pred_check_branch
      %132 = sbr.rel (%p129) target = $region12
    $region11: #{conv_block_2_forward.11} parent=5 // pred_region
      %s133 = ssub.s32 %s9, 1
      // Predicated region
      $region13: #{conv_block_2_forward.11} parent=11 // pred_check
        %p134 = pneg %p70
      $region14: #{conv_block_2_forward.11} parent=11 // pred_check_branch
        %136 = sbr.rel (%p134) target = $region16
      $region15: #{conv_block_2_forward.11} parent=11 // pred_region
        _
      $region16: #{conv_block_2_forward.11} parent=11 // pred_fallthru
        _
      // Predicated region
      $region17: #{conv_block_2_forward.11} parent=11 // pred_check
        %p137 = pneg %p91
      $region18: #{conv_block_2_forward.11} parent=11 // pred_check_branch
        %139 = sbr.rel (%p137) target = $region20
      $region19: #{conv_block_2_forward.11} parent=11 // pred_region
        _
      $region20: #{conv_block_2_forward.11} parent=11 // pred_fallthru
        _
    $region12: #{conv_block_2_forward.11} parent=5 // pred_fallthru
      _
    %p140 = scmp.lt.s32.totalorder %s9, 32
    // Predicated region
    $region21: #{conv_block_2_forward.11} parent=5 // pred_check
      %p141 = pneg %p140
    $region22: #{conv_block_2_forward.11} parent=5 // pred_check_branch
      %143 = sbr.rel (%p141) target = $region24
    $region23: #{conv_block_2_forward.11} parent=5 // pred_region
      // Predicated region
      $region25: #{conv_block_2_forward.11} parent=23 // pred_check
        %p144 = pneg %p43
      $region26: #{conv_block_2_forward.11} parent=23 // pred_check_branch
        %146 = sbr.rel (%p144) target = $region28
      $region27: #{conv_block_2_forward.11} parent=23 // pred_region
        %p147 = scmp.lt.s32.totalorder %s16, 1
        %s148 = scalar_select %p147, %s16, 1
        %p149 = scmp.lt.s32.totalorder %s17, 15
        %s150 = scalar_select %p149, %s17, 15
        %s151 = smul.addr %s148, 16
        %s152 = sadd.s32 %s150, %s151
        %s153 = smul.addr %s152, 8
        %s154 = scalar_lea.vmem %s0, %s153
      $region28: #{conv_block_2_forward.11} parent=23 // pred_fallthru
        _
    $region24: #{conv_block_2_forward.11} parent=5 // pred_fallthru
      _
    %p155 = scmp.le.s32.totalorder 1, %s9
    %p156 = scmp.lt.s32.totalorder %s9, 33
    %p157 = pnand %p155, %p156
    %p158 = pneg %p157
    // Predicated region
    $region29: #{conv_block_2_forward.11} parent=5 // pred_check
      _
    $region30: #{conv_block_2_forward.11} parent=5 // pred_check_branch
      %160 = sbr.rel (%p157) target = $region32
    $region31: #{conv_block_2_forward.11} parent=5 // pred_region
      %s161 = ssub.s32 %s9, 1
      %p162 = scmp.lt.s32.totalorder %s18, 1
      %s163 = scalar_select %p162, %s18, 1
      %p164 = scmp.lt.s32.totalorder %s19, 15
      %s165 = scalar_select %p164, %s19, 15
      %s166 = smul.addr %s163, 16
      %s167 = sadd.s32 %s165, %s166
      %s168 = smul.addr %s167, 8
      %s169 = scalar_lea.vmem %s0, %s168
      %p170 = pneg %p49
      %p171 = pneg %p46
      %p172 = pneg %p70
      %p173 = pneg %p67
      %p174 = pneg %p91
      %p175 = pneg %p88
      %p176 = pneg %p119
      %p177 = pneg %p116
      %p178 = scmp.lt.s32.totalorder %s18, 1
      %s179 = scalar_select %p178, %s18, 1
      %p180 = scmp.lt.s32.totalorder %s19, 15
      %s181 = scalar_select %p180, %s19, 15
      %s182 = smul.addr %s179, 16
      %s183 = sadd.s32 %s181, %s182
      %s184 = smul.addr %s183, 8
      %s185 = scalar_lea.vmem %s3, %s184
      %p186 = scmp.lt.s32.totalorder %s18, 1
      %s187 = scalar_select %p186, %s18, 1
      %p188 = scmp.lt.s32.totalorder %s19, 15
      %s189 = scalar_select %p188, %s19, 15
      %s190 = smul.addr %s187, 16
      %s191 = sadd.s32 %s189, %s190
      %s192 = smul.addr %s191, 8
      %s193 = scalar_lea.vmem %s0, %s192
      %p194 = scmp.lt.s32.totalorder %s18, 1
      %s195 = scalar_select %p194, %s18, 1
      %p196 = scmp.lt.s32.totalorder %s19, 15
      %s197 = scalar_select %p196, %s19, 15
      %s198 = smul.addr %s195, 16
      %s199 = sadd.s32 %s197, %s198
      %s200 = smul.addr %s199, 8
      %s201 = scalar_lea.vmem %s3, %s200
      %v202 = vld [vmem:[%s193] sm:$0xff]
      %v203 = vld [vmem:[%s1] sm:$0xff]
      %205 = vset.pattern.permute.xlu0 0
      %206 = vperm.xlu0 %205, %v203
      %v207 = vpop.permute.xlu0 %206
      %v209 = vmul.f32 %v202, %v207
      %v210 = vld [vmem:[%s2] sm:$0xff]
      %212 = vset.pattern.permute.xlu0 0
      %213 = vperm.xlu0 %212, %v210
      %v214 = vpop.permute.xlu0 %213
      %v216 = vadd.f32 %v209, %v214
      %v217 = vmax.f32 %v216, 0.0
      %vm218 = vcmask 130048
      %219 = vst.msk [vmem:[%s201] sm:$0xff] %vm218, %v217
      %p220 = scmp.lt.s32.totalorder %s18, 1
      %s221 = scalar_select %p220, %s18, 1
      %p222 = scmp.lt.s32.totalorder %s19, 15
      %s223 = scalar_select %p222, %s19, 15
      %s224 = smul.addr %s221, 16
      %s225 = sadd.s32 %s223, %s224
      %s226 = smul.addr %s225, 8
      %s227 = scalar_lea.vmem %s3, %s226
      // Predicated region
      $region33: #{conv_block_2_forward.11} parent=31 // pred_check
        %p228 = pneg %p116
      $region34: #{conv_block_2_forward.11} parent=31 // pred_check_branch
        %230 = sbr.rel (%p228) target = $region36
      $region35: #{conv_block_2_forward.11} parent=31 // pred_region
        _
      $region36: #{conv_block_2_forward.11} parent=31 // pred_fallthru
        _
    $region32: #{conv_block_2_forward.11} parent=5 // pred_fallthru
      _
    %p231 = scmp.le.s32.totalorder 2, %s9
    // Predicated region
    $region37: #{conv_block_2_forward.11} parent=5 // pred_check
      %p232 = pneg %p231
    $region38: #{conv_block_2_forward.11} parent=5 // pred_check_branch
      %234 = sbr.rel (%p232) target = $region40
    $region39: #{conv_block_2_forward.11} parent=5 // pred_region
      %s235 = ssub.s32 %s9, 2
      // Predicated region
      $region41: #{conv_block_2_forward.11} parent=39 // pred_check
        %p236 = pneg %p122
      $region42: #{conv_block_2_forward.11} parent=39 // pred_check_branch
        %238 = sbr.rel (%p236) target = $region44
      $region43: #{conv_block_2_forward.11} parent=39 // pred_region
        %p239 = scmp.lt.s32.totalorder %s20, 1
        %s240 = scalar_select %p239, %s20, 1
        %p241 = scmp.lt.s32.totalorder %s21, 15
        %s242 = scalar_select %p241, %s21, 15
        %s243 = smul.addr %s240, 16
        %s244 = sadd.s32 %s242, %s243
        %s245 = smul.addr %s244, 8
        %s246 = scalar_lea.vmem %s3, %s245
      $region44: #{conv_block_2_forward.11} parent=39 // pred_fallthru
        _
    $region40: #{conv_block_2_forward.11} parent=5 // pred_fallthru
      _
  $region6: #{conv_block_2_forward.11} parent=0 // loop_footer
    %s13 = sadd.s32 1, %s9
  $region7: #{conv_block_2_forward.11} parent=0 // loop_footer_branch
    %8 = sbr.rel target = $region3
  $region8: #{conv_block_2_forward.11} parent=0 // loop_exit
    _

// kernel: conv_block_2_forward.10
$region0: #{conv_block_2_forward.10}
  #allocation0 [shape = 'u32[]', space=smem, size = 0x4, offset = 0x4, fixed_abs, tag = 'smem constant byte address 0x4 - core index']
  #allocation1 [shape = 'u32[144,128]{1,0:T(1,128)}', space=vmem, size = 0x12000, scoped, tag = 'internal scratch']
  %s0 = inlined_call_operand.vmem [shape: f32[2,17,8,17], index: 0, kind: input, shape index: {}, may-alias: {0,1}]
  %s1 = inlined_call_operand.vmem [shape: f32[2,17,8,17], index: 1, kind: input, shape index: {}, may-alias: {0,1}]
  %s2 = inlined_call_operand.vmem [shape: f32[2,2,8,8], index: 2, kind: input, shape index: {}]
  %s3 = inlined_call_operand.vmem [shape: f32[2,16,8,16], index: 3, kind: output, shape index: {0}]
  %s4 = inlined_call_operand.vmem [shape: f32[2,8,1], index: 4, kind: output, shape index: {1}]
  %s5 = inlined_call_operand.vmem [shape: f32[2,8,1], index: 5, kind: output, shape index: {2}]
  %6 = xla_tuple %s3, %s4, %s5
  %s7 = sld [smem:[#allocation0]]
  $region65: #{conv_block_2_forward.10} parent=0
    _
  %s9 = ssub.s32 1, %s7
  %s10 = scalar_select 0, %s9, %s7
  loop: start=0, step=1, limit=34
  $region2: #{conv_block_2_forward.10} parent=0 // loop_pre_header
    _
  $region3: #{conv_block_2_forward.10} parent=0 // loop_header
    %s12 = sphi 0, %s16
    %p13 = scmp.ge.s32.totalorder %s12, 34
    %s19 = sphi 0, %s31
    %s20 = sphi 0, %s27
    %s21 = sphi 0, %s19
    %s22 = sphi 0, %s20
    %s23 = sphi 0, %s21
    %s24 = sphi 0, %s22
    %s36 = sphi 0, %s38
    %s39 = sphi 0, %s36
    %s40 = sphi 0, %s39
    %s56 = sphi 0, %s40
    %s66 = sphi 0, %s68
    %s69 = sphi 0, %s66
    %s70 = sphi 0, %s69
    %s86 = sphi 0, %s70
    %s90 = sphi 0, %s90
    %s92 = sphi 0, %s90
    %s93 = sphi 0, %s92
    %s107 = sphi 0, %s93
    %s115 = sphi 0, %s117
    %s118 = sphi 0, %s115
    %s119 = sphi 0, %s118
    %s135 = sphi 0, %s119
    %s141 = sphi 0, %s143
    %s144 = sphi 0, %s141
    %s145 = sphi 0, %s144
    %s161 = sphi 0, %s145
    %s167 = sphi 0, %s169
    %s170 = sphi 0, %s167
    %s171 = sphi 0, %s170
    %s187 = sphi 0, %s171
  $region4: #{conv_block_2_forward.10} parent=0 // loop_header_branch
    %15 = sbr.rel (%p13) target = $region8
  $region5: #{conv_block_2_forward.10} parent=0 // loop_body
    %s17 = ssub.s32 %s12, 1
    %s18 = ssub.s32 %s12, 2
    %s25 = sadd.s32 1, %s20
    %p26 = scmp.ge.s32.totalorder %s25, 16
    %s27 = scalar_select %p26, 0, %s25
    %s28 = sadd.s32 1, %s19
    %s29 = scalar_select %p26, %s28, %s19
    %p30 = scmp.ge.s32.totalorder %s29, 2
    %s31 = scalar_select %p30, 0, %s29
    %s32 = ssub.s32 %s19, %s31
    %s33 = ssub.s32 %s20, %s27
    %s34 = sor.u32 %s32, %s33
    %p35 = scmp.eq.s32.totalorder %s34, 0
    %s37 = sadd.s32 %s36, 1
    %s38 = scalar_select %p35, %s36, %s37
    %p41 = pneg %p35
    %p42 = scmp.eq.s32.totalorder %s12, 31
    %p43 = por %p41, %p42
    %p44 = scmp.ne.s32.totalorder %s36, %s39
    %p45 = scmp.eq.s32.totalorder %s12, 0
    %p46 = por %p44, %p45
    %p47 = scmp.ne.s32.totalorder %s36, %s39
    %p48 = scmp.eq.s32.totalorder %s17, 31
    %p49 = por %p47, %p48
    %p50 = scmp.ne.s32.totalorder %s39, %s40
    %p51 = scmp.eq.s32.totalorder %s17, 0
    %p52 = por %p50, %p51
    %p53 = scmp.ne.s32.totalorder %s39, %s40
    %p54 = scmp.eq.s32.totalorder %s18, 31
    %p55 = por %p53, %p54
    %p57 = scmp.ne.s32.totalorder %s40, %s56
    %p58 = scmp.eq.s32.totalorder %s18, 0
    %p59 = por %p57, %p58
    %s60 = sadd.s32 %s20, 1
    %s61 = sadd.s32 %s27, 1
    %s62 = ssub.s32 %s19, %s31
    %s63 = ssub.s32 %s60, %s61
    %s64 = sor.u32 %s62, %s63
    %p65 = scmp.eq.s32.totalorder %s64, 0
    %s67 = sadd.s32 %s66, 1
    %s68 = scalar_select %p65, %s66, %s67
    %p71 = pneg %p65
    %p72 = scmp.eq.s32.totalorder %s12, 31
    %p73 = por %p71, %p72
    %p74 = scmp.ne.s32.totalorder %s66, %s69
    %p75 = scmp.eq.s32.totalorder %s12, 0
    %p76 = por %p74, %p75
    %p77 = scmp.ne.s32.totalorder %s66, %s69
    %p78 = scmp.eq.s32.totalorder %s17, 31
    %p79 = por %p77, %p78
    %p80 = scmp.ne.s32.totalorder %s69, %s70
    %p81 = scmp.eq.s32.totalorder %s17, 0
    %p82 = por %p80, %p81
    %p83 = scmp.ne.s32.totalorder %s69, %s70
    %p84 = scmp.eq.s32.totalorder %s18, 31
    %p85 = por %p83, %p84
    %p87 = scmp.ne.s32.totalorder %s70, %s86
    %p88 = scmp.eq.s32.totalorder %s18, 0
    %p89 = por %p87, %p88
    %s91 = sadd.s32 %s90, 1
    %p94 = scmp.eq.s32.totalorder %s12, 31
    %p95 = scmp.ne.s32.totalorder %s90, %s92
    %p96 = scmp.eq.s32.totalorder %s12, 0
    %p97 = por %p95, %p96
    %p98 = scmp.ne.s32.totalorder %s90, %s92
    %p99 = scmp.eq.s32.totalorder %s17, 31
    %p100 = por %p98, %p99
    %p101 = scmp.ne.s32.totalorder %s92, %s93
    %p102 = scmp.eq.s32.totalorder %s17, 0
    %p103 = por %p101, %p102
    %p104 = scmp.ne.s32.totalorder %s92, %s93
    %p105 = scmp.eq.s32.totalorder %s18, 31
    %p106 = por %p104, %p105
    %p108 = scmp.ne.s32.totalorder %s93, %s107
    %p109 = scmp.eq.s32.totalorder %s18, 0
    %p110 = por %p108, %p109
    %s111 = ssub.s32 %s19, %s31
    %s112 = ssub.s32 %s20, %s27
    %s113 = sor.u32 %s111, %s112
    %p114 = scmp.eq.s32.totalorder %s113, 0
    %s116 = sadd.s32 %s115, 1
    %s117 = scalar_select %p114, %s115, %s116
    %p120 = pneg %p114
    %p121 = scmp.eq.s32.totalorder %s12, 31
    %p122 = por %p120, %p121
    %p123 = scmp.ne.s32.totalorder %s115, %s118
    %p124 = scmp.eq.s32.totalorder %s12, 0
    %p125 = por %p123, %p124
    %p126 = scmp.ne.s32.totalorder %s115, %s118
    %p127 = scmp.eq.s32.totalorder %s17, 31
    %p128 = por %p126, %p127
    %p129 = scmp.ne.s32.totalorder %s118, %s119
    %p130 = scmp.eq.s32.totalorder %s17, 0
    %p131 = por %p129, %p130
    %p132 = scmp.ne.s32.totalorder %s118, %s119
    %p133 = scmp.eq.s32.totalorder %s18, 31
    %p134 = por %p132, %p133
    %p136 = scmp.ne.s32.totalorder %s119, %s135
    %p137 = scmp.eq.s32.totalorder %s18, 0
    %p138 = por %p136, %p137
    %s139 = ssub.s32 %s19, %s31
    %p140 = scmp.eq.s32.totalorder %s139, 0
    %s142 = sadd.s32 %s141, 1
    %s143 = scalar_select %p140, %s141, %s142
    %p146 = pneg %p140
    %p147 = scmp.eq.s32.totalorder %s12, 31
    %p148 = por %p146, %p147
    %p149 = scmp.ne.s32.totalorder %s141, %s144
    %p150 = scmp.eq.s32.totalorder %s12, 0
    %p151 = por %p149, %p150
    %p152 = scmp.ne.s32.totalorder %s141, %s144
    %p153 = scmp.eq.s32.totalorder %s17, 31
    %p154 = por %p152, %p153
    %p155 = scmp.ne.s32.totalorder %s144, %s145
    %p156 = scmp.eq.s32.totalorder %s17, 0
    %p157 = por %p155, %p156
    %p158 = scmp.ne.s32.totalorder %s144, %s145
    %p159 = scmp.eq.s32.totalorder %s18, 31
    %p160 = por %p158, %p159
    %p162 = scmp.ne.s32.totalorder %s145, %s161
    %p163 = scmp.eq.s32.totalorder %s18, 0
    %p164 = por %p162, %p163
    %s165 = ssub.s32 %s19, %s31
    %p166 = scmp.eq.s32.totalorder %s165, 0
    %s168 = sadd.s32 %s167, 1
    %s169 = scalar_select %p166, %s167, %s168
    %p172 = pneg %p166
    %p173 = scmp.eq.s32.totalorder %s12, 31
    %p174 = por %p172, %p173
    %p175 = scmp.ne.s32.totalorder %s167, %s170
    %p176 = scmp.eq.s32.totalorder %s12, 0
    %p177 = por %p175, %p176
    %p178 = scmp.ne.s32.totalorder %s167, %s170
    %p179 = scmp.eq.s32.totalorder %s17, 31
    %p180 = por %p178, %p179
    %p181 = scmp.ne.s32.totalorder %s170, %s171
    %p182 = scmp.eq.s32.totalorder %s17, 0
    %p183 = por %p181, %p182
    %p184 = scmp.ne.s32.totalorder %s170, %s171
    %p185 = scmp.eq.s32.totalorder %s18, 31
    %p186 = por %p184, %p185
    %p188 = scmp.ne.s32.totalorder %s171, %s187
    %p189 = scmp.eq.s32.totalorder %s18, 0
    %p190 = por %p188, %p189
    %p191 = scmp.le.s32.totalorder 1, %s12
    %p192 = scmp.lt.s32.totalorder %s12, 33
    %p193 = pnand %p191, %p192
    %p194 = pneg %p193
    // Predicated region
    $region9: #{conv_block_2_forward.10} parent=5 // pred_check
      _
    $region10: #{conv_block_2_forward.10} parent=5 // pred_check_branch
      %196 = sbr.rel (%p193) target = $region12
    $region11: #{conv_block_2_forward.10} parent=5 // pred_region
      %s197 = ssub.s32 %s12, 1
      // Predicated region
      $region13: #{conv_block_2_forward.10} parent=11 // pred_check
        %p198 = pneg %p103
      $region14: #{conv_block_2_forward.10} parent=11 // pred_check_branch
        %200 = sbr.rel (%p198) target = $region16
      $region15: #{conv_block_2_forward.10} parent=11 // pred_region
        _
      $region16: #{conv_block_2_forward.10} parent=11 // pred_fallthru
        _
    $region12: #{conv_block_2_forward.10} parent=5 // pred_fallthru
      _
    %p201 = scmp.lt.s32.totalorder %s12, 32
    // Predicated region
    $region17: #{conv_block_2_forward.10} parent=5 // pred_check
      %p202 = pneg %p201
    $region18: #{conv_block_2_forward.10} parent=5 // pred_check_branch
      %204 = sbr.rel (%p202) target = $region20
    $region19: #{conv_block_2_forward.10} parent=5 // pred_region
      // Predicated region
      $region21: #{conv_block_2_forward.10} parent=19 // pred_check
        %p205 = pneg %p46
      $region22: #{conv_block_2_forward.10} parent=19 // pred_check_branch
        %207 = sbr.rel (%p205) target = $region24
      $region23: #{conv_block_2_forward.10} parent=19 // pred_region
        %p208 = scmp.lt.s32.totalorder %s19, 1
        %s209 = scalar_select %p208, %s19, 1
        %p210 = scmp.lt.s32.totalorder %s20, 16
        %s211 = scalar_select %p210, %s20, 16
        %s212 = smul.addr %s209, 17
        %s213 = sadd.s32 %s211, %s212
        %s214 = smul.addr %s213, 8
        %s215 = scalar_lea.vmem %s0, %s214
      $region24: #{conv_block_2_forward.10} parent=19 // pred_fallthru
        _
      // Predicated region
      $region25: #{conv_block_2_forward.10} parent=19 // pred_check
        %p216 = pneg %p76
      $region26: #{conv_block_2_forward.10} parent=19 // pred_check_branch
        %218 = sbr.rel (%p216) target = $region28
      $region27: #{conv_block_2_forward.10} parent=19 // pred_region
        %s219 = sadd.s32 %s20, 1
        %p220 = scmp.lt.s32.totalorder %s19, 1
        %s221 = scalar_select %p220, %s19, 1
        %p222 = scmp.lt.s32.totalorder %s219, 16
        %s223 = scalar_select %p222, %s219, 16
        %s224 = smul.addr %s221, 17
        %s225 = sadd.s32 %s223, %s224
        %s226 = smul.addr %s225, 8
        %s227 = scalar_lea.vmem %s1, %s226
        %s228 = sadd.s32 %s20, 1
      $region28: #{conv_block_2_forward.10} parent=19 // pred_fallthru
        _
    $region20: #{conv_block_2_forward.10} parent=5 // pred_fallthru
      _
    %p229 = scmp.le.s32.totalorder 1, %s12
    %p230 = scmp.lt.s32.totalorder %s12, 33
    %p231 = pnand %p229, %p230
    %p232 = pneg %p231
    // Predicated region
    $region29: #{conv_block_2_forward.10} parent=5 // pred_check
      _
    $region30: #{conv_block_2_forward.10} parent=5 // pred_check_branch
      %234 = sbr.rel (%p231) target = $region32
    $region31: #{conv_block_2_forward.10} parent=5 // pred_region
      %s235 = ssub.s32 %s12, 1
      %p236 = scmp.lt.s32.totalorder %s21, 1
      %s237 = scalar_select %p236, %s21, 1
      %p238 = scmp.lt.s32.totalorder %s22, 16
      %s239 = scalar_select %p238, %s22, 16
      %s240 = smul.addr %s237, 17
      %s241 = sadd.s32 %s239, %s240
      %s242 = smul.addr %s241, 8
      %s243 = scalar_lea.vmem %s0, %s242
      %p244 = pneg %p52
      %p245 = pneg %p49
      %s246 = sadd.s32 %s22, 1
      %p247 = scmp.lt.s32.totalorder %s21, 1
      %s248 = scalar_select %p247, %s21, 1
      %p249 = scmp.lt.s32.totalorder %s246, 16
      %s250 = scalar_select %p249, %s246, 16
      %s251 = smul.addr %s248, 17
      %s252 = sadd.s32 %s250, %s251
      %s253 = smul.addr %s252, 8
      %s254 = scalar_lea.vmem %s1, %s253
      %p255 = pneg %p82
      %p256 = pneg %p79
      %p257 = pneg %p103
      %p258 = pneg %p100
      %p259 = pneg %p131
      %p260 = pneg %p128
      %p261 = scmp.lt.s32.totalorder %s21, 1
      %s262 = scalar_select %p261, %s21, 1
      %p263 = scmp.lt.s32.totalorder %s22, 15
      %s264 = scalar_select %p263, %s22, 15
      %s265 = smul.addr %s262, 16
      %s266 = sadd.s32 %s264, %s265
      %s267 = smul.addr %s266, 8
      %s268 = scalar_lea.vmem %s3, %s267
      %p269 = pneg %p157
      %p270 = pneg %p154
      %p271 = scmp.lt.s32.totalorder %s21, 1
      %s272 = scalar_select %p271, %s21, 1
      %s273 = smul.addr %s272, 8
      %s274 = scalar_lea.vmem %s4, %s273
      %p275 = pneg %p183
      %p276 = pneg %p180
      %p277 = scmp.lt.s32.totalorder %s21, 1
      %s278 = scalar_select %p277, %s21, 1
      %s279 = smul.addr %s278, 8
      %s280 = scalar_lea.vmem %s5, %s279
      %p281 = scmp.lt.s32.totalorder %s21, 1
      %s282 = scalar_select %p281, %s21, 1
      %p283 = scmp.lt.s32.totalorder %s22, 16
      %s284 = scalar_select %p283, %s22, 16
      %s285 = smul.addr %s282, 17
      %s286 = sadd.s32 %s284, %s285
      %s287 = smul.addr %s286, 8
      %s288 = scalar_lea.vmem %s0, %s287
      %s289 = sadd.s32 %s22, 1
      %p290 = scmp.lt.s32.totalorder %s21, 1
      %s291 = scalar_select %p290, %s21, 1
      %p292 = scmp.lt.s32.totalorder %s289, 16
      %s293 = scalar_select %p292, %s289, 16
      %s294 = smul.addr %s291, 17
      %s295 = sadd.s32 %s293, %s294
      %s296 = smul.addr %s295, 8
      %s297 = scalar_lea.vmem %s1, %s296
      %s298 = sadd.s32 %s22, 1
      %p299 = scmp.lt.s32.totalorder %s21, 1
      %s300 = scalar_select %p299, %s21, 1
      %p301 = scmp.lt.s32.totalorder %s22, 15
      %s302 = scalar_select %p301, %s22, 15
      %s303 = smul.addr %s300, 16
      %s304 = sadd.s32 %s302, %s303
      %s305 = smul.addr %s304, 8
      %s306 = scalar_lea.vmem %s3, %s305
      %p307 = scmp.lt.s32.totalorder %s21, 1
      %s308 = scalar_select %p307, %s21, 1
      %s309 = smul.addr %s308, 8
      %s310 = scalar_lea.vmem %s4, %s309
      %p311 = scmp.lt.s32.totalorder %s21, 1
      %s312 = scalar_select %p311, %s21, 1
      %s313 = smul.addr %s312, 8
      %s314 = scalar_lea.vmem %s5, %s313
      %p315 = scmp.eq.s32.totalorder %s22, 0
      // Predicated region
      $region33: #{conv_block_2_forward.10} parent=31 // pred_check
        %p316 = pneg %p315
      $region34: #{conv_block_2_forward.10} parent=31 // pred_check_branch
        %318 = sbr.rel (%p316) target = $region36
      $region35: #{conv_block_2_forward.10} parent=31 // pred_region
        %vm319 = vcmask 7168
        %320 = vst.msk [vmem:[%s310] sm:$0xff] %vm319, 0.0
        %321 = vst.msk [vmem:[%s314] sm:$0xff] %vm319, 0.0
      $region36: #{conv_block_2_forward.10} parent=31 // pred_fallthru
        _
      %v322 = vld [vmem:[%s288] sm:$0xff]
      %v323 = vld [vmem:[%s297] sm:$0xff]
      %v324 = vld [vmem:[%s2] sm:$0xff]
      %s325 = scalar_lea.vmem %s2, 8
      %v326 = vld [vmem:[%s325] sm:$0xff]
      %328 = vrot.lane.b32.xlu0 %v322, 127
      %v329 = vpop.permute.xlu0 %328
      %vm331 = vcmask 64512
      %v333 = vsel %vm331, %v326, 0
      %335 = vmatprep.subr.mxu0 0.0
      %336 = vmatpush1.msra.mxu0 %v329
      %337 = vmatprep.subr.mxu0 0.0
      %338 = vmatpush1.msra.mxu0 0.0
      %339 = vmatprep.subr.mxu0 0.0
      %340 = vmatpush1.msra.mxu0 0.0
      %341 = vmatprep.subr.mxu0 0.0
      %342 = vmatpush1.msra.mxu0 0.0
      %343 = vmatprep.subr.mxu0 0.0
      %344 = vmatpush1.msra.mxu0 0.0
      %345 = vmatprep.subr.mxu0 0.0
      %346 = vmatpush1.msra.mxu0 0.0
      %347 = vmatprep.subr.mxu0 0.0
      %348 = vmatpush1.msra.mxu0 0.0
      %349 = vmatprep.subr.mxu0 0.0
      %350 = vmatpush1.msra.mxu0 0.0
      %351 = vmatprep.subr.mxu0 0.0
      %352 = vmatpush1.msra.mxu0 0.0
      %353 = vmatprep.subr.mxu0 0.0
      %354 = vmatpush1.msra.mxu0 0.0
      %355 = vmatprep.subr.mxu0 0.0
      %356 = vmatpush1.msra.mxu0 0.0
      %357 = vmatprep.subr.mxu0 0.0
      %358 = vmatpush1.msra.mxu0 0.0
      %359 = vmatprep.subr.mxu0 0.0
      %360 = vmatpush1.msra.mxu0 0.0
      %361 = vmatprep.subr.mxu0 0.0
      %362 = vmatpush1.msra.mxu0 0.0
      %363 = vmatprep.subr.mxu0 0.0
      %364 = vmatpush1.msra.mxu0 0.0
      %365 = vmatprep.subr.mxu0 0.0
      %366 = vmatpush1.msra.mxu0 0.0
      %367 = vmatprep.subr.mxu0 0.0
      %368 = vmatpush1.msra.mxu0 0.0
      %369 = vmatprep.subr.mxu0 0.0
      %370 = vmatpush1.msra.mxu0 0.0
      %371 = vmatprep.subr.mxu0 0.0
      %372 = vmatpush1.msra.mxu0 0.0
      %373 = vmatprep.subr.mxu0 0.0
      %374 = vmatpush1.msra.mxu0 0.0
      %375 = vmatprep.subr.mxu0 0.0
      %376 = vmatpush1.msra.mxu0 0.0
      %377 = vmatprep.subr.mxu0 0.0
      %378 = vmatpush1.msra.mxu0 0.0
      %379 = vmatprep.subr.mxu0 0.0
      %380 = vmatpush1.msra.mxu0 0.0
      %381 = vmatprep.subr.mxu0 0.0
      %382 = vmatpush1.msra.mxu0 0.0
      %383 = vmatprep.subr.mxu0 0.0
      %384 = vmatpush1.msra.mxu0 0.0
      %385 = vmatprep.subr.mxu0 0.0
      %386 = vmatpush1.msra.mxu0 0.0
      %387 = vmatprep.subr.mxu0 0.0
      %388 = vmatpush1.msra.mxu0 0.0
      %389 = vmatprep.subr.mxu0 0.0
      %390 = vmatpush1.msra.mxu0 0.0
      %391 = vmatprep.subr.mxu0 0.0
      %392 = vmatpush1.msra.mxu0 0.0
      %393 = vmatprep.subr.mxu0 0.0
      %394 = vmatpush1.msra.mxu0 0.0
      %395 = vmatprep.subr.mxu0 0.0
      %396 = vmatpush1.msra.mxu0 0.0
      %397 = vmatprep.subr.mxu0 0.0
      %398 = vmatpush1.msra.mxu0 0.0
      %399 = vmatprep.mubr.f32.mxu0 0.0
      %400 = vmatmul.mubr.f32.gmra.mrb[0].mxu0 %v333
      %v401 = vpop.f32.mrb[0].mxu0
      %v402 = vadd.f32 0.0, %v401
      %v403 = vpop.f32.mrb[0].mxu0
      %404 = vdwg.mxu0
      %v406 = vsel %vm331, %v324, 0
      %408 = vmatprep.subr.mxu0 0.0
      %409 = vmatpush1.msra.mxu0 %v322
      %410 = vmatprep.subr.mxu0 0.0
      %411 = vmatpush1.msra.mxu0 0.0
      %412 = vmatprep.subr.mxu0 0.0
      %413 = vmatpush1.msra.mxu0 0.0
      %414 = vmatprep.subr.mxu0 0.0
      %415 = vmatpush1.msra.mxu0 0.0
      %416 = vmatprep.subr.mxu0 0.0
      %417 = vmatpush1.msra.mxu0 0.0
      %418 = vmatprep.subr.mxu0 0.0
      %419 = vmatpush1.msra.mxu0 0.0
      %420 = vmatprep.subr.mxu0 0.0
      %421 = vmatpush1.msra.mxu0 0.0
      %422 = vmatprep.subr.mxu0 0.0
      %423 = vmatpush1.msra.mxu0 0.0
      %424 = vmatprep.subr.mxu0 0.0
      %425 = vmatpush1.msra.mxu0 0.0
      %426 = vmatprep.subr.mxu0 0.0
      %427 = vmatpush1.msra.mxu0 0.0
      %428 = vmatprep.subr.mxu0 0.0
      %429 = vmatpush1.msra.mxu0 0.0
      %430 = vmatprep.subr.mxu0 0.0
      %431 = vmatpush1.msra.mxu0 0.0
      %432 = vmatprep.subr.mxu0 0.0
      %433 = vmatpush1.msra.mxu0 0.0
      %434 = vmatprep.subr.mxu0 0.0
      %435 = vmatpush1.msra.mxu0 0.0
      %436 = vmatprep.subr.mxu0 0.0
      %437 = vmatpush1.msra.mxu0 0.0
      %438 = vmatprep.subr.mxu0 0.0
      %439 = vmatpush1.msra.mxu0 0.0
      %440 = vmatprep.subr.mxu0 0.0
      %441 = vmatpush1.msra.mxu0 0.0
      %442 = vmatprep.subr.mxu0 0.0
      %443 = vmatpush1.msra.mxu0 0.0
      %444 = vmatprep.subr.mxu0 0.0
      %445 = vmatpush1.msra.mxu0 0.0
      %446 = vmatprep.subr.mxu0 0.0
      %447 = vmatpush1.msra.mxu0 0.0
      %448 = vmatprep.subr.mxu0 0.0
      %449 = vmatpush1.msra.mxu0 0.0
      %450 = vmatprep.subr.mxu0 0.0
      %451 = vmatpush1.msra.mxu0 0.0
      %452 = vmatprep.subr.mxu0 0.0
      %453 = vmatpush1.msra.mxu0 0.0
      %454 = vmatprep.subr.mxu0 0.0
      %455 = vmatpush1.msra.mxu0 0.0
      %456 = vmatprep.subr.mxu0 0.0
      %457 = vmatpush1.msra.mxu0 0.0
      %458 = vmatprep.subr.mxu0 0.0
      %459 = vmatpush1.msra.mxu0 0.0
      %460 = vmatprep.subr.mxu0 0.0
      %461 = vmatpush1.msra.mxu0 0.0
      %462 = vmatprep.subr.mxu0 0.0
      %463 = vmatpush1.msra.mxu0 0.0
      %464 = vmatprep.subr.mxu0 0.0
      %465 = vmatpush1.msra.mxu0 0.0
      %466 = vmatprep.subr.mxu0 0.0
      %467 = vmatpush1.msra.mxu0 0.0
      %468 = vmatprep.subr.mxu0 0.0
      %469 = vmatpush1.msra.mxu0 0.0
      %470 = vmatprep.subr.mxu0 0.0
      %471 = vmatpush1.msra.mxu0 0.0
      %472 = vmatprep.mubr.f32.mxu0 0.0
      %473 = vmatmul.mubr.f32.gmra.mrb[0].mxu0 %v406
      %v474 = vpop.f32.mrb[0].mxu0
      %v475 = vadd.f32 %v402, %v474
      %v476 = vpop.f32.mrb[0].mxu0
      %477 = vdwg.mxu0
      %s478 = scalar_lea.vmem %s2, 16
      %v479 = vld [vmem:[%s478] sm:$0xff]
      %v481 = vsel %vm331, %v479, 0
      %483 = vmatprep.subr.mxu0 0.0
      %484 = vmatpush1.msra.mxu0 %v323
      %485 = vmatprep.subr.mxu0 0.0
      %486 = vmatpush1.msra.mxu0 0.0
      %487 = vmatprep.subr.mxu0 0.0
      %488 = vmatpush1.msra.mxu0 0.0
      %489 = vmatprep.subr.mxu0 0.0
      %490 = vmatpush1.msra.mxu0 0.0
      %491 = vmatprep.subr.mxu0 0.0
      %492 = vmatpush1.msra.mxu0 0.0
      %493 = vmatprep.subr.mxu0 0.0
      %494 = vmatpush1.msra.mxu0 0.0
      %495 = vmatprep.subr.mxu0 0.0
      %496 = vmatpush1.msra.mxu0 0.0
      %497 = vmatprep.subr.mxu0 0.0
      %498 = vmatpush1.msra.mxu0 0.0
      %499 = vmatprep.subr.mxu0 0.0
      %500 = vmatpush1.msra.mxu0 0.0
      %501 = vmatprep.subr.mxu0 0.0
      %502 = vmatpush1.msra.mxu0 0.0
      %503 = vmatprep.subr.mxu0 0.0
      %504 = vmatpush1.msra.mxu0 0.0
      %505 = vmatprep.subr.mxu0 0.0
      %506 = vmatpush1.msra.mxu0 0.0
      %507 = vmatprep.subr.mxu0 0.0
      %508 = vmatpush1.msra.mxu0 0.0
      %509 = vmatprep.subr.mxu0 0.0
      %510 = vmatpush1.msra.mxu0 0.0
      %511 = vmatprep.subr.mxu0 0.0
      %512 = vmatpush1.msra.mxu0 0.0
      %513 = vmatprep.subr.mxu0 0.0
      %514 = vmatpush1.msra.mxu0 0.0
      %515 = vmatprep.subr.mxu0 0.0
      %516 = vmatpush1.msra.mxu0 0.0
      %517 = vmatprep.subr.mxu0 0.0
      %518 = vmatpush1.msra.mxu0 0.0
      %519 = vmatprep.subr.mxu0 0.0
      %520 = vmatpush1.msra.mxu0 0.0
      %521 = vmatprep.subr.mxu0 0.0
      %522 = vmatpush1.msra.mxu0 0.0
      %523 = vmatprep.subr.mxu0 0.0
      %524 = vmatpush1.msra.mxu0 0.0
      %525 = vmatprep.subr.mxu0 0.0
      %526 = vmatpush1.msra.mxu0 0.0
      %527 = vmatprep.subr.mxu0 0.0
      %528 = vmatpush1.msra.mxu0 0.0
      %529 = vmatprep.subr.mxu0 0.0
      %530 = vmatpush1.msra.mxu0 0.0
      %531 = vmatprep.subr.mxu0 0.0
      %532 = vmatpush1.msra.mxu0 0.0
      %533 = vmatprep.subr.mxu0 0.0
      %534 = vmatpush1.msra.mxu0 0.0
      %535 = vmatprep.subr.mxu0 0.0
      %536 = vmatpush1.msra.mxu0 0.0
      %537 = vmatprep.subr.mxu0 0.0
      %538 = vmatpush1.msra.mxu0 0.0
      %539 = vmatprep.subr.mxu0 0.0
      %540 = vmatpush1.msra.mxu0 0.0
      %541 = vmatprep.subr.mxu0 0.0
      %542 = vmatpush1.msra.mxu0 0.0
      %543 = vmatprep.subr.mxu0 0.0
      %544 = vmatpush1.msra.mxu0 0.0
      %545 = vmatprep.subr.mxu0 0.0
      %546 = vmatpush1.msra.mxu0 0.0
      %547 = vmatprep.mubr.f32.mxu0 0.0
      %548 = vmatmul.mubr.f32.gmra.mrb[0].mxu0 %v481
      %v549 = vpop.f32.mrb[0].mxu0
      %v550 = vadd.f32 0.0, %v549
      %v551 = vpop.f32.mrb[0].mxu0
      %552 = vdwg.mxu0
      %v553 = vadd.f32 %v475, %v550
      %s554 = scalar_lea.vmem %s2, 24
      %v555 = vld [vmem:[%s554] sm:$0xff]
      %557 = vrot.lane.b32.xlu0 %v323, 127
      %v558 = vpop.permute.xlu0 %557
      %v561 = vsel %vm331, %v555, 0
      %563 = vmatprep.subr.mxu0 0.0
      %564 = vmatpush1.msra.mxu0 %v558
      %565 = vmatprep.subr.mxu0 0.0
      %566 = vmatpush1.msra.mxu0 0.0
      %567 = vmatprep.subr.mxu0 0.0
      %568 = vmatpush1.msra.mxu0 0.0
      %569 = vmatprep.subr.mxu0 0.0
      %570 = vmatpush1.msra.mxu0 0.0
      %571 = vmatprep.subr.mxu0 0.0
      %572 = vmatpush1.msra.mxu0 0.0
      %573 = vmatprep.subr.mxu0 0.0
      %574 = vmatpush1.msra.mxu0 0.0
      %575 = vmatprep.subr.mxu0 0.0
      %576 = vmatpush1.msra.mxu0 0.0
      %577 = vmatprep.subr.mxu0 0.0
      %578 = vmatpush1.msra.mxu0 0.0
      %579 = vmatprep.subr.mxu0 0.0
      %580 = vmatpush1.msra.mxu0 0.0
      %581 = vmatprep.subr.mxu0 0.0
      %582 = vmatpush1.msra.mxu0 0.0
      %583 = vmatprep.subr.mxu0 0.0
      %584 = vmatpush1.msra.mxu0 0.0
      %585 = vmatprep.subr.mxu0 0.0
      %586 = vmatpush1.msra.mxu0 0.0
      %587 = vmatprep.subr.mxu0 0.0
      %588 = vmatpush1.msra.mxu0 0.0
      %589 = vmatprep.subr.mxu0 0.0
      %590 = vmatpush1.msra.mxu0 0.0
      %591 = vmatprep.subr.mxu0 0.0
      %592 = vmatpush1.msra.mxu0 0.0
      %593 = vmatprep.subr.mxu0 0.0
      %594 = vmatpush1.msra.mxu0 0.0
      %595 = vmatprep.subr.mxu0 0.0
      %596 = vmatpush1.msra.mxu0 0.0
      %597 = vmatprep.subr.mxu0 0.0
      %598 = vmatpush1.msra.mxu0 0.0
      %599 = vmatprep.subr.mxu0 0.0
      %600 = vmatpush1.msra.mxu0 0.0
      %601 = vmatprep.subr.mxu0 0.0
      %602 = vmatpush1.msra.mxu0 0.0
      %603 = vmatprep.subr.mxu0 0.0
      %604 = vmatpush1.msra.mxu0 0.0
      %605 = vmatprep.subr.mxu0 0.0
      %606 = vmatpush1.msra.mxu0 0.0
      %607 = vmatprep.subr.mxu0 0.0
      %608 = vmatpush1.msra.mxu0 0.0
      %609 = vmatprep.subr.mxu0 0.0
      %610 = vmatpush1.msra.mxu0 0.0
      %611 = vmatprep.subr.mxu0 0.0
      %612 = vmatpush1.msra.mxu0 0.0
      %613 = vmatprep.subr.mxu0 0.0
      %614 = vmatpush1.msra.mxu0 0.0
      %615 = vmatprep.subr.mxu0 0.0
      %616 = vmatpush1.msra.mxu0 0.0
      %617 = vmatprep.subr.mxu0 0.0
      %618 = vmatpush1.msra.mxu0 0.0
      %619 = vmatprep.subr.mxu0 0.0
      %620 = vmatpush1.msra.mxu0 0.0
      %621 = vmatprep.subr.mxu0 0.0
      %622 = vmatpush1.msra.mxu0 0.0
      %623 = vmatprep.subr.mxu0 0.0
      %624 = vmatpush1.msra.mxu0 0.0
      %625 = vmatprep.subr.mxu0 0.0
      %626 = vmatpush1.msra.mxu0 0.0
      %627 = vmatprep.mubr.f32.mxu0 0.0
      %628 = vmatmul.mubr.f32.gmra.mrb[0].mxu0 %v561
      %v629 = vpop.f32.mrb[0].mxu0
      %v630 = vadd.f32 0.0, %v629
      %v631 = vpop.f32.mrb[0].mxu0
      %632 = vdwg.mxu0
      %v633 = vadd.f32 %v553, %v630
      %vm634 = vcmask 130048
      %635 = vst.msk [vmem:[%s306] sm:$0xff] %vm634, %v633
      %v636 = vld [vmem:[%s310] sm:$0xff]
      %v637 = vsel %vm634, %v633, 0.0
      %638 = vadd.xlane.f32.xlu0 %v637
      %v639 = vpop.xlane.xlu0 %638
      %v640 = vadd.f32 %v636, %v639
      %vm641 = vcmask 7168
      %642 = vst.msk [vmem:[%s310] sm:$0xff] %vm641, %v640
      %v643 = vld [vmem:[%s314] sm:$0xff]
      %v644 = vmul.f32 %v633, %v633
      %v645 = vsel %vm634, %v644, 0.0
      %646 = vadd.xlane.f32.xlu0 %v645
      %v647 = vpop.xlane.xlu0 %646
      %v648 = vadd.f32 %v643, %v647
      %649 = vst.msk [vmem:[%s314] sm:$0xff] %vm641, %v648
      %p650 = scmp.lt.s32.totalorder %s21, 1
      %s651 = scalar_select %p650, %s21, 1
      %p652 = scmp.lt.s32.totalorder %s22, 15
      %s653 = scalar_select %p652, %s22, 15
      %s654 = smul.addr %s651, 16
      %s655 = sadd.s32 %s653, %s654
      %s656 = smul.addr %s655, 8
      %s657 = scalar_lea.vmem %s3, %s656
      %p658 = scmp.lt.s32.totalorder %s21, 1
      %s659 = scalar_select %p658, %s21, 1
      %s660 = smul.addr %s659, 8
      %s661 = scalar_lea.vmem %s4, %s660
      %p662 = scmp.lt.s32.totalorder %s21, 1
      %s663 = scalar_select %p662, %s21, 1
      %s664 = smul.addr %s663, 8
      %s665 = scalar_lea.vmem %s5, %s664
      // Predicated region
      $region37: #{conv_block_2_forward.10} parent=31 // pred_check
        %p666 = pneg %p128
      $region38: #{conv_block_2_forward.10} parent=31 // pred_check_branch
        %668 = sbr.rel (%p666) target = $region40
      $region39: #{conv_block_2_forward.10} parent=31 // pred_region
        _
      $region40: #{conv_block_2_forward.10} parent=31 // pred_fallthru
        _
      // Predicated region
      $region41: #{conv_block_2_forward.10} parent=31 // pred_check
        %p669 = pneg %p154
      $region42: #{conv_block_2_forward.10} parent=31 // pred_check_branch
        %671 = sbr.rel (%p669) target = $region44
      $region43: #{conv_block_2_forward.10} parent=31 // pred_region
        _
      $region44: #{conv_block_2_forward.10} parent=31 // pred_fallthru
        _
      // Predicated region
      $region45: #{conv_block_2_forward.10} parent=31 // pred_check
        %p672 = pneg %p180
      $region46: #{conv_block_2_forward.10} parent=31 // pred_check_branch
        %674 = sbr.rel (%p672) target = $region48
      $region47: #{conv_block_2_forward.10} parent=31 // pred_region
        _
      $region48: #{conv_block_2_forward.10} parent=31 // pred_fallthru
        _
    $region32: #{conv_block_2_forward.10} parent=5 // pred_fallthru
      _
    %p675 = scmp.le.s32.totalorder 2, %s12
    // Predicated region
    $region49: #{conv_block_2_forward.10} parent=5 // pred_check
      %p676 = pneg %p675
    $region50: #{conv_block_2_forward.10} parent=5 // pred_check_branch
      %678 = sbr.rel (%p676) target = $region52
    $region51: #{conv_block_2_forward.10} parent=5 // pred_region
      %s679 = ssub.s32 %s12, 2
      // Predicated region
      $region53: #{conv_block_2_forward.10} parent=51 // pred_check
        %p680 = pneg %p134
      $region54: #{conv_block_2_forward.10} parent=51 // pred_check_branch
        %682 = sbr.rel (%p680) target = $region56
      $region55: #{conv_block_2_forward.10} parent=51 // pred_region
        %p683 = scmp.lt.s32.totalorder %s23, 1
        %s684 = scalar_select %p683, %s23, 1
        %p685 = scmp.lt.s32.totalorder %s24, 15
        %s686 = scalar_select %p685, %s24, 15
        %s687 = smul.addr %s684, 16
        %s688 = sadd.s32 %s686, %s687
        %s689 = smul.addr %s688, 8
        %s690 = scalar_lea.vmem %s3, %s689
      $region56: #{conv_block_2_forward.10} parent=51 // pred_fallthru
        _
      // Predicated region
      $region57: #{conv_block_2_forward.10} parent=51 // pred_check
        %p691 = pneg %p160
      $region58: #{conv_block_2_forward.10} parent=51 // pred_check_branch
        %693 = sbr.rel (%p691) target = $region60
      $region59: #{conv_block_2_forward.10} parent=51 // pred_region
        %p694 = scmp.lt.s32.totalorder %s23, 1
        %s695 = scalar_select %p694, %s23, 1
        %s696 = smul.addr %s695, 8
        %s697 = scalar_lea.vmem %s4, %s696
      $region60: #{conv_block_2_forward.10} parent=51 // pred_fallthru
        _
      // Predicated region
      $region61: #{conv_block_2_forward.10} parent=51 // pred_check
        %p698 = pneg %p186
      $region62: #{conv_block_2_forward.10} parent=51 // pred_check_branch
        %700 = sbr.rel (%p698) target = $region64
      $region63: #{conv_block_2_forward.10} parent=51 // pred_region
        %p701 = scmp.lt.s32.totalorder %s23, 1
        %s702 = scalar_select %p701, %s23, 1
        %s703 = smul.addr %s702, 8
        %s704 = scalar_lea.vmem %s5, %s703
      $region64: #{conv_block_2_forward.10} parent=51 // pred_fallthru
        _
    $region52: #{conv_block_2_forward.10} parent=5 // pred_fallthru
      _
  $region6: #{conv_block_2_forward.10} parent=0 // loop_footer
    %s16 = sadd.s32 1, %s12
  $region7: #{conv_block_2_forward.10} parent=0 // loop_footer_branch
    %11 = sbr.rel target = $region3
  $region8: #{conv_block_2_forward.10} parent=0 // loop_exit
    _

// kernel: conv_block_2_forward.12
$region0: #{conv_block_2_forward.12}
  #allocation0 [shape = 'u32[]', space=smem, size = 0x4, offset = 0x4, fixed_abs, tag = 'smem constant byte address 0x4 - core index']
  #allocation1 [shape = 'u32[144,128]{1,0:T(1,128)}', space=vmem, size = 0x12000, scoped, tag = 'internal scratch']
  %s0 = inlined_call_operand.vmem [shape: f32[2,16,8,16], index: 0, kind: input, shape index: {}, may-alias: {0,1}]
  %s1 = inlined_call_operand.vmem [shape: f32[2,16,8,16], index: 1, kind: input, shape index: {}, may-alias: {0,1}]
  %s2 = inlined_call_operand.vmem [shape: f32[2,2,8,8], index: 2, kind: input, shape index: {}]
  %s3 = inlined_call_operand.vmem [shape: f32[2,15,8,15], index: 3, kind: output, shape index: {0}]
  %s4 = inlined_call_operand.vmem [shape: f32[2,8,1], index: 4, kind: output, shape index: {1}]
  %s5 = inlined_call_operand.vmem [shape: f32[2,8,1], index: 5, kind: output, shape index: {2}]
  %6 = xla_tuple %s3, %s4, %s5
  %s7 = sld [smem:[#allocation0]]
  $region65: #{conv_block_2_forward.12} parent=0
    _
  %s9 = ssub.s32 1, %s7
  %s10 = scalar_select 0, %s9, %s7
  loop: start=0, step=1, limit=32
  $region2: #{conv_block_2_forward.12} parent=0 // loop_pre_header
    _
  $region3: #{conv_block_2_forward.12} parent=0 // loop_header
    %s12 = sphi 0, %s16
    %p13 = scmp.ge.s32.totalorder %s12, 32
    %s19 = sphi 0, %s31
    %s20 = sphi 0, %s27
    %s21 = sphi 0, %s19
    %s22 = sphi 0, %s20
    %s23 = sphi 0, %s21
    %s24 = sphi 0, %s22
    %s36 = sphi 0, %s38
    %s39 = sphi 0, %s36
    %s40 = sphi 0, %s39
    %s56 = sphi 0, %s40
    %s66 = sphi 0, %s68
    %s69 = sphi 0, %s66
    %s70 = sphi 0, %s69
    %s86 = sphi 0, %s70
    %s90 = sphi 0, %s90
    %s92 = sphi 0, %s90
    %s93 = sphi 0, %s92
    %s107 = sphi 0, %s93
    %s115 = sphi 0, %s117
    %s118 = sphi 0, %s115
    %s119 = sphi 0, %s118
    %s135 = sphi 0, %s119
    %s141 = sphi 0, %s143
    %s144 = sphi 0, %s141
    %s145 = sphi 0, %s144
    %s161 = sphi 0, %s145
    %s167 = sphi 0, %s169
    %s170 = sphi 0, %s167
    %s171 = sphi 0, %s170
    %s187 = sphi 0, %s171
  $region4: #{conv_block_2_forward.12} parent=0 // loop_header_branch
    %15 = sbr.rel (%p13) target = $region8
  $region5: #{conv_block_2_forward.12} parent=0 // loop_body
    %s17 = ssub.s32 %s12, 1
    %s18 = ssub.s32 %s12, 2
    %s25 = sadd.s32 1, %s20
    %p26 = scmp.ge.s32.totalorder %s25, 15
    %s27 = scalar_select %p26, 0, %s25
    %s28 = sadd.s32 1, %s19
    %s29 = scalar_select %p26, %s28, %s19
    %p30 = scmp.ge.s32.totalorder %s29, 2
    %s31 = scalar_select %p30, 0, %s29
    %s32 = ssub.s32 %s19, %s31
    %s33 = ssub.s32 %s20, %s27
    %s34 = sor.u32 %s32, %s33
    %p35 = scmp.eq.s32.totalorder %s34, 0
    %s37 = sadd.s32 %s36, 1
    %s38 = scalar_select %p35, %s36, %s37
    %p41 = pneg %p35
    %p42 = scmp.eq.s32.totalorder %s12, 29
    %p43 = por %p41, %p42
    %p44 = scmp.ne.s32.totalorder %s36, %s39
    %p45 = scmp.eq.s32.totalorder %s12, 0
    %p46 = por %p44, %p45
    %p47 = scmp.ne.s32.totalorder %s36, %s39
    %p48 = scmp.eq.s32.totalorder %s17, 29
    %p49 = por %p47, %p48
    %p50 = scmp.ne.s32.totalorder %s39, %s40
    %p51 = scmp.eq.s32.totalorder %s17, 0
    %p52 = por %p50, %p51
    %p53 = scmp.ne.s32.totalorder %s39, %s40
    %p54 = scmp.eq.s32.totalorder %s18, 29
    %p55 = por %p53, %p54
    %p57 = scmp.ne.s32.totalorder %s40, %s56
    %p58 = scmp.eq.s32.totalorder %s18, 0
    %p59 = por %p57, %p58
    %s60 = sadd.s32 %s20, 1
    %s61 = sadd.s32 %s27, 1
    %s62 = ssub.s32 %s19, %s31
    %s63 = ssub.s32 %s60, %s61
    %s64 = sor.u32 %s62, %s63
    %p65 = scmp.eq.s32.totalorder %s64, 0
    %s67 = sadd.s32 %s66, 1
    %s68 = scalar_select %p65, %s66, %s67
    %p71 = pneg %p65
    %p72 = scmp.eq.s32.totalorder %s12, 29
    %p73 = por %p71, %p72
    %p74 = scmp.ne.s32.totalorder %s66, %s69
    %p75 = scmp.eq.s32.totalorder %s12, 0
    %p76 = por %p74, %p75
    %p77 = scmp.ne.s32.totalorder %s66, %s69
    %p78 = scmp.eq.s32.totalorder %s17, 29
    %p79 = por %p77, %p78
    %p80 = scmp.ne.s32.totalorder %s69, %s70
    %p81 = scmp.eq.s32.totalorder %s17, 0
    %p82 = por %p80, %p81
    %p83 = scmp.ne.s32.totalorder %s69, %s70
    %p84 = scmp.eq.s32.totalorder %s18, 29
    %p85 = por %p83, %p84
    %p87 = scmp.ne.s32.totalorder %s70, %s86
    %p88 = scmp.eq.s32.totalorder %s18, 0
    %p89 = por %p87, %p88
    %s91 = sadd.s32 %s90, 1
    %p94 = scmp.eq.s32.totalorder %s12, 29
    %p95 = scmp.ne.s32.totalorder %s90, %s92
    %p96 = scmp.eq.s32.totalorder %s12, 0
    %p97 = por %p95, %p96
    %p98 = scmp.ne.s32.totalorder %s90, %s92
    %p99 = scmp.eq.s32.totalorder %s17, 29
    %p100 = por %p98, %p99
    %p101 = scmp.ne.s32.totalorder %s92, %s93
    %p102 = scmp.eq.s32.totalorder %s17, 0
    %p103 = por %p101, %p102
    %p104 = scmp.ne.s32.totalorder %s92, %s93
    %p105 = scmp.eq.s32.totalorder %s18, 29
    %p106 = por %p104, %p105
    %p108 = scmp.ne.s32.totalorder %s93, %s107
    %p109 = scmp.eq.s32.totalorder %s18, 0
    %p110 = por %p108, %p109
    %s111 = ssub.s32 %s19, %s31
    %s112 = ssub.s32 %s20, %s27
    %s113 = sor.u32 %s111, %s112
    %p114 = scmp.eq.s32.totalorder %s113, 0
    %s116 = sadd.s32 %s115, 1
    %s117 = scalar_select %p114, %s115, %s116
    %p120 = pneg %p114
    %p121 = scmp.eq.s32.totalorder %s12, 29
    %p122 = por %p120, %p121
    %p123 = scmp.ne.s32.totalorder %s115, %s118
    %p124 = scmp.eq.s32.totalorder %s12, 0
    %p125 = por %p123, %p124
    %p126 = scmp.ne.s32.totalorder %s115, %s118
    %p127 = scmp.eq.s32.totalorder %s17, 29
    %p128 = por %p126, %p127
    %p129 = scmp.ne.s32.totalorder %s118, %s119
    %p130 = scmp.eq.s32.totalorder %s17, 0
    %p131 = por %p129, %p130
    %p132 = scmp.ne.s32.totalorder %s118, %s119
    %p133 = scmp.eq.s32.totalorder %s18, 29
    %p134 = por %p132, %p133
    %p136 = scmp.ne.s32.totalorder %s119, %s135
    %p137 = scmp.eq.s32.totalorder %s18, 0
    %p138 = por %p136, %p137
    %s139 = ssub.s32 %s19, %s31
    %p140 = scmp.eq.s32.totalorder %s139, 0
    %s142 = sadd.s32 %s141, 1
    %s143 = scalar_select %p140, %s141, %s142
    %p146 = pneg %p140
    %p147 = scmp.eq.s32.totalorder %s12, 29
    %p148 = por %p146, %p147
    %p149 = scmp.ne.s32.totalorder %s141, %s144
    %p150 = scmp.eq.s32.totalorder %s12, 0
    %p151 = por %p149, %p150
    %p152 = scmp.ne.s32.totalorder %s141, %s144
    %p153 = scmp.eq.s32.totalorder %s17, 29
    %p154 = por %p152, %p153
    %p155 = scmp.ne.s32.totalorder %s144, %s145
    %p156 = scmp.eq.s32.totalorder %s17, 0
    %p157 = por %p155, %p156
    %p158 = scmp.ne.s32.totalorder %s144, %s145
    %p159 = scmp.eq.s32.totalorder %s18, 29
    %p160 = por %p158, %p159
    %p162 = scmp.ne.s32.totalorder %s145, %s161
    %p163 = scmp.eq.s32.totalorder %s18, 0
    %p164 = por %p162, %p163
    %s165 = ssub.s32 %s19, %s31
    %p166 = scmp.eq.s32.totalorder %s165, 0
    %s168 = sadd.s32 %s167, 1
    %s169 = scalar_select %p166, %s167, %s168
    %p172 = pneg %p166
    %p173 = scmp.eq.s32.totalorder %s12, 29
    %p174 = por %p172, %p173
    %p175 = scmp.ne.s32.totalorder %s167, %s170
    %p176 = scmp.eq.s32.totalorder %s12, 0
    %p177 = por %p175, %p176
    %p178 = scmp.ne.s32.totalorder %s167, %s170
    %p179 = scmp.eq.s32.totalorder %s17, 29
    %p180 = por %p178, %p179
    %p181 = scmp.ne.s32.totalorder %s170, %s171
    %p182 = scmp.eq.s32.totalorder %s17, 0
    %p183 = por %p181, %p182
    %p184 = scmp.ne.s32.totalorder %s170, %s171
    %p185 = scmp.eq.s32.totalorder %s18, 29
    %p186 = por %p184, %p185
    %p188 = scmp.ne.s32.totalorder %s171, %s187
    %p189 = scmp.eq.s32.totalorder %s18, 0
    %p190 = por %p188, %p189
    %p191 = scmp.le.s32.totalorder 1, %s12
    %p192 = scmp.lt.s32.totalorder %s12, 31
    %p193 = pnand %p191, %p192
    %p194 = pneg %p193
    // Predicated region
    $region9: #{conv_block_2_forward.12} parent=5 // pred_check
      _
    $region10: #{conv_block_2_forward.12} parent=5 // pred_check_branch
      %196 = sbr.rel (%p193) target = $region12
    $region11: #{conv_block_2_forward.12} parent=5 // pred_region
      %s197 = ssub.s32 %s12, 1
      // Predicated region
      $region13: #{conv_block_2_forward.12} parent=11 // pred_check
        %p198 = pneg %p103
      $region14: #{conv_block_2_forward.12} parent=11 // pred_check_branch
        %200 = sbr.rel (%p198) target = $region16
      $region15: #{conv_block_2_forward.12} parent=11 // pred_region
        _
      $region16: #{conv_block_2_forward.12} parent=11 // pred_fallthru
        _
    $region12: #{conv_block_2_forward.12} parent=5 // pred_fallthru
      _
    %p201 = scmp.lt.s32.totalorder %s12, 30
    // Predicated region
    $region17: #{conv_block_2_forward.12} parent=5 // pred_check
      %p202 = pneg %p201
    $region18: #{conv_block_2_forward.12} parent=5 // pred_check_branch
      %204 = sbr.rel (%p202) target = $region20
    $region19: #{conv_block_2_forward.12} parent=5 // pred_region
      // Predicated region
      $region21: #{conv_block_2_forward.12} parent=19 // pred_check
        %p205 = pneg %p46
      $region22: #{conv_block_2_forward.12} parent=19 // pred_check_branch
        %207 = sbr.rel (%p205) target = $region24
      $region23: #{conv_block_2_forward.12} parent=19 // pred_region
        %p208 = scmp.lt.s32.totalorder %s19, 1
        %s209 = scalar_select %p208, %s19, 1
        %p210 = scmp.lt.s32.totalorder %s20, 15
        %s211 = scalar_select %p210, %s20, 15
        %s212 = smul.addr %s209, 16
        %s213 = sadd.s32 %s211, %s212
        %s214 = smul.addr %s213, 8
        %s215 = scalar_lea.vmem %s0, %s214
      $region24: #{conv_block_2_forward.12} parent=19 // pred_fallthru
        _
      // Predicated region
      $region25: #{conv_block_2_forward.12} parent=19 // pred_check
        %p216 = pneg %p76
      $region26: #{conv_block_2_forward.12} parent=19 // pred_check_branch
        %218 = sbr.rel (%p216) target = $region28
      $region27: #{conv_block_2_forward.12} parent=19 // pred_region
        %s219 = sadd.s32 %s20, 1
        %p220 = scmp.lt.s32.totalorder %s19, 1
        %s221 = scalar_select %p220, %s19, 1
        %p222 = scmp.lt.s32.totalorder %s219, 15
        %s223 = scalar_select %p222, %s219, 15
        %s224 = smul.addr %s221, 16
        %s225 = sadd.s32 %s223, %s224
        %s226 = smul.addr %s225, 8
        %s227 = scalar_lea.vmem %s1, %s226
        %s228 = sadd.s32 %s20, 1
      $region28: #{conv_block_2_forward.12} parent=19 // pred_fallthru
        _
    $region20: #{conv_block_2_forward.12} parent=5 // pred_fallthru
      _
    %p229 = scmp.le.s32.totalorder 1, %s12
    %p230 = scmp.lt.s32.totalorder %s12, 31
    %p231 = pnand %p229, %p230
    %p232 = pneg %p231
    // Predicated region
    $region29: #{conv_block_2_forward.12} parent=5 // pred_check
      _
    $region30: #{conv_block_2_forward.12} parent=5 // pred_check_branch
      %234 = sbr.rel (%p231) target = $region32
    $region31: #{conv_block_2_forward.12} parent=5 // pred_region
      %s235 = ssub.s32 %s12, 1
      %p236 = scmp.lt.s32.totalorder %s21, 1
      %s237 = scalar_select %p236, %s21, 1
      %p238 = scmp.lt.s32.totalorder %s22, 15
      %s239 = scalar_select %p238, %s22, 15
      %s240 = smul.addr %s237, 16
      %s241 = sadd.s32 %s239, %s240
      %s242 = smul.addr %s241, 8
      %s243 = scalar_lea.vmem %s0, %s242
      %p244 = pneg %p52
      %p245 = pneg %p49
      %s246 = sadd.s32 %s22, 1
      %p247 = scmp.lt.s32.totalorder %s21, 1
      %s248 = scalar_select %p247, %s21, 1
      %p249 = scmp.lt.s32.totalorder %s246, 15
      %s250 = scalar_select %p249, %s246, 15
      %s251 = smul.addr %s248, 16
      %s252 = sadd.s32 %s250, %s251
      %s253 = smul.addr %s252, 8
      %s254 = scalar_lea.vmem %s1, %s253
      %p255 = pneg %p82
      %p256 = pneg %p79
      %p257 = pneg %p103
      %p258 = pneg %p100
      %p259 = pneg %p131
      %p260 = pneg %p128
      %p261 = scmp.lt.s32.totalorder %s21, 1
      %s262 = scalar_select %p261, %s21, 1
      %p263 = scmp.lt.s32.totalorder %s22, 14
      %s264 = scalar_select %p263, %s22, 14
      %s265 = smul.addr %s262, 15
      %s266 = sadd.s32 %s264, %s265
      %s267 = smul.addr %s266, 8
      %s268 = scalar_lea.vmem %s3, %s267
      %p269 = pneg %p157
      %p270 = pneg %p154
      %p271 = scmp.lt.s32.totalorder %s21, 1
      %s272 = scalar_select %p271, %s21, 1
      %s273 = smul.addr %s272, 8
      %s274 = scalar_lea.vmem %s4, %s273
      %p275 = pneg %p183
      %p276 = pneg %p180
      %p277 = scmp.lt.s32.totalorder %s21, 1
      %s278 = scalar_select %p277, %s21, 1
      %s279 = smul.addr %s278, 8
      %s280 = scalar_lea.vmem %s5, %s279
      %p281 = scmp.lt.s32.totalorder %s21, 1
      %s282 = scalar_select %p281, %s21, 1
      %p283 = scmp.lt.s32.totalorder %s22, 15
      %s284 = scalar_select %p283, %s22, 15
      %s285 = smul.addr %s282, 16
      %s286 = sadd.s32 %s284, %s285
      %s287 = smul.addr %s286, 8
      %s288 = scalar_lea.vmem %s0, %s287
      %s289 = sadd.s32 %s22, 1
      %p290 = scmp.lt.s32.totalorder %s21, 1
      %s291 = scalar_select %p290, %s21, 1
      %p292 = scmp.lt.s32.totalorder %s289, 15
      %s293 = scalar_select %p292, %s289, 15
      %s294 = smul.addr %s291, 16
      %s295 = sadd.s32 %s293, %s294
      %s296 = smul.addr %s295, 8
      %s297 = scalar_lea.vmem %s1, %s296
      %s298 = sadd.s32 %s22, 1
      %p299 = scmp.lt.s32.totalorder %s21, 1
      %s300 = scalar_select %p299, %s21, 1
      %p301 = scmp.lt.s32.totalorder %s22, 14
      %s302 = scalar_select %p301, %s22, 14
      %s303 = smul.addr %s300, 15
      %s304 = sadd.s32 %s302, %s303
      %s305 = smul.addr %s304, 8
      %s306 = scalar_lea.vmem %s3, %s305
      %p307 = scmp.lt.s32.totalorder %s21, 1
      %s308 = scalar_select %p307, %s21, 1
      %s309 = smul.addr %s308, 8
      %s310 = scalar_lea.vmem %s4, %s309
      %p311 = scmp.lt.s32.totalorder %s21, 1
      %s312 = scalar_select %p311, %s21, 1
      %s313 = smul.addr %s312, 8
      %s314 = scalar_lea.vmem %s5, %s313
      %p315 = scmp.eq.s32.totalorder %s22, 0
      // Predicated region
      $region33: #{conv_block_2_forward.12} parent=31 // pred_check
        %p316 = pneg %p315
      $region34: #{conv_block_2_forward.12} parent=31 // pred_check_branch
        %318 = sbr.rel (%p316) target = $region36
      $region35: #{conv_block_2_forward.12} parent=31 // pred_region
        %vm319 = vcmask 7168
        %320 = vst.msk [vmem:[%s310] sm:$0xff] %vm319, 0.0
        %321 = vst.msk [vmem:[%s314] sm:$0xff] %vm319, 0.0
      $region36: #{conv_block_2_forward.12} parent=31 // pred_fallthru
        _
      %v322 = vld [vmem:[%s288] sm:$0xff]
      %v323 = vld [vmem:[%s297] sm:$0xff]
      %v324 = vld [vmem:[%s2] sm:$0xff]
      %s325 = scalar_lea.vmem %s2, 8
      %v326 = vld [vmem:[%s325] sm:$0xff]
      %328 = vrot.lane.b32.xlu0 %v322, 127
      %v329 = vpop.permute.xlu0 %328
      %vm331 = vcmask 64512
      %v333 = vsel %vm331, %v326, 0
      %335 = vmatprep.subr.mxu0 0.0
      %336 = vmatpush1.msra.mxu0 %v329
      %337 = vmatprep.subr.mxu0 0.0
      %338 = vmatpush1.msra.mxu0 0.0
      %339 = vmatprep.subr.mxu0 0.0
      %340 = vmatpush1.msra.mxu0 0.0
      %341 = vmatprep.subr.mxu0 0.0
      %342 = vmatpush1.msra.mxu0 0.0
      %343 = vmatprep.subr.mxu0 0.0
      %344 = vmatpush1.msra.mxu0 0.0
      %345 = vmatprep.subr.mxu0 0.0
      %346 = vmatpush1.msra.mxu0 0.0
      %347 = vmatprep.subr.mxu0 0.0
      %348 = vmatpush1.msra.mxu0 0.0
      %349 = vmatprep.subr.mxu0 0.0
      %350 = vmatpush1.msra.mxu0 0.0
      %351 = vmatprep.subr.mxu0 0.0
      %352 = vmatpush1.msra.mxu0 0.0
      %353 = vmatprep.subr.mxu0 0.0
      %354 = vmatpush1.msra.mxu0 0.0
      %355 = vmatprep.subr.mxu0 0.0
      %356 = vmatpush1.msra.mxu0 0.0
      %357 = vmatprep.subr.mxu0 0.0
      %358 = vmatpush1.msra.mxu0 0.0
      %359 = vmatprep.subr.mxu0 0.0
      %360 = vmatpush1.msra.mxu0 0.0
      %361 = vmatprep.subr.mxu0 0.0
      %362 = vmatpush1.msra.mxu0 0.0
      %363 = vmatprep.subr.mxu0 0.0
      %364 = vmatpush1.msra.mxu0 0.0
      %365 = vmatprep.subr.mxu0 0.0
      %366 = vmatpush1.msra.mxu0 0.0
      %367 = vmatprep.subr.mxu0 0.0
      %368 = vmatpush1.msra.mxu0 0.0
      %369 = vmatprep.subr.mxu0 0.0
      %370 = vmatpush1.msra.mxu0 0.0
      %371 = vmatprep.subr.mxu0 0.0
      %372 = vmatpush1.msra.mxu0 0.0
      %373 = vmatprep.subr.mxu0 0.0
      %374 = vmatpush1.msra.mxu0 0.0
      %375 = vmatprep.subr.mxu0 0.0
      %376 = vmatpush1.msra.mxu0 0.0
      %377 = vmatprep.subr.mxu0 0.0
      %378 = vmatpush1.msra.mxu0 0.0
      %379 = vmatprep.subr.mxu0 0.0
      %380 = vmatpush1.msra.mxu0 0.0
      %381 = vmatprep.subr.mxu0 0.0
      %382 = vmatpush1.msra.mxu0 0.0
      %383 = vmatprep.subr.mxu0 0.0
      %384 = vmatpush1.msra.mxu0 0.0
      %385 = vmatprep.subr.mxu0 0.0
      %386 = vmatpush1.msra.mxu0 0.0
      %387 = vmatprep.subr.mxu0 0.0
      %388 = vmatpush1.msra.mxu0 0.0
      %389 = vmatprep.subr.mxu0 0.0
      %390 = vmatpush1.msra.mxu0 0.0
      %391 = vmatprep.subr.mxu0 0.0
      %392 = vmatpush1.msra.mxu0 0.0
      %393 = vmatprep.subr.mxu0 0.0
      %394 = vmatpush1.msra.mxu0 0.0
      %395 = vmatprep.subr.mxu0 0.0
      %396 = vmatpush1.msra.mxu0 0.0
      %397 = vmatprep.subr.mxu0 0.0
      %398 = vmatpush1.msra.mxu0 0.0
      %399 = vmatprep.mubr.f32.mxu0 0.0
      %400 = vmatmul.mubr.f32.gmra.mrb[0].mxu0 %v333
      %v401 = vpop.f32.mrb[0].mxu0
      %v402 = vadd.f32 0.0, %v401
      %v403 = vpop.f32.mrb[0].mxu0
      %404 = vdwg.mxu0
      %v406 = vsel %vm331, %v324, 0
      %408 = vmatprep.subr.mxu0 0.0
      %409 = vmatpush1.msra.mxu0 %v322
      %410 = vmatprep.subr.mxu0 0.0
      %411 = vmatpush1.msra.mxu0 0.0
      %412 = vmatprep.subr.mxu0 0.0
      %413 = vmatpush1.msra.mxu0 0.0
      %414 = vmatprep.subr.mxu0 0.0
      %415 = vmatpush1.msra.mxu0 0.0
      %416 = vmatprep.subr.mxu0 0.0
      %417 = vmatpush1.msra.mxu0 0.0
      %418 = vmatprep.subr.mxu0 0.0
      %419 = vmatpush1.msra.mxu0 0.0
      %420 = vmatprep.subr.mxu0 0.0
      %421 = vmatpush1.msra.mxu0 0.0
      %422 = vmatprep.subr.mxu0 0.0
      %423 = vmatpush1.msra.mxu0 0.0
      %424 = vmatprep.subr.mxu0 0.0
      %425 = vmatpush1.msra.mxu0 0.0
      %426 = vmatprep.subr.mxu0 0.0
      %427 = vmatpush1.msra.mxu0 0.0
      %428 = vmatprep.subr.mxu0 0.0
      %429 = vmatpush1.msra.mxu0 0.0
      %430 = vmatprep.subr.mxu0 0.0
      %431 = vmatpush1.msra.mxu0 0.0
      %432 = vmatprep.subr.mxu0 0.0
      %433 = vmatpush1.msra.mxu0 0.0
      %434 = vmatprep.subr.mxu0 0.0
      %435 = vmatpush1.msra.mxu0 0.0
      %436 = vmatprep.subr.mxu0 0.0
      %437 = vmatpush1.msra.mxu0 0.0
      %438 = vmatprep.subr.mxu0 0.0
      %439 = vmatpush1.msra.mxu0 0.0
      %440 = vmatprep.subr.mxu0 0.0
      %441 = vmatpush1.msra.mxu0 0.0
      %442 = vmatprep.subr.mxu0 0.0
      %443 = vmatpush1.msra.mxu0 0.0
      %444 = vmatprep.subr.mxu0 0.0
      %445 = vmatpush1.msra.mxu0 0.0
      %446 = vmatprep.subr.mxu0 0.0
      %447 = vmatpush1.msra.mxu0 0.0
      %448 = vmatprep.subr.mxu0 0.0
      %449 = vmatpush1.msra.mxu0 0.0
      %450 = vmatprep.subr.mxu0 0.0
      %451 = vmatpush1.msra.mxu0 0.0
      %452 = vmatprep.subr.mxu0 0.0
      %453 = vmatpush1.msra.mxu0 0.0
      %454 = vmatprep.subr.mxu0 0.0
      %455 = vmatpush1.msra.mxu0 0.0
      %456 = vmatprep.subr.mxu0 0.0
      %457 = vmatpush1.msra.mxu0 0.0
      %458 = vmatprep.subr.mxu0 0.0
      %459 = vmatpush1.msra.mxu0 0.0
      %460 = vmatprep.subr.mxu0 0.0
      %461 = vmatpush1.msra.mxu0 0.0
      %462 = vmatprep.subr.mxu0 0.0
      %463 = vmatpush1.msra.mxu0 0.0
      %464 = vmatprep.subr.mxu0 0.0
      %465 = vmatpush1.msra.mxu0 0.0
      %466 = vmatprep.subr.mxu0 0.0
      %467 = vmatpush1.msra.mxu0 0.0
      %468 = vmatprep.subr.mxu0 0.0
      %469 = vmatpush1.msra.mxu0 0.0
      %470 = vmatprep.subr.mxu0 0.0
      %471 = vmatpush1.msra.mxu0 0.0
      %472 = vmatprep.mubr.f32.mxu0 0.0
      %473 = vmatmul.mubr.f32.gmra.mrb[0].mxu0 %v406
      %v474 = vpop.f32.mrb[0].mxu0
      %v475 = vadd.f32 %v402, %v474
      %v476 = vpop.f32.mrb[0].mxu0
      %477 = vdwg.mxu0
      %s478 = scalar_lea.vmem %s2, 16
      %v479 = vld [vmem:[%s478] sm:$0xff]
      %v481 = vsel %vm331, %v479, 0
      %483 = vmatprep.subr.mxu0 0.0
      %484 = vmatpush1.msra.mxu0 %v323
      %485 = vmatprep.subr.mxu0 0.0
      %486 = vmatpush1.msra.mxu0 0.0
      %487 = vmatprep.subr.mxu0 0.0
      %488 = vmatpush1.msra.mxu0 0.0
      %489 = vmatprep.subr.mxu0 0.0
      %490 = vmatpush1.msra.mxu0 0.0
      %491 = vmatprep.subr.mxu0 0.0
      %492 = vmatpush1.msra.mxu0 0.0
      %493 = vmatprep.subr.mxu0 0.0
      %494 = vmatpush1.msra.mxu0 0.0
      %495 = vmatprep.subr.mxu0 0.0
      %496 = vmatpush1.msra.mxu0 0.0
      %497 = vmatprep.subr.mxu0 0.0
      %498 = vmatpush1.msra.mxu0 0.0
      %499 = vmatprep.subr.mxu0 0.0
      %500 = vmatpush1.msra.mxu0 0.0
      %501 = vmatprep.subr.mxu0 0.0
      %502 = vmatpush1.msra.mxu0 0.0
      %503 = vmatprep.subr.mxu0 0.0
      %504 = vmatpush1.msra.mxu0 0.0
      %505 = vmatprep.subr.mxu0 0.0
      %506 = vmatpush1.msra.mxu0 0.0
      %507 = vmatprep.subr.mxu0 0.0
      %508 = vmatpush1.msra.mxu0 0.0
      %509 = vmatprep.subr.mxu0 0.0
      %510 = vmatpush1.msra.mxu0 0.0
      %511 = vmatprep.subr.mxu0 0.0
      %512 = vmatpush1.msra.mxu0 0.0
      %513 = vmatprep.subr.mxu0 0.0
      %514 = vmatpush1.msra.mxu0 0.0
      %515 = vmatprep.subr.mxu0 0.0
      %516 = vmatpush1.msra.mxu0 0.0
      %517 = vmatprep.subr.mxu0 0.0
      %518 = vmatpush1.msra.mxu0 0.0
      %519 = vmatprep.subr.mxu0 0.0
      %520 = vmatpush1.msra.mxu0 0.0
      %521 = vmatprep.subr.mxu0 0.0
      %522 = vmatpush1.msra.mxu0 0.0
      %523 = vmatprep.subr.mxu0 0.0
      %524 = vmatpush1.msra.mxu0 0.0
      %525 = vmatprep.subr.mxu0 0.0
      %526 = vmatpush1.msra.mxu0 0.0
      %527 = vmatprep.subr.mxu0 0.0
      %528 = vmatpush1.msra.mxu0 0.0
      %529 = vmatprep.subr.mxu0 0.0
      %530 = vmatpush1.msra.mxu0 0.0
      %531 = vmatprep.subr.mxu0 0.0
      %532 = vmatpush1.msra.mxu0 0.0
      %533 = vmatprep.subr.mxu0 0.0
      %534 = vmatpush1.msra.mxu0 0.0
      %535 = vmatprep.subr.mxu0 0.0
      %536 = vmatpush1.msra.mxu0 0.0
      %537 = vmatprep.subr.mxu0 0.0
      %538 = vmatpush1.msra.mxu0 0.0
      %539 = vmatprep.subr.mxu0 0.0
      %540 = vmatpush1.msra.mxu0 0.0
      %541 = vmatprep.subr.mxu0 0.0
      %542 = vmatpush1.msra.mxu0 0.0
      %543 = vmatprep.subr.mxu0 0.0
      %544 = vmatpush1.msra.mxu0 0.0
      %545 = vmatprep.subr.mxu0 0.0
      %546 = vmatpush1.msra.mxu0 0.0
      %547 = vmatprep.mubr.f32.mxu0 0.0
      %548 = vmatmul.mubr.f32.gmra.mrb[0].mxu0 %v481
      %v549 = vpop.f32.mrb[0].mxu0
      %v550 = vadd.f32 0.0, %v549
      %v551 = vpop.f32.mrb[0].mxu0
      %552 = vdwg.mxu0
      %v553 = vadd.f32 %v475, %v550
      %s554 = scalar_lea.vmem %s2, 24
      %v555 = vld [vmem:[%s554] sm:$0xff]
      %557 = vrot.lane.b32.xlu0 %v323, 127
      %v558 = vpop.permute.xlu0 %557
      %v561 = vsel %vm331, %v555, 0
      %563 = vmatprep.subr.mxu0 0.0
      %564 = vmatpush1.msra.mxu0 %v558
      %565 = vmatprep.subr.mxu0 0.0
      %566 = vmatpush1.msra.mxu0 0.0
      %567 = vmatprep.subr.mxu0 0.0
      %568 = vmatpush1.msra.mxu0 0.0
      %569 = vmatprep.subr.mxu0 0.0
      %570 = vmatpush1.msra.mxu0 0.0
      %571 = vmatprep.subr.mxu0 0.0
      %572 = vmatpush1.msra.mxu0 0.0
      %573 = vmatprep.subr.mxu0 0.0
      %574 = vmatpush1.msra.mxu0 0.0
      %575 = vmatprep.subr.mxu0 0.0
      %576 = vmatpush1.msra.mxu0 0.0
      %577 = vmatprep.subr.mxu0 0.0
      %578 = vmatpush1.msra.mxu0 0.0
      %579 = vmatprep.subr.mxu0 0.0
      %580 = vmatpush1.msra.mxu0 0.0
      %581 = vmatprep.subr.mxu0 0.0
      %582 = vmatpush1.msra.mxu0 0.0
      %583 = vmatprep.subr.mxu0 0.0
      %584 = vmatpush1.msra.mxu0 0.0
      %585 = vmatprep.subr.mxu0 0.0
      %586 = vmatpush1.msra.mxu0 0.0
      %587 = vmatprep.subr.mxu0 0.0
      %588 = vmatpush1.msra.mxu0 0.0
      %589 = vmatprep.subr.mxu0 0.0
      %590 = vmatpush1.msra.mxu0 0.0
      %591 = vmatprep.subr.mxu0 0.0
      %592 = vmatpush1.msra.mxu0 0.0
      %593 = vmatprep.subr.mxu0 0.0
      %594 = vmatpush1.msra.mxu0 0.0
      %595 = vmatprep.subr.mxu0 0.0
      %596 = vmatpush1.msra.mxu0 0.0
      %597 = vmatprep.subr.mxu0 0.0
      %598 = vmatpush1.msra.mxu0 0.0
      %599 = vmatprep.subr.mxu0 0.0
      %600 = vmatpush1.msra.mxu0 0.0
      %601 = vmatprep.subr.mxu0 0.0
      %602 = vmatpush1.msra.mxu0 0.0
      %603 = vmatprep.subr.mxu0 0.0
      %604 = vmatpush1.msra.mxu0 0.0
      %605 = vmatprep.subr.mxu0 0.0
      %606 = vmatpush1.msra.mxu0 0.0
      %607 = vmatprep.subr.mxu0 0.0
      %608 = vmatpush1.msra.mxu0 0.0
      %609 = vmatprep.subr.mxu0 0.0
      %610 = vmatpush1.msra.mxu0 0.0
      %611 = vmatprep.subr.mxu0 0.0
      %612 = vmatpush1.msra.mxu0 0.0
      %613 = vmatprep.subr.mxu0 0.0
      %614 = vmatpush1.msra.mxu0 0.0
      %615 = vmatprep.subr.mxu0 0.0
      %616 = vmatpush1.msra.mxu0 0.0
      %617 = vmatprep.subr.mxu0 0.0
      %618 = vmatpush1.msra.mxu0 0.0
      %619 = vmatprep.subr.mxu0 0.0
      %620 = vmatpush1.msra.mxu0 0.0
      %621 = vmatprep.subr.mxu0 0.0
      %622 = vmatpush1.msra.mxu0 0.0
      %623 = vmatprep.subr.mxu0 0.0
      %624 = vmatpush1.msra.mxu0 0.0
      %625 = vmatprep.subr.mxu0 0.0
      %626 = vmatpush1.msra.mxu0 0.0
      %627 = vmatprep.mubr.f32.mxu0 0.0
      %628 = vmatmul.mubr.f32.gmra.mrb[0].mxu0 %v561
      %v629 = vpop.f32.mrb[0].mxu0
      %v630 = vadd.f32 0.0, %v629
      %v631 = vpop.f32.mrb[0].mxu0
      %632 = vdwg.mxu0
      %v633 = vadd.f32 %v553, %v630
      %vm634 = vcmask 121856
      %635 = vst.msk [vmem:[%s306] sm:$0xff] %vm634, %v633
      %v636 = vld [vmem:[%s310] sm:$0xff]
      %v637 = vsel %vm634, %v633, 0.0
      %638 = vadd.xlane.f32.xlu0 %v637
      %v639 = vpop.xlane.xlu0 %638
      %v640 = vadd.f32 %v636, %v639
      %vm641 = vcmask 7168
      %642 = vst.msk [vmem:[%s310] sm:$0xff] %vm641, %v640
      %v643 = vld [vmem:[%s314] sm:$0xff]
      %v644 = vmul.f32 %v633, %v633
      %v645 = vsel %vm634, %v644, 0.0
      %646 = vadd.xlane.f32.xlu0 %v645
      %v647 = vpop.xlane.xlu0 %646
      %v648 = vadd.f32 %v643, %v647
      %649 = vst.msk [vmem:[%s314] sm:$0xff] %vm641, %v648
      %p650 = scmp.lt.s32.totalorder %s21, 1
      %s651 = scalar_select %p650, %s21, 1
      %p652 = scmp.lt.s32.totalorder %s22, 14
      %s653 = scalar_select %p652, %s22, 14
      %s654 = smul.addr %s651, 15
      %s655 = sadd.s32 %s653, %s654
      %s656 = smul.addr %s655, 8
      %s657 = scalar_lea.vmem %s3, %s656
      %p658 = scmp.lt.s32.totalorder %s21, 1
      %s659 = scalar_select %p658, %s21, 1
      %s660 = smul.addr %s659, 8
      %s661 = scalar_lea.vmem %s4, %s660
      %p662 = scmp.lt.s32.totalorder %s21, 1
      %s663 = scalar_select %p662, %s21, 1
      %s664 = smul.addr %s663, 8
      %s665 = scalar_lea.vmem %s5, %s664
      // Predicated region
      $region37: #{conv_block_2_forward.12} parent=31 // pred_check
        %p666 = pneg %p128
      $region38: #{conv_block_2_forward.12} parent=31 // pred_check_branch
        %668 = sbr.rel (%p666) target = $region40
      $region39: #{conv_block_2_forward.12} parent=31 // pred_region
        _
      $region40: #{conv_block_2_forward.12} parent=31 // pred_fallthru
        _
      // Predicated region
      $region41: #{conv_block_2_forward.12} parent=31 // pred_check
        %p669 = pneg %p154
      $region42: #{conv_block_2_forward.12} parent=31 // pred_check_branch
        %671 = sbr.rel (%p669) target = $region44
      $region43: #{conv_block_2_forward.12} parent=31 // pred_region
        _
      $region44: #{conv_block_2_forward.12} parent=31 // pred_fallthru
        _
      // Predicated region
      $region45: #{conv_block_2_forward.12} parent=31 // pred_check
        %p672 = pneg %p180
      $region46: #{conv_block_2_forward.12} parent=31 // pred_check_branch
        %674 = sbr.rel (%p672) target = $region48
      $region47: #{conv_block_2_forward.12} parent=31 // pred_region
        _
      $region48: #{conv_block_2_forward.12} parent=31 // pred_fallthru
        _
    $region32: #{conv_block_2_forward.12} parent=5 // pred_fallthru
      _
    %p675 = scmp.le.s32.totalorder 2, %s12
    // Predicated region
    $region49: #{conv_block_2_forward.12} parent=5 // pred_check
      %p676 = pneg %p675
    $region50: #{conv_block_2_forward.12} parent=5 // pred_check_branch
      %678 = sbr.rel (%p676) target = $region52
    $region51: #{conv_block_2_forward.12} parent=5 // pred_region
      %s679 = ssub.s32 %s12, 2
      // Predicated region
      $region53: #{conv_block_2_forward.12} parent=51 // pred_check
        %p680 = pneg %p134
      $region54: #{conv_block_2_forward.12} parent=51 // pred_check_branch
        %682 = sbr.rel (%p680) target = $region56
      $region55: #{conv_block_2_forward.12} parent=51 // pred_region
        %p683 = scmp.lt.s32.totalorder %s23, 1
        %s684 = scalar_select %p683, %s23, 1
        %p685 = scmp.lt.s32.totalorder %s24, 14
        %s686 = scalar_select %p685, %s24, 14
        %s687 = smul.addr %s684, 15
        %s688 = sadd.s32 %s686, %s687
        %s689 = smul.addr %s688, 8
        %s690 = scalar_lea.vmem %s3, %s689
      $region56: #{conv_block_2_forward.12} parent=51 // pred_fallthru
        _
      // Predicated region
      $region57: #{conv_block_2_forward.12} parent=51 // pred_check
        %p691 = pneg %p160
      $region58: #{conv_block_2_forward.12} parent=51 // pred_check_branch
        %693 = sbr.rel (%p691) target = $region60
      $region59: #{conv_block_2_forward.12} parent=51 // pred_region
        %p694 = scmp.lt.s32.totalorder %s23, 1
        %s695 = scalar_select %p694, %s23, 1
        %s696 = smul.addr %s695, 8
        %s697 = scalar_lea.vmem %s4, %s696
      $region60: #{conv_block_2_forward.12} parent=51 // pred_fallthru
        _
      // Predicated region
      $region61: #{conv_block_2_forward.12} parent=51 // pred_check
        %p698 = pneg %p186
      $region62: #{conv_block_2_forward.12} parent=51 // pred_check_branch
        %700 = sbr.rel (%p698) target = $region64
      $region63: #{conv_block_2_forward.12} parent=51 // pred_region
        %p701 = scmp.lt.s32.totalorder %s23, 1
        %s702 = scalar_select %p701, %s23, 1
        %s703 = smul.addr %s702, 8
        %s704 = scalar_lea.vmem %s5, %s703
      $region64: #{conv_block_2_forward.12} parent=51 // pred_fallthru
        _
    $region52: #{conv_block_2_forward.12} parent=5 // pred_fallthru
      _
  $region6: #{conv_block_2_forward.12} parent=0 // loop_footer
    %s16 = sadd.s32 1, %s12
  $region7: #{conv_block_2_forward.12} parent=0 // loop_footer_branch
    %11 = sbr.rel target = $region3
  $region8: #{conv_block_2_forward.12} parent=0 // loop_exit
    _

</llo_original>
